<compile_context>
chip_gen: v6e
topology: v6e:2x2x1
jax: 0.10.0
libtpu: 0.0.40
codegen_flags: <defaults>
</compile_context>

<pallas_src>
import functools

import jax
import jax.numpy as jnp
from jax.experimental import pallas as pl
from jax.experimental.pallas import tpu as pltpu

C1 = 32   # conv1 output channels
C2 = 64   # conv2 output channels
F1 = 64   # fc1 output features

_TB_MAX = 128   # samples per grid step (keeps per-step VMEM well under limits)


# ----------------------------------------------------------------------------
# Fused forward kernel (one grid step == `tb` samples end-to-end)
# ----------------------------------------------------------------------------
def _fused_kernel(x_ref, w1_ref, b1_ref, w2_ref, b2_ref, wf1_ref, bf1_ref,
                  wf2_ref, bf2_ref, out_ref, a1_ref, *, tb, h, w):
    """x_ref : (tb, h+2, w+2, 1)  f32 zero-padded NHWC input tile
       a1_ref: (tb, h//2+2, w//2+2, C1) f32 VMEM scratch (padded conv1 act)
       out   : (tb, 1) f32"""
    h1, w1 = h // 2, w // 2          # conv1 output spatial
    h2, w2 = h1 // 2, w1 // 2        # conv2 output spatial

    # ---- conv1: 3x3 / stride 2 / pad 1, 1 -> 32 channels.
    # 9 shifted multiply-accumulates on the VPU (no im2col, no K=9 MXU matmul).
    acc1 = jnp.zeros((tb, h1, w1, C1), jnp.float32)
    for i in range(3):
        for j in range(3):
            tap = x_ref[:, pl.ds(i, h1, 2), pl.ds(j, w1, 2), :]   # (tb,h1,w1,1)
            acc1 = acc1 + tap * w1_ref[i, j]                      # bcast (1,C1)
    a1 = jnp.maximum(acc1 + b1_ref[...], 0.0)

    # Stash conv1 activation zero-padded (channels-last) for conv2 windows.
    # The border must be zero on EVERY grid step: with "parallel" semantics a
    # one-time init at program_id==0 is not guaranteed to run on both cores.
    a1_ref[...] = jnp.zeros(a1_ref.shape, a1_ref.dtype)
    a1_ref[:, 1:h1 + 1, 1:w1 + 1, :] = a1

    # ---- conv2: in-kernel im2col (9 strided window reads + lane concat), one
    # MXU matmul with K = 9*C1 = 288, bf16 operands / f32 accumulation.
    taps = []
    for i in range(3):
        for j in range(3):
            taps.append(a1_ref[:, pl.ds(i, h2, 2), pl.ds(j, w2, 2), :])
    patches = jnp.concatenate(taps, axis=-1)                 # (tb,h2,w2,9*C1)
    patches = patches.reshape(tb * h2 * w2, 9 * C1)
    z2 = jnp.dot(patches.astype(jnp.bfloat16), w2_ref[...],
                 preferred_element_type=jnp.float32)
    a2 = jnp.maximum(z2 + b2_ref[...], 0.0)                  # (tb*h2*w2, C2)

    # ---- flatten to (tb, h2*w2*C2) in NHWC order via lane concatenation; the
    # NCHW permutation implied by torch's `.view` is folded into wf1 at init.
    a2 = a2.reshape(tb, h2 * w2, C2)
    feat = jnp.concatenate([a2[:, p, :] for p in range(h2 * w2)], axis=-1)

    # ---- fc1: one MXU matmul, K = num_fc_first, bf16 in / f32 accumulate.
    z3 = jnp.dot(feat.astype(jnp.bfloat16), wf1_ref[...],
                 preferred_element_type=jnp.float32)
    a3 = jnp.maximum(z3 + bf1_ref[...], 0.0)                 # (tb, F1)

    # ---- fc2: 64 -> 1 on the VPU (elementwise mul + lane reduction).
    out = jnp.sum(a3 * wf2_ref[...], axis=-1, keepdims=True) + bf2_ref[...]
    out_ref[...] = out.astype(out_ref.dtype)


def _full_vmem_spec(arr):
    """Whole-array-in-VMEM BlockSpec with a constant index map (safe w/ grid)."""
    nd = arr.ndim
    return pl.BlockSpec(arr.shape, lambda i, _nd=nd: (0,) * _nd)


# ----------------------------------------------------------------------------
# Wrapper (one pallas_call per forward)
# ----------------------------------------------------------------------------
@jax.jit
def mnist_net_forward(kparams, x):
    """x: (..., 1, H, W); leading dims are merged exactly like the torch module."""
    x_shape = x.shape
    lead = x_shape[:-3]
    c, h, w = x_shape[-3:]
    assert c == 1 and h % 4 == 0 and w % 4 == 0
    ne = 1
    for d in lead:
        ne *= int(d)
    assert kparams["wf1"].shape[0] == C2 * (h // 4) * (w // 4)

    # Sample-dim tiling: grid=(1,) for tiny batches, 128-sample "parallel"
    # tiles for big ones (bounded VMEM; megacore sharding on v7x).
    tb = ne if ne <= _TB_MAX else _TB_MAX
    n_blk = -(-ne // tb)
    ne_pad = n_blk * tb

    x4 = x.reshape(ne, c, h, w)
    xnhwc = jnp.transpose(x4, (0, 2, 3, 1))                  # NCHW -> NHWC (C=1)
    xpad = jnp.pad(xnhwc, ((0, ne_pad - ne), (1, 1), (1, 1), (0, 0)))

    kernel = functools.partial(_fused_kernel, tb=tb, h=h, w=w)
    weights = (kparams["w1"], kparams["b1"], kparams["w2"], kparams["b2"],
               kparams["wf1"], kparams["bf1"], kparams["wf2"], kparams["bf2"])

    out = pl.pallas_call(
        kernel,
        out_shape=jax.ShapeDtypeStruct((ne_pad, 1), jnp.float32),
        grid=(n_blk,),
        in_specs=[pl.BlockSpec((tb, h + 2, w + 2, 1), lambda i: (i, 0, 0, 0))]
                 + [_full_vmem_spec(a) for a in weights],
        out_specs=pl.BlockSpec((tb, 1), lambda i: (i, 0)),
        scratch_shapes=[
            pltpu.VMEM((tb, h // 2 + 2, w // 2 + 2, C1), jnp.float32)],
        compiler_params=pltpu.CompilerParams(
            dimension_semantics=("parallel",)),
    )(xpad, *weights)
    return out[:ne].reshape(lead + (1,))


# ----------------------------------------------------------------------------
# Parameters: torch-layout init + one-time kernel-layout preparation
# ----------------------------------------------------------------------------
def init_params(key, num_fc_first):
    keys = jax.random.split(key, 8)

    def unif(k, shape, fan_in):
        bound = 1.0 / (fan_in ** 0.5)
        return jax.random.uniform(k, shape, jnp.float32, -bound, bound)

    return {
        "conv1_w": unif(keys[0], (C1, 1, 3, 3), 1 * 9),
        "conv1_b": unif(keys[1], (C1,), 1 * 9),
        "conv2_w": unif(keys[2], (C2, C1, 3, 3), C1 * 9),
        "conv2_b": unif(keys[3], (C2,), C1 * 9),
        "fc1_w": unif(keys[4], (F1, num_fc_first), num_fc_first),  # torch (out, in)
        "fc1_b": unif(keys[5], (F1,), num_fc_first),
        "fc2_w": unif(keys[6], (1, F1), F1),
        "fc2_b": unif(keys[7], (1,), F1),
    }


def prepare_params(params, h, w):
    """One-time: fold all layout permutations / dtype casts into the weights."""
    h2, w2 = h // 4, w // 4
    w1k = jnp.transpose(params["conv1_w"], (2, 3, 1, 0)).astype(jnp.float32)
    w2k = jnp.transpose(params["conv2_w"], (2, 3, 1, 0)).reshape(9 * C1, C2)
    # fc1: torch columns are NCHW-flat (c, oh, ow); reorder rows to the NHWC
    # (oh, ow, c) order the kernel's lane-concatenated features use.
    f1 = params["fc1_w"].reshape(F1, C2, h2, w2)
    f1 = jnp.transpose(f1, (2, 3, 1, 0)).reshape(C2 * h2 * w2, F1)
    return {
        "w1": w1k,                                                  # (3,3,1,32) f32
        "b1": params["conv1_b"].reshape(1, C1).astype(jnp.float32),
        "w2": w2k.astype(jnp.bfloat16),                             # (288,64) bf16
        "b2": params["conv2_b"].reshape(1, C2).astype(jnp.float32),
        "wf1": f1.astype(jnp.bfloat16),                             # (nf,64) bf16
        "bf1": params["fc1_b"].reshape(1, F1).astype(jnp.float32),
        "wf2": params["fc2_w"].reshape(1, F1).astype(jnp.float32),
        "bf2": params["fc2_b"].reshape(1, 1).astype(jnp.float32),
    }


# ----------------------------------------------------------------------------
# Pure-JAX reference (f32) for a loose-tolerance correctness check
# ----------------------------------------------------------------------------
def _reference_forward(params, x, num_fc_first):
    x_shape = x.shape
    xs = x.reshape((-1,) + x_shape[-3:])
    y = jax.lax.conv_general_dilated(
        xs, params["conv1_w"], window_strides=(2, 2), padding=[(1, 1), (1, 1)],
        dimension_numbers=("NCHW", "OIHW", "NCHW"))
    y = jnp.maximum(y + params["conv1_b"].reshape(1, -1, 1, 1), 0.0)
    y = jax.lax.conv_general_dilated(
        y, params["conv2_w"], window_strides=(2, 2), padding=[(1, 1), (1, 1)],
        dimension_numbers=("NCHW", "OIHW", "NCHW"))
    y = jnp.maximum(y + params["conv2_b"].reshape(1, -1, 1, 1), 0.0)
    y = y.reshape(xs.shape[0], num_fc_first)
    y = jnp.maximum(y @ params["fc1_w"].T + params["fc1_b"], 0.0)
    y = y @ params["fc2_w"].T + params["fc2_b"]
    return y.reshape(x_shape[:-3] + (1,))


if __name__ == "__main__":
    # Jigsaw-style 5-D input: batch=2, patches=2, 1 channel, 16x16 spatial.
    # conv1 (s=2,p=1): 16 -> 8 ; conv2: 8 -> 4 ; num_fc_first = 64*4*4 = 1024.
    B, P, C, H, W = 2, 2, 1, 16, 16
    num_fc_first = C2 * (H // 4) * (W // 4)

    key = jax.random.PRNGKey(0)
    kx, kp = jax.random.split(key)
    x = jax.random.normal(kx, (B, P, C, H, W), dtype=jnp.float32)
    params = init_params(kp, num_fc_first)
    kparams = prepare_params(params, H, W)      # one-time layout/dtype folding

    out = mnist_net_forward(kparams, x)
    out = jax.block_until_ready(out)
    assert out.shape == (B, P, 1), out.shape
    assert out.dtype == jnp.float32

    # Loose tolerance: conv2/fc1 use bf16 MXU operands (f32 accumulation).
    ref = _reference_forward(params, x, num_fc_first)
    err = float(jnp.max(jnp.abs(out - ref)))
    assert err < 5e-2, f"max |err| = {err}"
    print("KERNEL_OK")
</pallas_src>

<mosaic_0001>
module attributes {stable_mosaic.version = 11 : i64} {
  func.func @_fused_kernel(%arg0: i32, %arg1: memref<4x18x18x1xf32, #tpu.memory_space<vmem>>, %arg2: memref<3x3x1x32xf32, #tpu.memory_space<vmem>>, %arg3: memref<1x32xf32, #tpu.memory_space<vmem>>, %arg4: memref<288x64xbf16, #tpu.memory_space<vmem>>, %arg5: memref<1x64xf32, #tpu.memory_space<vmem>>, %arg6: memref<1024x64xbf16, #tpu.memory_space<vmem>>, %arg7: memref<1x64xf32, #tpu.memory_space<vmem>>, %arg8: memref<1x64xf32, #tpu.memory_space<vmem>>, %arg9: memref<1x1xf32, #tpu.memory_space<vmem>>, %arg10: memref<4x1xf32, #tpu.memory_space<vmem>>, %arg11: memref<4x10x10x32xf32, #tpu.memory_space<vmem>>) attributes {dimension_semantics = [#tpu.dimension_semantics<parallel>], iteration_bounds = array<i64: 1>, scalar_prefetch = 0 : i64, scratch_operands = 1 : i64, tpu.core_type = #tpu.core_type<tc>, window_params = [{transform_indices = @transform_0, window_bounds = array<i64: 4, 18, 18, 1>}, {pipeline_mode = #tpu.pipeline_mode<synchronous>, transform_indices = @transform_1, window_bounds = array<i64: 3, 3, 1, 32>}, {pipeline_mode = #tpu.pipeline_mode<synchronous>, transform_indices = @transform_2, window_bounds = array<i64: 1, 32>}, {pipeline_mode = #tpu.pipeline_mode<synchronous>, transform_indices = @transform_3, window_bounds = array<i64: 288, 64>}, {pipeline_mode = #tpu.pipeline_mode<synchronous>, transform_indices = @transform_4, window_bounds = array<i64: 1, 64>}, {pipeline_mode = #tpu.pipeline_mode<synchronous>, transform_indices = @transform_5, window_bounds = array<i64: 1024, 64>}, {pipeline_mode = #tpu.pipeline_mode<synchronous>, transform_indices = @transform_6, window_bounds = array<i64: 1, 64>}, {pipeline_mode = #tpu.pipeline_mode<synchronous>, transform_indices = @transform_7, window_bounds = array<i64: 1, 64>}, {pipeline_mode = #tpu.pipeline_mode<synchronous>, transform_indices = @transform_8, window_bounds = array<i64: 1, 1>}, {transform_indices = @transform_9, window_bounds = array<i64: 4, 1>}]} {
    %cst = arith.constant 0.000000e+00 : f32
    %0 = vector.broadcast %cst : f32 to vector<4x8x8x32xf32>
    %c0 = arith.constant 0 : index
    %c0_0 = arith.constant 0 : index
    %c0_1 = arith.constant 0 : index
    %c0_2 = arith.constant 0 : index
    %1 = tpu.strided_load %arg1[%c0, %c0_0, %c0_1, %c0_2] {strides = array<i32: 1, 2, 2, 1>} : memref<4x18x18x1xf32, #tpu.memory_space<vmem>>, vector<4x8x8x1xf32>
    %c0_3 = arith.constant 0 : index
    %c0_4 = arith.constant 0 : index
    %c0_5 = arith.constant 0 : index
    %c0_6 = arith.constant 0 : index
    %2 = vector.load %arg2[%c0_3, %c0_4, %c0_5, %c0_6] : memref<3x3x1x32xf32, #tpu.memory_space<vmem>>, vector<1x1x1x32xf32>
    %3 = vector.shape_cast %2 : vector<1x1x1x32xf32> to vector<1x32xf32>
    %4 = vector.shape_cast %3 : vector<1x32xf32> to vector<1x1x1x32xf32>
    %5 = vector.broadcast %1 : vector<4x8x8x1xf32> to vector<4x8x8x32xf32>
    %6 = vector.broadcast %4 : vector<1x1x1x32xf32> to vector<4x8x8x32xf32>
    %7 = arith.mulf %5, %6 : vector<4x8x8x32xf32>
    %8 = arith.addf %0, %7 : vector<4x8x8x32xf32>
    %c0_7 = arith.constant 0 : index
    %c0_8 = arith.constant 0 : index
    %c1 = arith.constant 1 : index
    %c0_9 = arith.constant 0 : index
    %9 = tpu.strided_load %arg1[%c0_7, %c0_8, %c1, %c0_9] {strides = array<i32: 1, 2, 2, 1>} : memref<4x18x18x1xf32, #tpu.memory_space<vmem>>, vector<4x8x8x1xf32>
    %c0_10 = arith.constant 0 : index
    %c1_11 = arith.constant 1 : index
    %c0_12 = arith.constant 0 : index
    %c0_13 = arith.constant 0 : index
    %10 = vector.load %arg2[%c0_10, %c1_11, %c0_12, %c0_13] : memref<3x3x1x32xf32, #tpu.memory_space<vmem>>, vector<1x1x1x32xf32>
    %11 = vector.shape_cast %10 : vector<1x1x1x32xf32> to vector<1x32xf32>
    %12 = vector.shape_cast %11 : vector<1x32xf32> to vector<1x1x1x32xf32>
    %13 = vector.broadcast %9 : vector<4x8x8x1xf32> to vector<4x8x8x32xf32>
    %14 = vector.broadcast %12 : vector<1x1x1x32xf32> to vector<4x8x8x32xf32>
    %15 = arith.mulf %13, %14 : vector<4x8x8x32xf32>
    %16 = arith.addf %8, %15 : vector<4x8x8x32xf32>
    %c0_14 = arith.constant 0 : index
    %c0_15 = arith.constant 0 : index
    %c2 = arith.constant 2 : index
    %c0_16 = arith.constant 0 : index
    %17 = tpu.strided_load %arg1[%c0_14, %c0_15, %c2, %c0_16] {strides = array<i32: 1, 2, 2, 1>} : memref<4x18x18x1xf32, #tpu.memory_space<vmem>>, vector<4x8x8x1xf32>
    %c0_17 = arith.constant 0 : index
    %c2_18 = arith.constant 2 : index
    %c0_19 = arith.constant 0 : index
    %c0_20 = arith.constant 0 : index
    %18 = vector.load %arg2[%c0_17, %c2_18, %c0_19, %c0_20] : memref<3x3x1x32xf32, #tpu.memory_space<vmem>>, vector<1x1x1x32xf32>
    %19 = vector.shape_cast %18 : vector<1x1x1x32xf32> to vector<1x32xf32>
    %20 = vector.shape_cast %19 : vector<1x32xf32> to vector<1x1x1x32xf32>
    %21 = vector.broadcast %17 : vector<4x8x8x1xf32> to vector<4x8x8x32xf32>
    %22 = vector.broadcast %20 : vector<1x1x1x32xf32> to vector<4x8x8x32xf32>
    %23 = arith.mulf %21, %22 : vector<4x8x8x32xf32>
    %24 = arith.addf %16, %23 : vector<4x8x8x32xf32>
    %c0_21 = arith.constant 0 : index
    %c1_22 = arith.constant 1 : index
    %c0_23 = arith.constant 0 : index
    %c0_24 = arith.constant 0 : index
    %25 = tpu.strided_load %arg1[%c0_21, %c1_22, %c0_23, %c0_24] {strides = array<i32: 1, 2, 2, 1>} : memref<4x18x18x1xf32, #tpu.memory_space<vmem>>, vector<4x8x8x1xf32>
    %c1_25 = arith.constant 1 : index
    %c0_26 = arith.constant 0 : index
    %c0_27 = arith.constant 0 : index
    %c0_28 = arith.constant 0 : index
    %26 = vector.load %arg2[%c1_25, %c0_26, %c0_27, %c0_28] : memref<3x3x1x32xf32, #tpu.memory_space<vmem>>, vector<1x1x1x32xf32>
    %27 = vector.shape_cast %26 : vector<1x1x1x32xf32> to vector<1x32xf32>
    %28 = vector.shape_cast %27 : vector<1x32xf32> to vector<1x1x1x32xf32>
    %29 = vector.broadcast %25 : vector<4x8x8x1xf32> to vector<4x8x8x32xf32>
    %30 = vector.broadcast %28 : vector<1x1x1x32xf32> to vector<4x8x8x32xf32>
    %31 = arith.mulf %29, %30 : vector<4x8x8x32xf32>
    %32 = arith.addf %24, %31 : vector<4x8x8x32xf32>
    %c0_29 = arith.constant 0 : index
    %c1_30 = arith.constant 1 : index
    %c1_31 = arith.constant 1 : index
    %c0_32 = arith.constant 0 : index
    %33 = tpu.strided_load %arg1[%c0_29, %c1_30, %c1_31, %c0_32] {strides = array<i32: 1, 2, 2, 1>} : memref<4x18x18x1xf32, #tpu.memory_space<vmem>>, vector<4x8x8x1xf32>
    %c1_33 = arith.constant 1 : index
    %c1_34 = arith.constant 1 : index
    %c0_35 = arith.constant 0 : index
    %c0_36 = arith.constant 0 : index
    %34 = vector.load %arg2[%c1_33, %c1_34, %c0_35, %c0_36] : memref<3x3x1x32xf32, #tpu.memory_space<vmem>>, vector<1x1x1x32xf32>
    %35 = vector.shape_cast %34 : vector<1x1x1x32xf32> to vector<1x32xf32>
    %36 = vector.shape_cast %35 : vector<1x32xf32> to vector<1x1x1x32xf32>
    %37 = vector.broadcast %33 : vector<4x8x8x1xf32> to vector<4x8x8x32xf32>
    %38 = vector.broadcast %36 : vector<1x1x1x32xf32> to vector<4x8x8x32xf32>
    %39 = arith.mulf %37, %38 : vector<4x8x8x32xf32>
    %40 = arith.addf %32, %39 : vector<4x8x8x32xf32>
    %c0_37 = arith.constant 0 : index
    %c1_38 = arith.constant 1 : index
    %c2_39 = arith.constant 2 : index
    %c0_40 = arith.constant 0 : index
    %41 = tpu.strided_load %arg1[%c0_37, %c1_38, %c2_39, %c0_40] {strides = array<i32: 1, 2, 2, 1>} : memref<4x18x18x1xf32, #tpu.memory_space<vmem>>, vector<4x8x8x1xf32>
    %c1_41 = arith.constant 1 : index
    %c2_42 = arith.constant 2 : index
    %c0_43 = arith.constant 0 : index
    %c0_44 = arith.constant 0 : index
    %42 = vector.load %arg2[%c1_41, %c2_42, %c0_43, %c0_44] : memref<3x3x1x32xf32, #tpu.memory_space<vmem>>, vector<1x1x1x32xf32>
    %43 = vector.shape_cast %42 : vector<1x1x1x32xf32> to vector<1x32xf32>
    %44 = vector.shape_cast %43 : vector<1x32xf32> to vector<1x1x1x32xf32>
    %45 = vector.broadcast %41 : vector<4x8x8x1xf32> to vector<4x8x8x32xf32>
    %46 = vector.broadcast %44 : vector<1x1x1x32xf32> to vector<4x8x8x32xf32>
    %47 = arith.mulf %45, %46 : vector<4x8x8x32xf32>
    %48 = arith.addf %40, %47 : vector<4x8x8x32xf32>
    %c0_45 = arith.constant 0 : index
    %c2_46 = arith.constant 2 : index
    %c0_47 = arith.constant 0 : index
    %c0_48 = arith.constant 0 : index
    %49 = tpu.strided_load %arg1[%c0_45, %c2_46, %c0_47, %c0_48] {strides = array<i32: 1, 2, 2, 1>} : memref<4x18x18x1xf32, #tpu.memory_space<vmem>>, vector<4x8x8x1xf32>
    %c2_49 = arith.constant 2 : index
    %c0_50 = arith.constant 0 : index
    %c0_51 = arith.constant 0 : index
    %c0_52 = arith.constant 0 : index
    %50 = vector.load %arg2[%c2_49, %c0_50, %c0_51, %c0_52] : memref<3x3x1x32xf32, #tpu.memory_space<vmem>>, vector<1x1x1x32xf32>
    %51 = vector.shape_cast %50 : vector<1x1x1x32xf32> to vector<1x32xf32>
    %52 = vector.shape_cast %51 : vector<1x32xf32> to vector<1x1x1x32xf32>
    %53 = vector.broadcast %49 : vector<4x8x8x1xf32> to vector<4x8x8x32xf32>
    %54 = vector.broadcast %52 : vector<1x1x1x32xf32> to vector<4x8x8x32xf32>
    %55 = arith.mulf %53, %54 : vector<4x8x8x32xf32>
    %56 = arith.addf %48, %55 : vector<4x8x8x32xf32>
    %c0_53 = arith.constant 0 : index
    %c2_54 = arith.constant 2 : index
    %c1_55 = arith.constant 1 : index
    %c0_56 = arith.constant 0 : index
    %57 = tpu.strided_load %arg1[%c0_53, %c2_54, %c1_55, %c0_56] {strides = array<i32: 1, 2, 2, 1>} : memref<4x18x18x1xf32, #tpu.memory_space<vmem>>, vector<4x8x8x1xf32>
    %c2_57 = arith.constant 2 : index
    %c1_58 = arith.constant 1 : index
    %c0_59 = arith.constant 0 : index
    %c0_60 = arith.constant 0 : index
    %58 = vector.load %arg2[%c2_57, %c1_58, %c0_59, %c0_60] : memref<3x3x1x32xf32, #tpu.memory_space<vmem>>, vector<1x1x1x32xf32>
    %59 = vector.shape_cast %58 : vector<1x1x1x32xf32> to vector<1x32xf32>
    %60 = vector.shape_cast %59 : vector<1x32xf32> to vector<1x1x1x32xf32>
    %61 = vector.broadcast %57 : vector<4x8x8x1xf32> to vector<4x8x8x32xf32>
    %62 = vector.broadcast %60 : vector<1x1x1x32xf32> to vector<4x8x8x32xf32>
    %63 = arith.mulf %61, %62 : vector<4x8x8x32xf32>
    %64 = arith.addf %56, %63 : vector<4x8x8x32xf32>
    %c0_61 = arith.constant 0 : index
    %c2_62 = arith.constant 2 : index
    %c2_63 = arith.constant 2 : index
    %c0_64 = arith.constant 0 : index
    %65 = tpu.strided_load %arg1[%c0_61, %c2_62, %c2_63, %c0_64] {strides = array<i32: 1, 2, 2, 1>} : memref<4x18x18x1xf32, #tpu.memory_space<vmem>>, vector<4x8x8x1xf32>
    %c2_65 = arith.constant 2 : index
    %c2_66 = arith.constant 2 : index
    %c0_67 = arith.constant 0 : index
    %c0_68 = arith.constant 0 : index
    %66 = vector.load %arg2[%c2_65, %c2_66, %c0_67, %c0_68] : memref<3x3x1x32xf32, #tpu.memory_space<vmem>>, vector<1x1x1x32xf32>
    %67 = vector.shape_cast %66 : vector<1x1x1x32xf32> to vector<1x32xf32>
    %68 = vector.shape_cast %67 : vector<1x32xf32> to vector<1x1x1x32xf32>
    %69 = vector.broadcast %65 : vector<4x8x8x1xf32> to vector<4x8x8x32xf32>
    %70 = vector.broadcast %68 : vector<1x1x1x32xf32> to vector<4x8x8x32xf32>
    %71 = arith.mulf %69, %70 : vector<4x8x8x32xf32>
    %72 = arith.addf %64, %71 : vector<4x8x8x32xf32>
    %c0_69 = arith.constant 0 : index
    %c0_70 = arith.constant 0 : index
    %73 = vector.load %arg3[%c0_69, %c0_70] : memref<1x32xf32, #tpu.memory_space<vmem>>, vector<1x32xf32>
    %74 = vector.shape_cast %73 : vector<1x32xf32> to vector<1x1x1x32xf32>
    %75 = vector.broadcast %74 : vector<1x1x1x32xf32> to vector<4x8x8x32xf32>
    %76 = arith.addf %72, %75 : vector<4x8x8x32xf32>
    %cst_71 = arith.constant 0.000000e+00 : f32
    %77 = vector.broadcast %cst_71 : f32 to vector<4x8x8x32xf32>
    %78 = arith.maximumf %76, %77 : vector<4x8x8x32xf32>
    %cst_72 = arith.constant 0.000000e+00 : f32
    %79 = vector.broadcast %cst_72 : f32 to vector<4x10x10x32xf32>
    %c0_73 = arith.constant 0 : index
    %c0_74 = arith.constant 0 : index
    %c0_75 = arith.constant 0 : index
    %c0_76 = arith.constant 0 : index
    %80 = vector.load %arg11[%c0_73, %c0_74, %c0_75, %c0_76] : memref<4x10x10x32xf32, #tpu.memory_space<vmem>>, vector<4x10x10x32xf32>
    tpu.vector_store %arg11[%c0_73, %c0_74, %c0_75, %c0_76], %79 {strides = array<i32>} : memref<4x10x10x32xf32, #tpu.memory_space<vmem>>, vector<4x10x10x32xf32>,
    %c0_77 = arith.constant 0 : index
    %c1_78 = arith.constant 1 : index
    %c1_79 = arith.constant 1 : index
    %c0_80 = arith.constant 0 : index
    %81 = vector.load %arg11[%c0_77, %c1_78, %c1_79, %c0_80] : memref<4x10x10x32xf32, #tpu.memory_space<vmem>>, vector<4x8x8x32xf32>
    tpu.vector_store %arg11[%c0_77, %c1_78, %c1_79, %c0_80], %78 {strides = array<i32>} : memref<4x10x10x32xf32, #tpu.memory_space<vmem>>, vector<4x8x8x32xf32>,
    %c0_81 = arith.constant 0 : index
    %c0_82 = arith.constant 0 : index
    %c0_83 = arith.constant 0 : index
    %c0_84 = arith.constant 0 : index
    %82 = tpu.strided_load %arg11[%c0_81, %c0_82, %c0_83, %c0_84] {strides = array<i32: 1, 2, 2, 1>} : memref<4x10x10x32xf32, #tpu.memory_space<vmem>>, vector<4x4x4x32xf32>
    %c0_85 = arith.constant 0 : index
    %c0_86 = arith.constant 0 : index
    %c1_87 = arith.constant 1 : index
    %c0_88 = arith.constant 0 : index
    %83 = tpu.strided_load %arg11[%c0_85, %c0_86, %c1_87, %c0_88] {strides = array<i32: 1, 2, 2, 1>} : memref<4x10x10x32xf32, #tpu.memory_space<vmem>>, vector<4x4x4x32xf32>
    %c0_89 = arith.constant 0 : index
    %c0_90 = arith.constant 0 : index
    %c2_91 = arith.constant 2 : index
    %c0_92 = arith.constant 0 : index
    %84 = tpu.strided_load %arg11[%c0_89, %c0_90, %c2_91, %c0_92] {strides = array<i32: 1, 2, 2, 1>} : memref<4x10x10x32xf32, #tpu.memory_space<vmem>>, vector<4x4x4x32xf32>
    %c0_93 = arith.constant 0 : index
    %c1_94 = arith.constant 1 : index
    %c0_95 = arith.constant 0 : index
    %c0_96 = arith.constant 0 : index
    %85 = tpu.strided_load %arg11[%c0_93, %c1_94, %c0_95, %c0_96] {strides = array<i32: 1, 2, 2, 1>} : memref<4x10x10x32xf32, #tpu.memory_space<vmem>>, vector<4x4x4x32xf32>
    %c0_97 = arith.constant 0 : index
    %c1_98 = arith.constant 1 : index
    %c1_99 = arith.constant 1 : index
    %c0_100 = arith.constant 0 : index
    %86 = tpu.strided_load %arg11[%c0_97, %c1_98, %c1_99, %c0_100] {strides = array<i32: 1, 2, 2, 1>} : memref<4x10x10x32xf32, #tpu.memory_space<vmem>>, vector<4x4x4x32xf32>
    %c0_101 = arith.constant 0 : index
    %c1_102 = arith.constant 1 : index
    %c2_103 = arith.constant 2 : index
    %c0_104 = arith.constant 0 : index
    %87 = tpu.strided_load %arg11[%c0_101, %c1_102, %c2_103, %c0_104] {strides = array<i32: 1, 2, 2, 1>} : memref<4x10x10x32xf32, #tpu.memory_space<vmem>>, vector<4x4x4x32xf32>
    %c0_105 = arith.constant 0 : index
    %c2_106 = arith.constant 2 : index
    %c0_107 = arith.constant 0 : index
    %c0_108 = arith.constant 0 : index
    %88 = tpu.strided_load %arg11[%c0_105, %c2_106, %c0_107, %c0_108] {strides = array<i32: 1, 2, 2, 1>} : memref<4x10x10x32xf32, #tpu.memory_space<vmem>>, vector<4x4x4x32xf32>
    %c0_109 = arith.constant 0 : index
    %c2_110 = arith.constant 2 : index
    %c1_111 = arith.constant 1 : index
    %c0_112 = arith.constant 0 : index
    %89 = tpu.strided_load %arg11[%c0_109, %c2_110, %c1_111, %c0_112] {strides = array<i32: 1, 2, 2, 1>} : memref<4x10x10x32xf32, #tpu.memory_space<vmem>>, vector<4x4x4x32xf32>
    %c0_113 = arith.constant 0 : index
    %c2_114 = arith.constant 2 : index
    %c2_115 = arith.constant 2 : index
    %c0_116 = arith.constant 0 : index
    %90 = tpu.strided_load %arg11[%c0_113, %c2_114, %c2_115, %c0_116] {strides = array<i32: 1, 2, 2, 1>} : memref<4x10x10x32xf32, #tpu.memory_space<vmem>>, vector<4x4x4x32xf32>
    %91 = tpu.concatenate %82, %83, %84, %85, %86, %87, %88, %89, %90 in 3 : vector<4x4x4x32xf32>, vector<4x4x4x32xf32>, vector<4x4x4x32xf32>, vector<4x4x4x32xf32>, vector<4x4x4x32xf32>, vector<4x4x4x32xf32>, vector<4x4x4x32xf32>, vector<4x4x4x32xf32>, vector<4x4x4x32xf32> -> vector<4x4x4x288xf32>
    %92 = vector.shape_cast %91 : vector<4x4x4x288xf32> to vector<64x288xf32>
    %93 = arith.truncf %92 : vector<64x288xf32> to vector<64x288xbf16>
    %c0_117 = arith.constant 0 : index
    %c0_118 = arith.constant 0 : index
    %94 = vector.load %arg4[%c0_117, %c0_118] : memref<288x64xbf16, #tpu.memory_space<vmem>>, vector<288x64xbf16>
    %cst_119 = arith.constant dense<0.000000e+00> : vector<64x64xf32>
    %95 = tpu.matmul %93, %94, %cst_119 {dimension_numbers = #tpu.dot_dimension_numbers<[1], [0], [0], [1], [0, 0, 1, 1], [], []>} : vector<64x288xbf16>, vector<288x64xbf16>, vector<64x64xf32> -> vector<64x64xf32>
    %c0_120 = arith.constant 0 : index
    %c0_121 = arith.constant 0 : index
    %96 = vector.load %arg5[%c0_120, %c0_121] : memref<1x64xf32, #tpu.memory_space<vmem>>, vector<1x64xf32>
    %97 = vector.broadcast %96 : vector<1x64xf32> to vector<64x64xf32>
    %98 = arith.addf %95, %97 : vector<64x64xf32>
    %cst_122 = arith.constant 0.000000e+00 : f32
    %99 = vector.broadcast %cst_122 : f32 to vector<64x64xf32>
    %100 = arith.maximumf %98, %99 : vector<64x64xf32>
    %101 = vector.shape_cast %100 : vector<64x64xf32> to vector<4x16x64xf32>
    %102 = vector.extract_strided_slice %101 {offsets = [0, 0, 0], sizes = [4, 1, 64], strides = [1, 1, 1]} : vector<4x16x64xf32> to vector<4x1x64xf32>
    %103 = vector.shape_cast %102 : vector<4x1x64xf32> to vector<4x64xf32>
    %104 = vector.extract_strided_slice %101 {offsets = [0, 1, 0], sizes = [4, 1, 64], strides = [1, 1, 1]} : vector<4x16x64xf32> to vector<4x1x64xf32>
    %105 = vector.shape_cast %104 : vector<4x1x64xf32> to vector<4x64xf32>
    %106 = vector.extract_strided_slice %101 {offsets = [0, 2, 0], sizes = [4, 1, 64], strides = [1, 1, 1]} : vector<4x16x64xf32> to vector<4x1x64xf32>
    %107 = vector.shape_cast %106 : vector<4x1x64xf32> to vector<4x64xf32>
    %108 = vector.extract_strided_slice %101 {offsets = [0, 3, 0], sizes = [4, 1, 64], strides = [1, 1, 1]} : vector<4x16x64xf32> to vector<4x1x64xf32>
    %109 = vector.shape_cast %108 : vector<4x1x64xf32> to vector<4x64xf32>
    %110 = vector.extract_strided_slice %101 {offsets = [0, 4, 0], sizes = [4, 1, 64], strides = [1, 1, 1]} : vector<4x16x64xf32> to vector<4x1x64xf32>
    %111 = vector.shape_cast %110 : vector<4x1x64xf32> to vector<4x64xf32>
    %112 = vector.extract_strided_slice %101 {offsets = [0, 5, 0], sizes = [4, 1, 64], strides = [1, 1, 1]} : vector<4x16x64xf32> to vector<4x1x64xf32>
    %113 = vector.shape_cast %112 : vector<4x1x64xf32> to vector<4x64xf32>
    %114 = vector.extract_strided_slice %101 {offsets = [0, 6, 0], sizes = [4, 1, 64], strides = [1, 1, 1]} : vector<4x16x64xf32> to vector<4x1x64xf32>
    %115 = vector.shape_cast %114 : vector<4x1x64xf32> to vector<4x64xf32>
    %116 = vector.extract_strided_slice %101 {offsets = [0, 7, 0], sizes = [4, 1, 64], strides = [1, 1, 1]} : vector<4x16x64xf32> to vector<4x1x64xf32>
    %117 = vector.shape_cast %116 : vector<4x1x64xf32> to vector<4x64xf32>
    %118 = vector.extract_strided_slice %101 {offsets = [0, 8, 0], sizes = [4, 1, 64], strides = [1, 1, 1]} : vector<4x16x64xf32> to vector<4x1x64xf32>
    %119 = vector.shape_cast %118 : vector<4x1x64xf32> to vector<4x64xf32>
    %120 = vector.extract_strided_slice %101 {offsets = [0, 9, 0], sizes = [4, 1, 64], strides = [1, 1, 1]} : vector<4x16x64xf32> to vector<4x1x64xf32>
    %121 = vector.shape_cast %120 : vector<4x1x64xf32> to vector<4x64xf32>
    %122 = vector.extract_strided_slice %101 {offsets = [0, 10, 0], sizes = [4, 1, 64], strides = [1, 1, 1]} : vector<4x16x64xf32> to vector<4x1x64xf32>
    %123 = vector.shape_cast %122 : vector<4x1x64xf32> to vector<4x64xf32>
    %124 = vector.extract_strided_slice %101 {offsets = [0, 11, 0], sizes = [4, 1, 64], strides = [1, 1, 1]} : vector<4x16x64xf32> to vector<4x1x64xf32>
    %125 = vector.shape_cast %124 : vector<4x1x64xf32> to vector<4x64xf32>
    %126 = vector.extract_strided_slice %101 {offsets = [0, 12, 0], sizes = [4, 1, 64], strides = [1, 1, 1]} : vector<4x16x64xf32> to vector<4x1x64xf32>
    %127 = vector.shape_cast %126 : vector<4x1x64xf32> to vector<4x64xf32>
    %128 = vector.extract_strided_slice %101 {offsets = [0, 13, 0], sizes = [4, 1, 64], strides = [1, 1, 1]} : vector<4x16x64xf32> to vector<4x1x64xf32>
    %129 = vector.shape_cast %128 : vector<4x1x64xf32> to vector<4x64xf32>
    %130 = vector.extract_strided_slice %101 {offsets = [0, 14, 0], sizes = [4, 1, 64], strides = [1, 1, 1]} : vector<4x16x64xf32> to vector<4x1x64xf32>
    %131 = vector.shape_cast %130 : vector<4x1x64xf32> to vector<4x64xf32>
    %132 = vector.extract_strided_slice %101 {offsets = [0, 15, 0], sizes = [4, 1, 64], strides = [1, 1, 1]} : vector<4x16x64xf32> to vector<4x1x64xf32>
    %133 = vector.shape_cast %132 : vector<4x1x64xf32> to vector<4x64xf32>
    %134 = tpu.concatenate %103, %105, %107, %109, %111, %113, %115, %117, %119, %121, %123, %125, %127, %129, %131, %133 in 1 : vector<4x64xf32>, vector<4x64xf32>, vector<4x64xf32>, vector<4x64xf32>, vector<4x64xf32>, vector<4x64xf32>, vector<4x64xf32>, vector<4x64xf32>, vector<4x64xf32>, vector<4x64xf32>, vector<4x64xf32>, vector<4x64xf32>, vector<4x64xf32>, vector<4x64xf32>, vector<4x64xf32>, vector<4x64xf32> -> vector<4x1024xf32>
    %135 = arith.truncf %134 : vector<4x1024xf32> to vector<4x1024xbf16>
    %c0_123 = arith.constant 0 : index
    %c0_124 = arith.constant 0 : index
    %136 = vector.load %arg6[%c0_123, %c0_124] : memref<1024x64xbf16, #tpu.memory_space<vmem>>, vector<1024x64xbf16>
    %cst_125 = arith.constant dense<0.000000e+00> : vector<4x64xf32>
    %137 = tpu.matmul %135, %136, %cst_125 {dimension_numbers = #tpu.dot_dimension_numbers<[1], [0], [0], [1], [0, 0, 1, 1], [], []>} : vector<4x1024xbf16>, vector<1024x64xbf16>, vector<4x64xf32> -> vector<4x64xf32>
    %c0_126 = arith.constant 0 : index
    %c0_127 = arith.constant 0 : index
    %138 = vector.load %arg7[%c0_126, %c0_127] : memref<1x64xf32, #tpu.memory_space<vmem>>, vector<1x64xf32>
    %139 = vector.broadcast %138 : vector<1x64xf32> to vector<4x64xf32>
    %140 = arith.addf %137, %139 : vector<4x64xf32>
    %cst_128 = arith.constant 0.000000e+00 : f32
    %141 = vector.broadcast %cst_128 : f32 to vector<4x64xf32>
    %142 = arith.maximumf %140, %141 : vector<4x64xf32>
    %c0_129 = arith.constant 0 : index
    %c0_130 = arith.constant 0 : index
    %143 = vector.load %arg8[%c0_129, %c0_130] : memref<1x64xf32, #tpu.memory_space<vmem>>, vector<1x64xf32>
    %144 = vector.broadcast %143 : vector<1x64xf32> to vector<4x64xf32>
    %145 = arith.mulf %142, %144 : vector<4x64xf32>
    %cst_131 = arith.constant dense<0.000000e+00> : vector<4xf32>
    %146 = vector.multi_reduction <add>, %145, %cst_131 [1] : vector<4x64xf32> to vector<4xf32>
    %147 = vector.shape_cast %146 : vector<4xf32> to vector<4x1xf32>
    %c0_132 = arith.constant 0 : index
    %c0_133 = arith.constant 0 : index
    %148 = vector.load %arg9[%c0_132, %c0_133] : memref<1x1xf32, #tpu.memory_space<vmem>>, vector<1x1xf32>
    %149 = vector.broadcast %148 : vector<1x1xf32> to vector<4x1xf32>
    %150 = arith.addf %147, %149 : vector<4x1xf32>
    %c0_134 = arith.constant 0 : index
    %c0_135 = arith.constant 0 : index
    %151 = vector.load %arg10[%c0_134, %c0_135] : memref<4x1xf32, #tpu.memory_space<vmem>>, vector<4x1xf32>
    tpu.vector_store %arg10[%c0_134, %c0_135], %150 {strides = array<i32>} : memref<4x1xf32, #tpu.memory_space<vmem>>, vector<4x1xf32>,
    return
  }
  func.func @transform_0(%arg0: i32) -> (i32, i32, i32, i32) {
    %c0_i32 = arith.constant 0 : i32
    %c0_i32_0 = arith.constant 0 : i32
    %c0_i32_1 = arith.constant 0 : i32
    %c0_i32_2 = arith.constant 0 : i32
    return %arg0, %c0_i32, %c0_i32_0, %c0_i32_1 : i32, i32, i32, i32
  }
  func.func @transform_1(%arg0: i32) -> (i32, i32, i32, i32) {
    %c0_i32 = arith.constant 0 : i32
    %c0_i32_0 = arith.constant 0 : i32
    %c0_i32_1 = arith.constant 0 : i32
    %c0_i32_2 = arith.constant 0 : i32
    %c0_i32_3 = arith.constant 0 : i32
    return %c0_i32, %c0_i32_0, %c0_i32_1, %c0_i32_2 : i32, i32, i32, i32
  }
  func.func @transform_2(%arg0: i32) -> (i32, i32) {
    %c0_i32 = arith.constant 0 : i32
    %c0_i32_0 = arith.constant 0 : i32
    %c0_i32_1 = arith.constant 0 : i32
    return %c0_i32, %c0_i32_0 : i32, i32
  }
  func.func @transform_3(%arg0: i32) -> (i32, i32) {
    %c0_i32 = arith.constant 0 : i32
    %c0_i32_0 = arith.constant 0 : i32
    %c0_i32_1 = arith.constant 0 : i32
    return %c0_i32, %c0_i32_0 : i32, i32
  }
  func.func @transform_4(%arg0: i32) -> (i32, i32) {
    %c0_i32 = arith.constant 0 : i32
    %c0_i32_0 = arith.constant 0 : i32
    %c0_i32_1 = arith.constant 0 : i32
    return %c0_i32, %c0_i32_0 : i32, i32
  }
  func.func @transform_5(%arg0: i32) -> (i32, i32) {
    %c0_i32 = arith.constant 0 : i32
    %c0_i32_0 = arith.constant 0 : i32
    %c0_i32_1 = arith.constant 0 : i32
    return %c0_i32, %c0_i32_0 : i32, i32
  }
  func.func @transform_6(%arg0: i32) -> (i32, i32) {
    %c0_i32 = arith.constant 0 : i32
    %c0_i32_0 = arith.constant 0 : i32
    %c0_i32_1 = arith.constant 0 : i32
    return %c0_i32, %c0_i32_0 : i32, i32
  }
  func.func @transform_7(%arg0: i32) -> (i32, i32) {
    %c0_i32 = arith.constant 0 : i32
    %c0_i32_0 = arith.constant 0 : i32
    %c0_i32_1 = arith.constant 0 : i32
    return %c0_i32, %c0_i32_0 : i32, i32
  }
  func.func @transform_8(%arg0: i32) -> (i32, i32) {
    %c0_i32 = arith.constant 0 : i32
    %c0_i32_0 = arith.constant 0 : i32
    %c0_i32_1 = arith.constant 0 : i32
    return %c0_i32, %c0_i32_0 : i32, i32
  }
  func.func @transform_9(%arg0: i32) -> (i32, i32) {
    %c0_i32 = arith.constant 0 : i32
    %c0_i32_0 = arith.constant 0 : i32
    return %arg0, %c0_i32 : i32, i32
  }
}

</mosaic_0001>

<llo_original>
// kernel: mnist_net_forward.1
$region0: #{mnist_net_forward.1}
  #allocation0 [shape = 'u32[]', space=smem, size = 0x4, offset = 0x4, fixed_abs, tag = 'smem constant byte address 0x4 - core index']
  #allocation1 [shape = 'u32[144,128]{1,0:T(1,128)}', space=vmem, size = 0x12000, scoped, tag = 'internal scratch']
  #allocation2 [shape = 'f32[4,10,10,32]{3,2,1,0:T(8,128)}', space=vmem, size = 0x50000, scoped, tag = 'scratch operand']
  #allocation3 [shape = 'f32[1,1]{1,0:T(1,128)S(1)}', space=vmem, size = 0x200, scoped, tag = 'scoped memory for mnist_net_forward.1']
  %s0 = inlined_call_operand.vmem [shape: f32[4,18,18,1], index: 0, kind: input, shape index: {}]
  %s1 = inlined_call_operand.vmem [shape: f32[3,3,1,32], index: 1, kind: input, shape index: {}]
  %s2 = inlined_call_operand.vmem [shape: f32[1,32], index: 2, kind: input, shape index: {}]
  %s3 = inlined_call_operand.vmem [shape: bf16[288,64], index: 3, kind: input, shape index: {}]
  %s4 = inlined_call_operand.vmem [shape: f32[1,64], index: 4, kind: input, shape index: {}]
  %s5 = inlined_call_operand.vmem [shape: bf16[1024,64], index: 5, kind: input, shape index: {}]
  %s6 = inlined_call_operand.vmem [shape: f32[1,64], index: 6, kind: input, shape index: {}]
  %s7 = inlined_call_operand.vmem [shape: f32[1,64], index: 7, kind: input, shape index: {}]
  %s8 = inlined_call_operand.<no memory space> [shape: f32[1,1], index: 8, kind: input, shape index: {}]
  %s9 = inlined_call_operand.vmem [shape: f32[4,1], index: 9, kind: output, shape index: {}]
  %s10 = sld [smem:[#allocation0]]
  $region46: #{mnist_net_forward.1} parent=0
    _
  %s12 = ssub.s32 1, %s10
  %s13 = scalar_select 0, %s12, %s10
  %v14 = vstv %s8
  %15 = vst [vmem:[#allocation3] sm:$0x1] %v14
  // Predicated region
  $region2: #{mnist_net_forward.1} parent=0 // pred_check
    _
  $region3: #{mnist_net_forward.1} parent=0 // pred_check_branch
    %17 = sbr.rel (0) target = $region5
  $region4: #{mnist_net_forward.1} parent=0 // pred_region
    _
  $region5: #{mnist_net_forward.1} parent=0 // pred_fallthru
    _
  // Predicated region
  $region6: #{mnist_net_forward.1} parent=0 // pred_check
    _
  $region7: #{mnist_net_forward.1} parent=0 // pred_check_branch
    %19 = sbr.rel (0) target = $region9
  $region8: #{mnist_net_forward.1} parent=0 // pred_region
    _
  $region9: #{mnist_net_forward.1} parent=0 // pred_fallthru
    _
  // Predicated region
  $region10: #{mnist_net_forward.1} parent=0 // pred_check
    _
  $region11: #{mnist_net_forward.1} parent=0 // pred_check_branch
    %21 = sbr.rel (0) target = $region13
  $region12: #{mnist_net_forward.1} parent=0 // pred_region
    _
  $region13: #{mnist_net_forward.1} parent=0 // pred_fallthru
    _
  // Predicated region
  $region14: #{mnist_net_forward.1} parent=0 // pred_check
    _
  $region15: #{mnist_net_forward.1} parent=0 // pred_check_branch
    %23 = sbr.rel (0) target = $region17
  $region16: #{mnist_net_forward.1} parent=0 // pred_region
    _
  $region17: #{mnist_net_forward.1} parent=0 // pred_fallthru
    _
  // Predicated region
  $region18: #{mnist_net_forward.1} parent=0 // pred_check
    _
  $region19: #{mnist_net_forward.1} parent=0 // pred_check_branch
    %25 = sbr.rel (0) target = $region21
  $region20: #{mnist_net_forward.1} parent=0 // pred_region
    _
  $region21: #{mnist_net_forward.1} parent=0 // pred_fallthru
    _
  // Predicated region
  $region22: #{mnist_net_forward.1} parent=0 // pred_check
    _
  $region23: #{mnist_net_forward.1} parent=0 // pred_check_branch
    %27 = sbr.rel (0) target = $region25
  $region24: #{mnist_net_forward.1} parent=0 // pred_region
    _
  $region25: #{mnist_net_forward.1} parent=0 // pred_fallthru
    _
  // Predicated region
  $region26: #{mnist_net_forward.1} parent=0 // pred_check
    _
  $region27: #{mnist_net_forward.1} parent=0 // pred_check_branch
    %29 = sbr.rel (0) target = $region29
  $region28: #{mnist_net_forward.1} parent=0 // pred_region
    _
  $region29: #{mnist_net_forward.1} parent=0 // pred_fallthru
    _
  // Predicated region
  $region30: #{mnist_net_forward.1} parent=0 // pred_check
    _
  $region31: #{mnist_net_forward.1} parent=0 // pred_check_branch
    %31 = sbr.rel (0) target = $region33
  $region32: #{mnist_net_forward.1} parent=0 // pred_region
    _
  $region33: #{mnist_net_forward.1} parent=0 // pred_fallthru
    _
  // Predicated region
  $region34: #{mnist_net_forward.1} parent=0 // pred_check
    _
  $region35: #{mnist_net_forward.1} parent=0 // pred_check_branch
    %33 = sbr.rel (0) target = $region37
  $region36: #{mnist_net_forward.1} parent=0 // pred_region
    _
  $region37: #{mnist_net_forward.1} parent=0 // pred_fallthru
    _
  %v35 = vld [vmem:[%s0] ss:$2 sm:$0xff]
  %s36 = scalar_lea.vmem %s0, 48
  %v37 = vld [vmem:[%s36] ss:$2 sm:$0xff]
  %s38 = scalar_lea.vmem %s0, 96
  %v39 = vld [vmem:[%s38] ss:$2 sm:$0xff]
  %s40 = scalar_lea.vmem %s0, 144
  %v41 = vld [vmem:[%s40] ss:$2 sm:$0xff]
  %s42 = scalar_lea.vmem %s0, 192
  %v43 = vld [vmem:[%s42] ss:$2 sm:$0xff]
  %s44 = scalar_lea.vmem %s0, 240
  %v45 = vld [vmem:[%s44] ss:$2 sm:$0xff]
  %s46 = scalar_lea.vmem %s0, 288
  %v47 = vld [vmem:[%s46] ss:$2 sm:$0xff]
  %s48 = scalar_lea.vmem %s0, 336
  %v49 = vld [vmem:[%s48] ss:$2 sm:$0xff]
  %s50 = scalar_lea.vmem %s0, 432
  %v51 = vld [vmem:[%s50] ss:$2 sm:$0xff]
  %s52 = scalar_lea.vmem %s0, 480
  %v53 = vld [vmem:[%s52] ss:$2 sm:$0xff]
  %s54 = scalar_lea.vmem %s0, 528
  %v55 = vld [vmem:[%s54] ss:$2 sm:$0xff]
  %s56 = scalar_lea.vmem %s0, 576
  %v57 = vld [vmem:[%s56] ss:$2 sm:$0xff]
  %s58 = scalar_lea.vmem %s0, 624
  %v59 = vld [vmem:[%s58] ss:$2 sm:$0xff]
  %s60 = scalar_lea.vmem %s0, 672
  %v61 = vld [vmem:[%s60] ss:$2 sm:$0xff]
  %s62 = scalar_lea.vmem %s0, 720
  %v63 = vld [vmem:[%s62] ss:$2 sm:$0xff]
  %s64 = scalar_lea.vmem %s0, 768
  %v65 = vld [vmem:[%s64] ss:$2 sm:$0xff]
  %s66 = scalar_lea.vmem %s0, 864
  %v67 = vld [vmem:[%s66] ss:$2 sm:$0xff]
  %s68 = scalar_lea.vmem %s0, 912
  %v69 = vld [vmem:[%s68] ss:$2 sm:$0xff]
  %s70 = scalar_lea.vmem %s0, 960
  %v71 = vld [vmem:[%s70] ss:$2 sm:$0xff]
  %s72 = scalar_lea.vmem %s0, 1008
  %v73 = vld [vmem:[%s72] ss:$2 sm:$0xff]
  %s74 = scalar_lea.vmem %s0, 1056
  %v75 = vld [vmem:[%s74] ss:$2 sm:$0xff]
  %s76 = scalar_lea.vmem %s0, 1104
  %v77 = vld [vmem:[%s76] ss:$2 sm:$0xff]
  %s78 = scalar_lea.vmem %s0, 1152
  %v79 = vld [vmem:[%s78] ss:$2 sm:$0xff]
  %s80 = scalar_lea.vmem %s0, 1200
  %v81 = vld [vmem:[%s80] ss:$2 sm:$0xff]
  %s82 = scalar_lea.vmem %s0, 1296
  %v83 = vld [vmem:[%s82] ss:$2 sm:$0xff]
  %s84 = scalar_lea.vmem %s0, 1344
  %v85 = vld [vmem:[%s84] ss:$2 sm:$0xff]
  %s86 = scalar_lea.vmem %s0, 1392
  %v87 = vld [vmem:[%s86] ss:$2 sm:$0xff]
  %s88 = scalar_lea.vmem %s0, 1440
  %v89 = vld [vmem:[%s88] ss:$2 sm:$0xff]
  %s90 = scalar_lea.vmem %s0, 1488
  %v91 = vld [vmem:[%s90] ss:$2 sm:$0xff]
  %s92 = scalar_lea.vmem %s0, 1536
  %v93 = vld [vmem:[%s92] ss:$2 sm:$0xff]
  %s94 = scalar_lea.vmem %s0, 1584
  %v95 = vld [vmem:[%s94] ss:$2 sm:$0xff]
  %s96 = scalar_lea.vmem %s0, 1632
  %v97 = vld [vmem:[%s96] ss:$2 sm:$0xff]
  %v98 = vld [vmem:[%s1] sm:$0x1]
  %100 = vset.pattern.permute.xlu0 0
  %101 = vperm.xlu0 %100, %v35
  %v102 = vpop.permute.xlu0 %101
  %105 = vset.pattern.permute.xlu0 0
  %106 = vperm.xlu0 %105, %v37
  %v107 = vpop.permute.xlu0 %106
  %110 = vset.pattern.permute.xlu0 0
  %111 = vperm.xlu0 %110, %v39
  %v112 = vpop.permute.xlu0 %111
  %115 = vset.pattern.permute.xlu0 0
  %116 = vperm.xlu0 %115, %v41
  %v117 = vpop.permute.xlu0 %116
  %120 = vset.pattern.permute.xlu0 0
  %121 = vperm.xlu0 %120, %v43
  %v122 = vpop.permute.xlu0 %121
  %125 = vset.pattern.permute.xlu0 0
  %126 = vperm.xlu0 %125, %v45
  %v127 = vpop.permute.xlu0 %126
  %130 = vset.pattern.permute.xlu0 0
  %131 = vperm.xlu0 %130, %v47
  %v132 = vpop.permute.xlu0 %131
  %135 = vset.pattern.permute.xlu0 0
  %136 = vperm.xlu0 %135, %v49
  %v137 = vpop.permute.xlu0 %136
  %140 = vset.pattern.permute.xlu0 0
  %141 = vperm.xlu0 %140, %v51
  %v142 = vpop.permute.xlu0 %141
  %145 = vset.pattern.permute.xlu0 0
  %146 = vperm.xlu0 %145, %v53
  %v147 = vpop.permute.xlu0 %146
  %150 = vset.pattern.permute.xlu0 0
  %151 = vperm.xlu0 %150, %v55
  %v152 = vpop.permute.xlu0 %151
  %155 = vset.pattern.permute.xlu0 0
  %156 = vperm.xlu0 %155, %v57
  %v157 = vpop.permute.xlu0 %156
  %160 = vset.pattern.permute.xlu0 0
  %161 = vperm.xlu0 %160, %v59
  %v162 = vpop.permute.xlu0 %161
  %165 = vset.pattern.permute.xlu0 0
  %166 = vperm.xlu0 %165, %v61
  %v167 = vpop.permute.xlu0 %166
  %170 = vset.pattern.permute.xlu0 0
  %171 = vperm.xlu0 %170, %v63
  %v172 = vpop.permute.xlu0 %171
  %175 = vset.pattern.permute.xlu0 0
  %176 = vperm.xlu0 %175, %v65
  %v177 = vpop.permute.xlu0 %176
  %180 = vset.pattern.permute.xlu0 0
  %181 = vperm.xlu0 %180, %v67
  %v182 = vpop.permute.xlu0 %181
  %185 = vset.pattern.permute.xlu0 0
  %186 = vperm.xlu0 %185, %v69
  %v187 = vpop.permute.xlu0 %186
  %190 = vset.pattern.permute.xlu0 0
  %191 = vperm.xlu0 %190, %v71
  %v192 = vpop.permute.xlu0 %191
  %195 = vset.pattern.permute.xlu0 0
  %196 = vperm.xlu0 %195, %v73
  %v197 = vpop.permute.xlu0 %196
  %200 = vset.pattern.permute.xlu0 0
  %201 = vperm.xlu0 %200, %v75
  %v202 = vpop.permute.xlu0 %201
  %205 = vset.pattern.permute.xlu0 0
  %206 = vperm.xlu0 %205, %v77
  %v207 = vpop.permute.xlu0 %206
  %210 = vset.pattern.permute.xlu0 0
  %211 = vperm.xlu0 %210, %v79
  %v212 = vpop.permute.xlu0 %211
  %215 = vset.pattern.permute.xlu0 0
  %216 = vperm.xlu0 %215, %v81
  %v217 = vpop.permute.xlu0 %216
  %220 = vset.pattern.permute.xlu0 0
  %221 = vperm.xlu0 %220, %v83
  %v222 = vpop.permute.xlu0 %221
  %225 = vset.pattern.permute.xlu0 0
  %226 = vperm.xlu0 %225, %v85
  %v227 = vpop.permute.xlu0 %226
  %230 = vset.pattern.permute.xlu0 0
  %231 = vperm.xlu0 %230, %v87
  %v232 = vpop.permute.xlu0 %231
  %235 = vset.pattern.permute.xlu0 0
  %236 = vperm.xlu0 %235, %v89
  %v237 = vpop.permute.xlu0 %236
  %240 = vset.pattern.permute.xlu0 0
  %241 = vperm.xlu0 %240, %v91
  %v242 = vpop.permute.xlu0 %241
  %245 = vset.pattern.permute.xlu0 0
  %246 = vperm.xlu0 %245, %v93
  %v247 = vpop.permute.xlu0 %246
  %250 = vset.pattern.permute.xlu0 0
  %251 = vperm.xlu0 %250, %v95
  %v252 = vpop.permute.xlu0 %251
  %255 = vset.pattern.permute.xlu0 0
  %256 = vperm.xlu0 %255, %v97
  %v257 = vpop.permute.xlu0 %256
  %v260 = vlaneseq
  %v261 = vshrl.u32 %v260, 7
  %v262 = vsub.s32 0, %v261
  %v263 = vrot.slane %v98, %v262
  %v265 = vmul.f32 %v102, %v263
  %v266 = vmul.f32 %v107, %v263
  %v267 = vmul.f32 %v112, %v263
  %v268 = vmul.f32 %v117, %v263
  %v269 = vmul.f32 %v122, %v263
  %v270 = vmul.f32 %v127, %v263
  %v271 = vmul.f32 %v132, %v263
  %v272 = vmul.f32 %v137, %v263
  %v273 = vmul.f32 %v142, %v263
  %v274 = vmul.f32 %v147, %v263
  %v275 = vmul.f32 %v152, %v263
  %v276 = vmul.f32 %v157, %v263
  %v277 = vmul.f32 %v162, %v263
  %v278 = vmul.f32 %v167, %v263
  %v279 = vmul.f32 %v172, %v263
  %v280 = vmul.f32 %v177, %v263
  %v281 = vmul.f32 %v182, %v263
  %v282 = vmul.f32 %v187, %v263
  %v283 = vmul.f32 %v192, %v263
  %v284 = vmul.f32 %v197, %v263
  %v285 = vmul.f32 %v202, %v263
  %v286 = vmul.f32 %v207, %v263
  %v287 = vmul.f32 %v212, %v263
  %v288 = vmul.f32 %v217, %v263
  %v289 = vmul.f32 %v222, %v263
  %v290 = vmul.f32 %v227, %v263
  %v291 = vmul.f32 %v232, %v263
  %v292 = vmul.f32 %v237, %v263
  %v293 = vmul.f32 %v242, %v263
  %v294 = vmul.f32 %v247, %v263
  %v295 = vmul.f32 %v252, %v263
  %v296 = vmul.f32 %v257, %v263
  %v297 = vadd.f32 %v265, 0.0
  %v298 = vadd.f32 %v266, 0.0
  %v299 = vadd.f32 %v267, 0.0
  %v300 = vadd.f32 %v268, 0.0
  %v301 = vadd.f32 %v269, 0.0
  %v302 = vadd.f32 %v270, 0.0
  %v303 = vadd.f32 %v271, 0.0
  %v304 = vadd.f32 %v272, 0.0
  %v305 = vadd.f32 %v273, 0.0
  %v306 = vadd.f32 %v274, 0.0
  %v307 = vadd.f32 %v275, 0.0
  %v308 = vadd.f32 %v276, 0.0
  %v309 = vadd.f32 %v277, 0.0
  %v310 = vadd.f32 %v278, 0.0
  %v311 = vadd.f32 %v279, 0.0
  %v312 = vadd.f32 %v280, 0.0
  %v313 = vadd.f32 %v281, 0.0
  %v314 = vadd.f32 %v282, 0.0
  %v315 = vadd.f32 %v283, 0.0
  %v316 = vadd.f32 %v284, 0.0
  %v317 = vadd.f32 %v285, 0.0
  %v318 = vadd.f32 %v286, 0.0
  %v319 = vadd.f32 %v287, 0.0
  %v320 = vadd.f32 %v288, 0.0
  %v321 = vadd.f32 %v289, 0.0
  %v322 = vadd.f32 %v290, 0.0
  %v323 = vadd.f32 %v291, 0.0
  %v324 = vadd.f32 %v292, 0.0
  %v325 = vadd.f32 %v293, 0.0
  %v326 = vadd.f32 %v294, 0.0
  %v327 = vadd.f32 %v295, 0.0
  %v328 = vadd.f32 %v296, 0.0
  %s329 = scalar_lea.vmem %s0, 1
  %v330 = vld [vmem:[%s329] ss:$2 sm:$0xff]
  %s331 = scalar_lea.vmem %s0, 49
  %v332 = vld [vmem:[%s331] ss:$2 sm:$0xff]
  %s333 = scalar_lea.vmem %s0, 97
  %v334 = vld [vmem:[%s333] ss:$2 sm:$0xff]
  %s335 = scalar_lea.vmem %s0, 145
  %v336 = vld [vmem:[%s335] ss:$2 sm:$0xff]
  %s337 = scalar_lea.vmem %s0, 193
  %v338 = vld [vmem:[%s337] ss:$2 sm:$0xff]
  %s339 = scalar_lea.vmem %s0, 241
  %v340 = vld [vmem:[%s339] ss:$2 sm:$0xff]
  %s341 = scalar_lea.vmem %s0, 289
  %v342 = vld [vmem:[%s341] ss:$2 sm:$0xff]
  %s343 = scalar_lea.vmem %s0, 337
  %v344 = vld [vmem:[%s343] ss:$2 sm:$0xff]
  %s345 = scalar_lea.vmem %s0, 433
  %v346 = vld [vmem:[%s345] ss:$2 sm:$0xff]
  %s347 = scalar_lea.vmem %s0, 481
  %v348 = vld [vmem:[%s347] ss:$2 sm:$0xff]
  %s349 = scalar_lea.vmem %s0, 529
  %v350 = vld [vmem:[%s349] ss:$2 sm:$0xff]
  %s351 = scalar_lea.vmem %s0, 577
  %v352 = vld [vmem:[%s351] ss:$2 sm:$0xff]
  %s353 = scalar_lea.vmem %s0, 625
  %v354 = vld [vmem:[%s353] ss:$2 sm:$0xff]
  %s355 = scalar_lea.vmem %s0, 673
  %v356 = vld [vmem:[%s355] ss:$2 sm:$0xff]
  %s357 = scalar_lea.vmem %s0, 721
  %v358 = vld [vmem:[%s357] ss:$2 sm:$0xff]
  %s359 = scalar_lea.vmem %s0, 769
  %v360 = vld [vmem:[%s359] ss:$2 sm:$0xff]
  %s361 = scalar_lea.vmem %s0, 865
  %v362 = vld [vmem:[%s361] ss:$2 sm:$0xff]
  %s363 = scalar_lea.vmem %s0, 913
  %v364 = vld [vmem:[%s363] ss:$2 sm:$0xff]
  %s365 = scalar_lea.vmem %s0, 961
  %v366 = vld [vmem:[%s365] ss:$2 sm:$0xff]
  %s367 = scalar_lea.vmem %s0, 1009
  %v368 = vld [vmem:[%s367] ss:$2 sm:$0xff]
  %s369 = scalar_lea.vmem %s0, 1057
  %v370 = vld [vmem:[%s369] ss:$2 sm:$0xff]
  %s371 = scalar_lea.vmem %s0, 1105
  %v372 = vld [vmem:[%s371] ss:$2 sm:$0xff]
  %s373 = scalar_lea.vmem %s0, 1153
  %v374 = vld [vmem:[%s373] ss:$2 sm:$0xff]
  %s375 = scalar_lea.vmem %s0, 1201
  %v376 = vld [vmem:[%s375] ss:$2 sm:$0xff]
  %s377 = scalar_lea.vmem %s0, 1297
  %v378 = vld [vmem:[%s377] ss:$2 sm:$0xff]
  %s379 = scalar_lea.vmem %s0, 1345
  %v380 = vld [vmem:[%s379] ss:$2 sm:$0xff]
  %s381 = scalar_lea.vmem %s0, 1393
  %v382 = vld [vmem:[%s381] ss:$2 sm:$0xff]
  %s383 = scalar_lea.vmem %s0, 1441
  %v384 = vld [vmem:[%s383] ss:$2 sm:$0xff]
  %s385 = scalar_lea.vmem %s0, 1489
  %v386 = vld [vmem:[%s385] ss:$2 sm:$0xff]
  %s387 = scalar_lea.vmem %s0, 1537
  %v388 = vld [vmem:[%s387] ss:$2 sm:$0xff]
  %s389 = scalar_lea.vmem %s0, 1585
  %v390 = vld [vmem:[%s389] ss:$2 sm:$0xff]
  %s391 = scalar_lea.vmem %s0, 1633
  %v392 = vld [vmem:[%s391] ss:$2 sm:$0xff]
  %s393 = scalar_lea.vmem %s1, 1
  %v394 = vld [vmem:[%s393] sm:$0x1]
  %396 = vset.pattern.permute.xlu0 0
  %397 = vperm.xlu0 %396, %v330
  %v398 = vpop.permute.xlu0 %397
  %401 = vset.pattern.permute.xlu0 0
  %402 = vperm.xlu0 %401, %v332
  %v403 = vpop.permute.xlu0 %402
  %406 = vset.pattern.permute.xlu0 0
  %407 = vperm.xlu0 %406, %v334
  %v408 = vpop.permute.xlu0 %407
  %411 = vset.pattern.permute.xlu0 0
  %412 = vperm.xlu0 %411, %v336
  %v413 = vpop.permute.xlu0 %412
  %416 = vset.pattern.permute.xlu0 0
  %417 = vperm.xlu0 %416, %v338
  %v418 = vpop.permute.xlu0 %417
  %421 = vset.pattern.permute.xlu0 0
  %422 = vperm.xlu0 %421, %v340
  %v423 = vpop.permute.xlu0 %422
  %426 = vset.pattern.permute.xlu0 0
  %427 = vperm.xlu0 %426, %v342
  %v428 = vpop.permute.xlu0 %427
  %431 = vset.pattern.permute.xlu0 0
  %432 = vperm.xlu0 %431, %v344
  %v433 = vpop.permute.xlu0 %432
  %436 = vset.pattern.permute.xlu0 0
  %437 = vperm.xlu0 %436, %v346
  %v438 = vpop.permute.xlu0 %437
  %441 = vset.pattern.permute.xlu0 0
  %442 = vperm.xlu0 %441, %v348
  %v443 = vpop.permute.xlu0 %442
  %446 = vset.pattern.permute.xlu0 0
  %447 = vperm.xlu0 %446, %v350
  %v448 = vpop.permute.xlu0 %447
  %451 = vset.pattern.permute.xlu0 0
  %452 = vperm.xlu0 %451, %v352
  %v453 = vpop.permute.xlu0 %452
  %456 = vset.pattern.permute.xlu0 0
  %457 = vperm.xlu0 %456, %v354
  %v458 = vpop.permute.xlu0 %457
  %461 = vset.pattern.permute.xlu0 0
  %462 = vperm.xlu0 %461, %v356
  %v463 = vpop.permute.xlu0 %462
  %466 = vset.pattern.permute.xlu0 0
  %467 = vperm.xlu0 %466, %v358
  %v468 = vpop.permute.xlu0 %467
  %471 = vset.pattern.permute.xlu0 0
  %472 = vperm.xlu0 %471, %v360
  %v473 = vpop.permute.xlu0 %472
  %476 = vset.pattern.permute.xlu0 0
  %477 = vperm.xlu0 %476, %v362
  %v478 = vpop.permute.xlu0 %477
  %481 = vset.pattern.permute.xlu0 0
  %482 = vperm.xlu0 %481, %v364
  %v483 = vpop.permute.xlu0 %482
  %486 = vset.pattern.permute.xlu0 0
  %487 = vperm.xlu0 %486, %v366
  %v488 = vpop.permute.xlu0 %487
  %491 = vset.pattern.permute.xlu0 0
  %492 = vperm.xlu0 %491, %v368
  %v493 = vpop.permute.xlu0 %492
  %496 = vset.pattern.permute.xlu0 0
  %497 = vperm.xlu0 %496, %v370
  %v498 = vpop.permute.xlu0 %497
  %501 = vset.pattern.permute.xlu0 0
  %502 = vperm.xlu0 %501, %v372
  %v503 = vpop.permute.xlu0 %502
  %506 = vset.pattern.permute.xlu0 0
  %507 = vperm.xlu0 %506, %v374
  %v508 = vpop.permute.xlu0 %507
  %511 = vset.pattern.permute.xlu0 0
  %512 = vperm.xlu0 %511, %v376
  %v513 = vpop.permute.xlu0 %512
  %516 = vset.pattern.permute.xlu0 0
  %517 = vperm.xlu0 %516, %v378
  %v518 = vpop.permute.xlu0 %517
  %521 = vset.pattern.permute.xlu0 0
  %522 = vperm.xlu0 %521, %v380
  %v523 = vpop.permute.xlu0 %522
  %526 = vset.pattern.permute.xlu0 0
  %527 = vperm.xlu0 %526, %v382
  %v528 = vpop.permute.xlu0 %527
  %531 = vset.pattern.permute.xlu0 0
  %532 = vperm.xlu0 %531, %v384
  %v533 = vpop.permute.xlu0 %532
  %536 = vset.pattern.permute.xlu0 0
  %537 = vperm.xlu0 %536, %v386
  %v538 = vpop.permute.xlu0 %537
  %541 = vset.pattern.permute.xlu0 0
  %542 = vperm.xlu0 %541, %v388
  %v543 = vpop.permute.xlu0 %542
  %546 = vset.pattern.permute.xlu0 0
  %547 = vperm.xlu0 %546, %v390
  %v548 = vpop.permute.xlu0 %547
  %551 = vset.pattern.permute.xlu0 0
  %552 = vperm.xlu0 %551, %v392
  %v553 = vpop.permute.xlu0 %552
  %v556 = vlaneseq
  %v557 = vshrl.u32 %v556, 7
  %v558 = vsub.s32 0, %v557
  %v559 = vrot.slane %v394, %v558
  %v561 = vmul.f32 %v398, %v559
  %v562 = vmul.f32 %v403, %v559
  %v563 = vmul.f32 %v408, %v559
  %v564 = vmul.f32 %v413, %v559
  %v565 = vmul.f32 %v418, %v559
  %v566 = vmul.f32 %v423, %v559
  %v567 = vmul.f32 %v428, %v559
  %v568 = vmul.f32 %v433, %v559
  %v569 = vmul.f32 %v438, %v559
  %v570 = vmul.f32 %v443, %v559
  %v571 = vmul.f32 %v448, %v559
  %v572 = vmul.f32 %v453, %v559
  %v573 = vmul.f32 %v458, %v559
  %v574 = vmul.f32 %v463, %v559
  %v575 = vmul.f32 %v468, %v559
  %v576 = vmul.f32 %v473, %v559
  %v577 = vmul.f32 %v478, %v559
  %v578 = vmul.f32 %v483, %v559
  %v579 = vmul.f32 %v488, %v559
  %v580 = vmul.f32 %v493, %v559
  %v581 = vmul.f32 %v498, %v559
  %v582 = vmul.f32 %v503, %v559
  %v583 = vmul.f32 %v508, %v559
  %v584 = vmul.f32 %v513, %v559
  %v585 = vmul.f32 %v518, %v559
  %v586 = vmul.f32 %v523, %v559
  %v587 = vmul.f32 %v528, %v559
  %v588 = vmul.f32 %v533, %v559
  %v589 = vmul.f32 %v538, %v559
  %v590 = vmul.f32 %v543, %v559
  %v591 = vmul.f32 %v548, %v559
  %v592 = vmul.f32 %v553, %v559
  %v593 = vadd.f32 %v297, %v561
  %v594 = vadd.f32 %v298, %v562
  %v595 = vadd.f32 %v299, %v563
  %v596 = vadd.f32 %v300, %v564
  %v597 = vadd.f32 %v301, %v565
  %v598 = vadd.f32 %v302, %v566
  %v599 = vadd.f32 %v303, %v567
  %v600 = vadd.f32 %v304, %v568
  %v601 = vadd.f32 %v305, %v569
  %v602 = vadd.f32 %v306, %v570
  %v603 = vadd.f32 %v307, %v571
  %v604 = vadd.f32 %v308, %v572
  %v605 = vadd.f32 %v309, %v573
  %v606 = vadd.f32 %v310, %v574
  %v607 = vadd.f32 %v311, %v575
  %v608 = vadd.f32 %v312, %v576
  %v609 = vadd.f32 %v313, %v577
  %v610 = vadd.f32 %v314, %v578
  %v611 = vadd.f32 %v315, %v579
  %v612 = vadd.f32 %v316, %v580
  %v613 = vadd.f32 %v317, %v581
  %v614 = vadd.f32 %v318, %v582
  %v615 = vadd.f32 %v319, %v583
  %v616 = vadd.f32 %v320, %v584
  %v617 = vadd.f32 %v321, %v585
  %v618 = vadd.f32 %v322, %v586
  %v619 = vadd.f32 %v323, %v587
  %v620 = vadd.f32 %v324, %v588
  %v621 = vadd.f32 %v325, %v589
  %v622 = vadd.f32 %v326, %v590
  %v623 = vadd.f32 %v327, %v591
  %v624 = vadd.f32 %v328, %v592
  %s625 = scalar_lea.vmem %s0, 2
  %v626 = vld [vmem:[%s625] ss:$2 sm:$0xff]
  %s627 = scalar_lea.vmem %s0, 50
  %v628 = vld [vmem:[%s627] ss:$2 sm:$0xff]
  %s629 = scalar_lea.vmem %s0, 98
  %v630 = vld [vmem:[%s629] ss:$2 sm:$0xff]
  %s631 = scalar_lea.vmem %s0, 146
  %v632 = vld [vmem:[%s631] ss:$2 sm:$0xff]
  %s633 = scalar_lea.vmem %s0, 194
  %v634 = vld [vmem:[%s633] ss:$2 sm:$0xff]
  %s635 = scalar_lea.vmem %s0, 242
  %v636 = vld [vmem:[%s635] ss:$2 sm:$0xff]
  %s637 = scalar_lea.vmem %s0, 290
  %v638 = vld [vmem:[%s637] ss:$2 sm:$0xff]
  %s639 = scalar_lea.vmem %s0, 338
  %v640 = vld [vmem:[%s639] ss:$2 sm:$0xff]
  %s641 = scalar_lea.vmem %s0, 434
  %v642 = vld [vmem:[%s641] ss:$2 sm:$0xff]
  %s643 = scalar_lea.vmem %s0, 482
  %v644 = vld [vmem:[%s643] ss:$2 sm:$0xff]
  %s645 = scalar_lea.vmem %s0, 530
  %v646 = vld [vmem:[%s645] ss:$2 sm:$0xff]
  %s647 = scalar_lea.vmem %s0, 578
  %v648 = vld [vmem:[%s647] ss:$2 sm:$0xff]
  %s649 = scalar_lea.vmem %s0, 626
  %v650 = vld [vmem:[%s649] ss:$2 sm:$0xff]
  %s651 = scalar_lea.vmem %s0, 674
  %v652 = vld [vmem:[%s651] ss:$2 sm:$0xff]
  %s653 = scalar_lea.vmem %s0, 722
  %v654 = vld [vmem:[%s653] ss:$2 sm:$0xff]
  %s655 = scalar_lea.vmem %s0, 770
  %v656 = vld [vmem:[%s655] ss:$2 sm:$0xff]
  %s657 = scalar_lea.vmem %s0, 866
  %v658 = vld [vmem:[%s657] ss:$2 sm:$0xff]
  %s659 = scalar_lea.vmem %s0, 914
  %v660 = vld [vmem:[%s659] ss:$2 sm:$0xff]
  %s661 = scalar_lea.vmem %s0, 962
  %v662 = vld [vmem:[%s661] ss:$2 sm:$0xff]
  %s663 = scalar_lea.vmem %s0, 1010
  %v664 = vld [vmem:[%s663] ss:$2 sm:$0xff]
  %s665 = scalar_lea.vmem %s0, 1058
  %v666 = vld [vmem:[%s665] ss:$2 sm:$0xff]
  %s667 = scalar_lea.vmem %s0, 1106
  %v668 = vld [vmem:[%s667] ss:$2 sm:$0xff]
  %s669 = scalar_lea.vmem %s0, 1154
  %v670 = vld [vmem:[%s669] ss:$2 sm:$0xff]
  %s671 = scalar_lea.vmem %s0, 1202
  %v672 = vld [vmem:[%s671] ss:$2 sm:$0xff]
  %s673 = scalar_lea.vmem %s0, 1298
  %v674 = vld [vmem:[%s673] ss:$2 sm:$0xff]
  %s675 = scalar_lea.vmem %s0, 1346
  %v676 = vld [vmem:[%s675] ss:$2 sm:$0xff]
  %s677 = scalar_lea.vmem %s0, 1394
  %v678 = vld [vmem:[%s677] ss:$2 sm:$0xff]
  %s679 = scalar_lea.vmem %s0, 1442
  %v680 = vld [vmem:[%s679] ss:$2 sm:$0xff]
  %s681 = scalar_lea.vmem %s0, 1490
  %v682 = vld [vmem:[%s681] ss:$2 sm:$0xff]
  %s683 = scalar_lea.vmem %s0, 1538
  %v684 = vld [vmem:[%s683] ss:$2 sm:$0xff]
  %s685 = scalar_lea.vmem %s0, 1586
  %v686 = vld [vmem:[%s685] ss:$2 sm:$0xff]
  %s687 = scalar_lea.vmem %s0, 1634
  %v688 = vld [vmem:[%s687] ss:$2 sm:$0xff]
  %s689 = scalar_lea.vmem %s1, 2
  %v690 = vld [vmem:[%s689] sm:$0x1]
  %692 = vset.pattern.permute.xlu0 0
  %693 = vperm.xlu0 %692, %v626
  %v694 = vpop.permute.xlu0 %693
  %697 = vset.pattern.permute.xlu0 0
  %698 = vperm.xlu0 %697, %v628
  %v699 = vpop.permute.xlu0 %698
  %702 = vset.pattern.permute.xlu0 0
  %703 = vperm.xlu0 %702, %v630
  %v704 = vpop.permute.xlu0 %703
  %707 = vset.pattern.permute.xlu0 0
  %708 = vperm.xlu0 %707, %v632
  %v709 = vpop.permute.xlu0 %708
  %712 = vset.pattern.permute.xlu0 0
  %713 = vperm.xlu0 %712, %v634
  %v714 = vpop.permute.xlu0 %713
  %717 = vset.pattern.permute.xlu0 0
  %718 = vperm.xlu0 %717, %v636
  %v719 = vpop.permute.xlu0 %718
  %722 = vset.pattern.permute.xlu0 0
  %723 = vperm.xlu0 %722, %v638
  %v724 = vpop.permute.xlu0 %723
  %727 = vset.pattern.permute.xlu0 0
  %728 = vperm.xlu0 %727, %v640
  %v729 = vpop.permute.xlu0 %728
  %732 = vset.pattern.permute.xlu0 0
  %733 = vperm.xlu0 %732, %v642
  %v734 = vpop.permute.xlu0 %733
  %737 = vset.pattern.permute.xlu0 0
  %738 = vperm.xlu0 %737, %v644
  %v739 = vpop.permute.xlu0 %738
  %742 = vset.pattern.permute.xlu0 0
  %743 = vperm.xlu0 %742, %v646
  %v744 = vpop.permute.xlu0 %743
  %747 = vset.pattern.permute.xlu0 0
  %748 = vperm.xlu0 %747, %v648
  %v749 = vpop.permute.xlu0 %748
  %752 = vset.pattern.permute.xlu0 0
  %753 = vperm.xlu0 %752, %v650
  %v754 = vpop.permute.xlu0 %753
  %757 = vset.pattern.permute.xlu0 0
  %758 = vperm.xlu0 %757, %v652
  %v759 = vpop.permute.xlu0 %758
  %762 = vset.pattern.permute.xlu0 0
  %763 = vperm.xlu0 %762, %v654
  %v764 = vpop.permute.xlu0 %763
  %767 = vset.pattern.permute.xlu0 0
  %768 = vperm.xlu0 %767, %v656
  %v769 = vpop.permute.xlu0 %768
  %772 = vset.pattern.permute.xlu0 0
  %773 = vperm.xlu0 %772, %v658
  %v774 = vpop.permute.xlu0 %773
  %777 = vset.pattern.permute.xlu0 0
  %778 = vperm.xlu0 %777, %v660
  %v779 = vpop.permute.xlu0 %778
  %782 = vset.pattern.permute.xlu0 0
  %783 = vperm.xlu0 %782, %v662
  %v784 = vpop.permute.xlu0 %783
  %787 = vset.pattern.permute.xlu0 0
  %788 = vperm.xlu0 %787, %v664
  %v789 = vpop.permute.xlu0 %788
  %792 = vset.pattern.permute.xlu0 0
  %793 = vperm.xlu0 %792, %v666
  %v794 = vpop.permute.xlu0 %793
  %797 = vset.pattern.permute.xlu0 0
  %798 = vperm.xlu0 %797, %v668
  %v799 = vpop.permute.xlu0 %798
  %802 = vset.pattern.permute.xlu0 0
  %803 = vperm.xlu0 %802, %v670
  %v804 = vpop.permute.xlu0 %803
  %807 = vset.pattern.permute.xlu0 0
  %808 = vperm.xlu0 %807, %v672
  %v809 = vpop.permute.xlu0 %808
  %812 = vset.pattern.permute.xlu0 0
  %813 = vperm.xlu0 %812, %v674
  %v814 = vpop.permute.xlu0 %813
  %817 = vset.pattern.permute.xlu0 0
  %818 = vperm.xlu0 %817, %v676
  %v819 = vpop.permute.xlu0 %818
  %822 = vset.pattern.permute.xlu0 0
  %823 = vperm.xlu0 %822, %v678
  %v824 = vpop.permute.xlu0 %823
  %827 = vset.pattern.permute.xlu0 0
  %828 = vperm.xlu0 %827, %v680
  %v829 = vpop.permute.xlu0 %828
  %832 = vset.pattern.permute.xlu0 0
  %833 = vperm.xlu0 %832, %v682
  %v834 = vpop.permute.xlu0 %833
  %837 = vset.pattern.permute.xlu0 0
  %838 = vperm.xlu0 %837, %v684
  %v839 = vpop.permute.xlu0 %838
  %842 = vset.pattern.permute.xlu0 0
  %843 = vperm.xlu0 %842, %v686
  %v844 = vpop.permute.xlu0 %843
  %847 = vset.pattern.permute.xlu0 0
  %848 = vperm.xlu0 %847, %v688
  %v849 = vpop.permute.xlu0 %848
  %v852 = vlaneseq
  %v853 = vshrl.u32 %v852, 7
  %v854 = vsub.s32 0, %v853
  %v855 = vrot.slane %v690, %v854
  %v857 = vmul.f32 %v694, %v855
  %v858 = vmul.f32 %v699, %v855
  %v859 = vmul.f32 %v704, %v855
  %v860 = vmul.f32 %v709, %v855
  %v861 = vmul.f32 %v714, %v855
  %v862 = vmul.f32 %v719, %v855
  %v863 = vmul.f32 %v724, %v855
  %v864 = vmul.f32 %v729, %v855
  %v865 = vmul.f32 %v734, %v855
  %v866 = vmul.f32 %v739, %v855
  %v867 = vmul.f32 %v744, %v855
  %v868 = vmul.f32 %v749, %v855
  %v869 = vmul.f32 %v754, %v855
  %v870 = vmul.f32 %v759, %v855
  %v871 = vmul.f32 %v764, %v855
  %v872 = vmul.f32 %v769, %v855
  %v873 = vmul.f32 %v774, %v855
  %v874 = vmul.f32 %v779, %v855
  %v875 = vmul.f32 %v784, %v855
  %v876 = vmul.f32 %v789, %v855
  %v877 = vmul.f32 %v794, %v855
  %v878 = vmul.f32 %v799, %v855
  %v879 = vmul.f32 %v804, %v855
  %v880 = vmul.f32 %v809, %v855
  %v881 = vmul.f32 %v814, %v855
  %v882 = vmul.f32 %v819, %v855
  %v883 = vmul.f32 %v824, %v855
  %v884 = vmul.f32 %v829, %v855
  %v885 = vmul.f32 %v834, %v855
  %v886 = vmul.f32 %v839, %v855
  %v887 = vmul.f32 %v844, %v855
  %v888 = vmul.f32 %v849, %v855
  %v889 = vadd.f32 %v593, %v857
  %v890 = vadd.f32 %v594, %v858
  %v891 = vadd.f32 %v595, %v859
  %v892 = vadd.f32 %v596, %v860
  %v893 = vadd.f32 %v597, %v861
  %v894 = vadd.f32 %v598, %v862
  %v895 = vadd.f32 %v599, %v863
  %v896 = vadd.f32 %v600, %v864
  %v897 = vadd.f32 %v601, %v865
  %v898 = vadd.f32 %v602, %v866
  %v899 = vadd.f32 %v603, %v867
  %v900 = vadd.f32 %v604, %v868
  %v901 = vadd.f32 %v605, %v869
  %v902 = vadd.f32 %v606, %v870
  %v903 = vadd.f32 %v607, %v871
  %v904 = vadd.f32 %v608, %v872
  %v905 = vadd.f32 %v609, %v873
  %v906 = vadd.f32 %v610, %v874
  %v907 = vadd.f32 %v611, %v875
  %v908 = vadd.f32 %v612, %v876
  %v909 = vadd.f32 %v613, %v877
  %v910 = vadd.f32 %v614, %v878
  %v911 = vadd.f32 %v615, %v879
  %v912 = vadd.f32 %v616, %v880
  %v913 = vadd.f32 %v617, %v881
  %v914 = vadd.f32 %v618, %v882
  %v915 = vadd.f32 %v619, %v883
  %v916 = vadd.f32 %v620, %v884
  %v917 = vadd.f32 %v621, %v885
  %v918 = vadd.f32 %v622, %v886
  %v919 = vadd.f32 %v623, %v887
  %v920 = vadd.f32 %v624, %v888
  %s921 = scalar_lea.vmem %s0, 24
  %v922 = vld [vmem:[%s921] ss:$2 sm:$0xff]
  %s923 = scalar_lea.vmem %s921, 48
  %v924 = vld [vmem:[%s923] ss:$2 sm:$0xff]
  %s925 = scalar_lea.vmem %s921, 96
  %v926 = vld [vmem:[%s925] ss:$2 sm:$0xff]
  %s927 = scalar_lea.vmem %s921, 144
  %v928 = vld [vmem:[%s927] ss:$2 sm:$0xff]
  %s929 = scalar_lea.vmem %s921, 192
  %v930 = vld [vmem:[%s929] ss:$2 sm:$0xff]
  %s931 = scalar_lea.vmem %s921, 240
  %v932 = vld [vmem:[%s931] ss:$2 sm:$0xff]
  %s933 = scalar_lea.vmem %s921, 288
  %v934 = vld [vmem:[%s933] ss:$2 sm:$0xff]
  %s935 = scalar_lea.vmem %s921, 336
  %v936 = vld [vmem:[%s935] ss:$2 sm:$0xff]
  %s937 = scalar_lea.vmem %s921, 432
  %v938 = vld [vmem:[%s937] ss:$2 sm:$0xff]
  %s939 = scalar_lea.vmem %s921, 480
  %v940 = vld [vmem:[%s939] ss:$2 sm:$0xff]
  %s941 = scalar_lea.vmem %s921, 528
  %v942 = vld [vmem:[%s941] ss:$2 sm:$0xff]
  %s943 = scalar_lea.vmem %s921, 576
  %v944 = vld [vmem:[%s943] ss:$2 sm:$0xff]
  %s945 = scalar_lea.vmem %s921, 624
  %v946 = vld [vmem:[%s945] ss:$2 sm:$0xff]
  %s947 = scalar_lea.vmem %s921, 672
  %v948 = vld [vmem:[%s947] ss:$2 sm:$0xff]
  %s949 = scalar_lea.vmem %s921, 720
  %v950 = vld [vmem:[%s949] ss:$2 sm:$0xff]
  %s951 = scalar_lea.vmem %s921, 768
  %v952 = vld [vmem:[%s951] ss:$2 sm:$0xff]
  %s953 = scalar_lea.vmem %s921, 864
  %v954 = vld [vmem:[%s953] ss:$2 sm:$0xff]
  %s955 = scalar_lea.vmem %s921, 912
  %v956 = vld [vmem:[%s955] ss:$2 sm:$0xff]
  %s957 = scalar_lea.vmem %s921, 960
  %v958 = vld [vmem:[%s957] ss:$2 sm:$0xff]
  %s959 = scalar_lea.vmem %s921, 1008
  %v960 = vld [vmem:[%s959] ss:$2 sm:$0xff]
  %s961 = scalar_lea.vmem %s921, 1056
  %v962 = vld [vmem:[%s961] ss:$2 sm:$0xff]
  %s963 = scalar_lea.vmem %s921, 1104
  %v964 = vld [vmem:[%s963] ss:$2 sm:$0xff]
  %s965 = scalar_lea.vmem %s921, 1152
  %v966 = vld [vmem:[%s965] ss:$2 sm:$0xff]
  %s967 = scalar_lea.vmem %s921, 1200
  %v968 = vld [vmem:[%s967] ss:$2 sm:$0xff]
  %s969 = scalar_lea.vmem %s921, 1296
  %v970 = vld [vmem:[%s969] ss:$2 sm:$0xff]
  %s971 = scalar_lea.vmem %s921, 1344
  %v972 = vld [vmem:[%s971] ss:$2 sm:$0xff]
  %s973 = scalar_lea.vmem %s921, 1392
  %v974 = vld [vmem:[%s973] ss:$2 sm:$0xff]
  %s975 = scalar_lea.vmem %s921, 1440
  %v976 = vld [vmem:[%s975] ss:$2 sm:$0xff]
  %s977 = scalar_lea.vmem %s921, 1488
  %v978 = vld [vmem:[%s977] ss:$2 sm:$0xff]
  %s979 = scalar_lea.vmem %s921, 1536
  %v980 = vld [vmem:[%s979] ss:$2 sm:$0xff]
  %s981 = scalar_lea.vmem %s921, 1584
  %v982 = vld [vmem:[%s981] ss:$2 sm:$0xff]
  %s983 = scalar_lea.vmem %s921, 1632
  %v984 = vld [vmem:[%s983] ss:$2 sm:$0xff]
  %s985 = scalar_lea.vmem %s1, 3
  %v986 = vld [vmem:[%s985] sm:$0x1]
  %988 = vset.pattern.permute.xlu0 0
  %989 = vperm.xlu0 %988, %v922
  %v990 = vpop.permute.xlu0 %989
  %993 = vset.pattern.permute.xlu0 0
  %994 = vperm.xlu0 %993, %v924
  %v995 = vpop.permute.xlu0 %994
  %998 = vset.pattern.permute.xlu0 0
  %999 = vperm.xlu0 %998, %v926
  %v1000 = vpop.permute.xlu0 %999
  %1003 = vset.pattern.permute.xlu0 0
  %1004 = vperm.xlu0 %1003, %v928
  %v1005 = vpop.permute.xlu0 %1004
  %1008 = vset.pattern.permute.xlu0 0
  %1009 = vperm.xlu0 %1008, %v930
  %v1010 = vpop.permute.xlu0 %1009
  %1013 = vset.pattern.permute.xlu0 0
  %1014 = vperm.xlu0 %1013, %v932
  %v1015 = vpop.permute.xlu0 %1014
  %1018 = vset.pattern.permute.xlu0 0
  %1019 = vperm.xlu0 %1018, %v934
  %v1020 = vpop.permute.xlu0 %1019
  %1023 = vset.pattern.permute.xlu0 0
  %1024 = vperm.xlu0 %1023, %v936
  %v1025 = vpop.permute.xlu0 %1024
  %1028 = vset.pattern.permute.xlu0 0
  %1029 = vperm.xlu0 %1028, %v938
  %v1030 = vpop.permute.xlu0 %1029
  %1033 = vset.pattern.permute.xlu0 0
  %1034 = vperm.xlu0 %1033, %v940
  %v1035 = vpop.permute.xlu0 %1034
  %1038 = vset.pattern.permute.xlu0 0
  %1039 = vperm.xlu0 %1038, %v942
  %v1040 = vpop.permute.xlu0 %1039
  %1043 = vset.pattern.permute.xlu0 0
  %1044 = vperm.xlu0 %1043, %v944
  %v1045 = vpop.permute.xlu0 %1044
  %1048 = vset.pattern.permute.xlu0 0
  %1049 = vperm.xlu0 %1048, %v946
  %v1050 = vpop.permute.xlu0 %1049
  %1053 = vset.pattern.permute.xlu0 0
  %1054 = vperm.xlu0 %1053, %v948
  %v1055 = vpop.permute.xlu0 %1054
  %1058 = vset.pattern.permute.xlu0 0
  %1059 = vperm.xlu0 %1058, %v950
  %v1060 = vpop.permute.xlu0 %1059
  %1063 = vset.pattern.permute.xlu0 0
  %1064 = vperm.xlu0 %1063, %v952
  %v1065 = vpop.permute.xlu0 %1064
  %1068 = vset.pattern.permute.xlu0 0
  %1069 = vperm.xlu0 %1068, %v954
  %v1070 = vpop.permute.xlu0 %1069
  %1073 = vset.pattern.permute.xlu0 0
  %1074 = vperm.xlu0 %1073, %v956
  %v1075 = vpop.permute.xlu0 %1074
  %1078 = vset.pattern.permute.xlu0 0
  %1079 = vperm.xlu0 %1078, %v958
  %v1080 = vpop.permute.xlu0 %1079
  %1083 = vset.pattern.permute.xlu0 0
  %1084 = vperm.xlu0 %1083, %v960
  %v1085 = vpop.permute.xlu0 %1084
  %1088 = vset.pattern.permute.xlu0 0
  %1089 = vperm.xlu0 %1088, %v962
  %v1090 = vpop.permute.xlu0 %1089
  %1093 = vset.pattern.permute.xlu0 0
  %1094 = vperm.xlu0 %1093, %v964
  %v1095 = vpop.permute.xlu0 %1094
  %1098 = vset.pattern.permute.xlu0 0
  %1099 = vperm.xlu0 %1098, %v966
  %v1100 = vpop.permute.xlu0 %1099
  %1103 = vset.pattern.permute.xlu0 0
  %1104 = vperm.xlu0 %1103, %v968
  %v1105 = vpop.permute.xlu0 %1104
  %1108 = vset.pattern.permute.xlu0 0
  %1109 = vperm.xlu0 %1108, %v970
  %v1110 = vpop.permute.xlu0 %1109
  %1113 = vset.pattern.permute.xlu0 0
  %1114 = vperm.xlu0 %1113, %v972
  %v1115 = vpop.permute.xlu0 %1114
  %1118 = vset.pattern.permute.xlu0 0
  %1119 = vperm.xlu0 %1118, %v974
  %v1120 = vpop.permute.xlu0 %1119
  %1123 = vset.pattern.permute.xlu0 0
  %1124 = vperm.xlu0 %1123, %v976
  %v1125 = vpop.permute.xlu0 %1124
  %1128 = vset.pattern.permute.xlu0 0
  %1129 = vperm.xlu0 %1128, %v978
  %v1130 = vpop.permute.xlu0 %1129
  %1133 = vset.pattern.permute.xlu0 0
  %1134 = vperm.xlu0 %1133, %v980
  %v1135 = vpop.permute.xlu0 %1134
  %1138 = vset.pattern.permute.xlu0 0
  %1139 = vperm.xlu0 %1138, %v982
  %v1140 = vpop.permute.xlu0 %1139
  %1143 = vset.pattern.permute.xlu0 0
  %1144 = vperm.xlu0 %1143, %v984
  %v1145 = vpop.permute.xlu0 %1144
  %v1148 = vlaneseq
  %v1149 = vshrl.u32 %v1148, 7
  %v1150 = vsub.s32 0, %v1149
  %v1151 = vrot.slane %v986, %v1150
  %v1153 = vmul.f32 %v990, %v1151
  %v1154 = vmul.f32 %v995, %v1151
  %v1155 = vmul.f32 %v1000, %v1151
  %v1156 = vmul.f32 %v1005, %v1151
  %v1157 = vmul.f32 %v1010, %v1151
  %v1158 = vmul.f32 %v1015, %v1151
  %v1159 = vmul.f32 %v1020, %v1151
  %v1160 = vmul.f32 %v1025, %v1151
  %v1161 = vmul.f32 %v1030, %v1151
  %v1162 = vmul.f32 %v1035, %v1151
  %v1163 = vmul.f32 %v1040, %v1151
  %v1164 = vmul.f32 %v1045, %v1151
  %v1165 = vmul.f32 %v1050, %v1151
  %v1166 = vmul.f32 %v1055, %v1151
  %v1167 = vmul.f32 %v1060, %v1151
  %v1168 = vmul.f32 %v1065, %v1151
  %v1169 = vmul.f32 %v1070, %v1151
  %v1170 = vmul.f32 %v1075, %v1151
  %v1171 = vmul.f32 %v1080, %v1151
  %v1172 = vmul.f32 %v1085, %v1151
  %v1173 = vmul.f32 %v1090, %v1151
  %v1174 = vmul.f32 %v1095, %v1151
  %v1175 = vmul.f32 %v1100, %v1151
  %v1176 = vmul.f32 %v1105, %v1151
  %v1177 = vmul.f32 %v1110, %v1151
  %v1178 = vmul.f32 %v1115, %v1151
  %v1179 = vmul.f32 %v1120, %v1151
  %v1180 = vmul.f32 %v1125, %v1151
  %v1181 = vmul.f32 %v1130, %v1151
  %v1182 = vmul.f32 %v1135, %v1151
  %v1183 = vmul.f32 %v1140, %v1151
  %v1184 = vmul.f32 %v1145, %v1151
  %v1185 = vadd.f32 %v889, %v1153
  %v1186 = vadd.f32 %v890, %v1154
  %v1187 = vadd.f32 %v891, %v1155
  %v1188 = vadd.f32 %v892, %v1156
  %v1189 = vadd.f32 %v893, %v1157
  %v1190 = vadd.f32 %v894, %v1158
  %v1191 = vadd.f32 %v895, %v1159
  %v1192 = vadd.f32 %v896, %v1160
  %v1193 = vadd.f32 %v897, %v1161
  %v1194 = vadd.f32 %v898, %v1162
  %v1195 = vadd.f32 %v899, %v1163
  %v1196 = vadd.f32 %v900, %v1164
  %v1197 = vadd.f32 %v901, %v1165
  %v1198 = vadd.f32 %v902, %v1166
  %v1199 = vadd.f32 %v903, %v1167
  %v1200 = vadd.f32 %v904, %v1168
  %v1201 = vadd.f32 %v905, %v1169
  %v1202 = vadd.f32 %v906, %v1170
  %v1203 = vadd.f32 %v907, %v1171
  %v1204 = vadd.f32 %v908, %v1172
  %v1205 = vadd.f32 %v909, %v1173
  %v1206 = vadd.f32 %v910, %v1174
  %v1207 = vadd.f32 %v911, %v1175
  %v1208 = vadd.f32 %v912, %v1176
  %v1209 = vadd.f32 %v913, %v1177
  %v1210 = vadd.f32 %v914, %v1178
  %v1211 = vadd.f32 %v915, %v1179
  %v1212 = vadd.f32 %v916, %v1180
  %v1213 = vadd.f32 %v917, %v1181
  %v1214 = vadd.f32 %v918, %v1182
  %v1215 = vadd.f32 %v919, %v1183
  %v1216 = vadd.f32 %v920, %v1184
  %s1217 = scalar_lea.vmem %s921, 1
  %v1218 = vld [vmem:[%s1217] ss:$2 sm:$0xff]
  %s1219 = scalar_lea.vmem %s921, 49
  %v1220 = vld [vmem:[%s1219] ss:$2 sm:$0xff]
  %s1221 = scalar_lea.vmem %s921, 97
  %v1222 = vld [vmem:[%s1221] ss:$2 sm:$0xff]
  %s1223 = scalar_lea.vmem %s921, 145
  %v1224 = vld [vmem:[%s1223] ss:$2 sm:$0xff]
  %s1225 = scalar_lea.vmem %s921, 193
  %v1226 = vld [vmem:[%s1225] ss:$2 sm:$0xff]
  %s1227 = scalar_lea.vmem %s921, 241
  %v1228 = vld [vmem:[%s1227] ss:$2 sm:$0xff]
  %s1229 = scalar_lea.vmem %s921, 289
  %v1230 = vld [vmem:[%s1229] ss:$2 sm:$0xff]
  %s1231 = scalar_lea.vmem %s921, 337
  %v1232 = vld [vmem:[%s1231] ss:$2 sm:$0xff]
  %s1233 = scalar_lea.vmem %s921, 433
  %v1234 = vld [vmem:[%s1233] ss:$2 sm:$0xff]
  %s1235 = scalar_lea.vmem %s921, 481
  %v1236 = vld [vmem:[%s1235] ss:$2 sm:$0xff]
  %s1237 = scalar_lea.vmem %s921, 529
  %v1238 = vld [vmem:[%s1237] ss:$2 sm:$0xff]
  %s1239 = scalar_lea.vmem %s921, 577
  %v1240 = vld [vmem:[%s1239] ss:$2 sm:$0xff]
  %s1241 = scalar_lea.vmem %s921, 625
  %v1242 = vld [vmem:[%s1241] ss:$2 sm:$0xff]
  %s1243 = scalar_lea.vmem %s921, 673
  %v1244 = vld [vmem:[%s1243] ss:$2 sm:$0xff]
  %s1245 = scalar_lea.vmem %s921, 721
  %v1246 = vld [vmem:[%s1245] ss:$2 sm:$0xff]
  %s1247 = scalar_lea.vmem %s921, 769
  %v1248 = vld [vmem:[%s1247] ss:$2 sm:$0xff]
  %s1249 = scalar_lea.vmem %s921, 865
  %v1250 = vld [vmem:[%s1249] ss:$2 sm:$0xff]
  %s1251 = scalar_lea.vmem %s921, 913
  %v1252 = vld [vmem:[%s1251] ss:$2 sm:$0xff]
  %s1253 = scalar_lea.vmem %s921, 961
  %v1254 = vld [vmem:[%s1253] ss:$2 sm:$0xff]
  %s1255 = scalar_lea.vmem %s921, 1009
  %v1256 = vld [vmem:[%s1255] ss:$2 sm:$0xff]
  %s1257 = scalar_lea.vmem %s921, 1057
  %v1258 = vld [vmem:[%s1257] ss:$2 sm:$0xff]
  %s1259 = scalar_lea.vmem %s921, 1105
  %v1260 = vld [vmem:[%s1259] ss:$2 sm:$0xff]
  %s1261 = scalar_lea.vmem %s921, 1153
  %v1262 = vld [vmem:[%s1261] ss:$2 sm:$0xff]
  %s1263 = scalar_lea.vmem %s921, 1201
  %v1264 = vld [vmem:[%s1263] ss:$2 sm:$0xff]
  %s1265 = scalar_lea.vmem %s921, 1297
  %v1266 = vld [vmem:[%s1265] ss:$2 sm:$0xff]
  %s1267 = scalar_lea.vmem %s921, 1345
  %v1268 = vld [vmem:[%s1267] ss:$2 sm:$0xff]
  %s1269 = scalar_lea.vmem %s921, 1393
  %v1270 = vld [vmem:[%s1269] ss:$2 sm:$0xff]
  %s1271 = scalar_lea.vmem %s921, 1441
  %v1272 = vld [vmem:[%s1271] ss:$2 sm:$0xff]
  %s1273 = scalar_lea.vmem %s921, 1489
  %v1274 = vld [vmem:[%s1273] ss:$2 sm:$0xff]
  %s1275 = scalar_lea.vmem %s921, 1537
  %v1276 = vld [vmem:[%s1275] ss:$2 sm:$0xff]
  %s1277 = scalar_lea.vmem %s921, 1585
  %v1278 = vld [vmem:[%s1277] ss:$2 sm:$0xff]
  %s1279 = scalar_lea.vmem %s921, 1633
  %v1280 = vld [vmem:[%s1279] ss:$2 sm:$0xff]
  %s1281 = scalar_lea.vmem %s1, 4
  %v1282 = vld [vmem:[%s1281] sm:$0x1]
  %1284 = vset.pattern.permute.xlu0 0
  %1285 = vperm.xlu0 %1284, %v1218
  %v1286 = vpop.permute.xlu0 %1285
  %1289 = vset.pattern.permute.xlu0 0
  %1290 = vperm.xlu0 %1289, %v1220
  %v1291 = vpop.permute.xlu0 %1290
  %1294 = vset.pattern.permute.xlu0 0
  %1295 = vperm.xlu0 %1294, %v1222
  %v1296 = vpop.permute.xlu0 %1295
  %1299 = vset.pattern.permute.xlu0 0
  %1300 = vperm.xlu0 %1299, %v1224
  %v1301 = vpop.permute.xlu0 %1300
  %1304 = vset.pattern.permute.xlu0 0
  %1305 = vperm.xlu0 %1304, %v1226
  %v1306 = vpop.permute.xlu0 %1305
  %1309 = vset.pattern.permute.xlu0 0
  %1310 = vperm.xlu0 %1309, %v1228
  %v1311 = vpop.permute.xlu0 %1310
  %1314 = vset.pattern.permute.xlu0 0
  %1315 = vperm.xlu0 %1314, %v1230
  %v1316 = vpop.permute.xlu0 %1315
  %1319 = vset.pattern.permute.xlu0 0
  %1320 = vperm.xlu0 %1319, %v1232
  %v1321 = vpop.permute.xlu0 %1320
  %1324 = vset.pattern.permute.xlu0 0
  %1325 = vperm.xlu0 %1324, %v1234
  %v1326 = vpop.permute.xlu0 %1325
  %1329 = vset.pattern.permute.xlu0 0
  %1330 = vperm.xlu0 %1329, %v1236
  %v1331 = vpop.permute.xlu0 %1330
  %1334 = vset.pattern.permute.xlu0 0
  %1335 = vperm.xlu0 %1334, %v1238
  %v1336 = vpop.permute.xlu0 %1335
  %1339 = vset.pattern.permute.xlu0 0
  %1340 = vperm.xlu0 %1339, %v1240
  %v1341 = vpop.permute.xlu0 %1340
  %1344 = vset.pattern.permute.xlu0 0
  %1345 = vperm.xlu0 %1344, %v1242
  %v1346 = vpop.permute.xlu0 %1345
  %1349 = vset.pattern.permute.xlu0 0
  %1350 = vperm.xlu0 %1349, %v1244
  %v1351 = vpop.permute.xlu0 %1350
  %1354 = vset.pattern.permute.xlu0 0
  %1355 = vperm.xlu0 %1354, %v1246
  %v1356 = vpop.permute.xlu0 %1355
  %1359 = vset.pattern.permute.xlu0 0
  %1360 = vperm.xlu0 %1359, %v1248
  %v1361 = vpop.permute.xlu0 %1360
  %1364 = vset.pattern.permute.xlu0 0
  %1365 = vperm.xlu0 %1364, %v1250
  %v1366 = vpop.permute.xlu0 %1365
  %1369 = vset.pattern.permute.xlu0 0
  %1370 = vperm.xlu0 %1369, %v1252
  %v1371 = vpop.permute.xlu0 %1370
  %1374 = vset.pattern.permute.xlu0 0
  %1375 = vperm.xlu0 %1374, %v1254
  %v1376 = vpop.permute.xlu0 %1375
  %1379 = vset.pattern.permute.xlu0 0
  %1380 = vperm.xlu0 %1379, %v1256
  %v1381 = vpop.permute.xlu0 %1380
  %1384 = vset.pattern.permute.xlu0 0
  %1385 = vperm.xlu0 %1384, %v1258
  %v1386 = vpop.permute.xlu0 %1385
  %1389 = vset.pattern.permute.xlu0 0
  %1390 = vperm.xlu0 %1389, %v1260
  %v1391 = vpop.permute.xlu0 %1390
  %1394 = vset.pattern.permute.xlu0 0
  %1395 = vperm.xlu0 %1394, %v1262
  %v1396 = vpop.permute.xlu0 %1395
  %1399 = vset.pattern.permute.xlu0 0
  %1400 = vperm.xlu0 %1399, %v1264
  %v1401 = vpop.permute.xlu0 %1400
  %1404 = vset.pattern.permute.xlu0 0
  %1405 = vperm.xlu0 %1404, %v1266
  %v1406 = vpop.permute.xlu0 %1405
  %1409 = vset.pattern.permute.xlu0 0
  %1410 = vperm.xlu0 %1409, %v1268
  %v1411 = vpop.permute.xlu0 %1410
  %1414 = vset.pattern.permute.xlu0 0
  %1415 = vperm.xlu0 %1414, %v1270
  %v1416 = vpop.permute.xlu0 %1415
  %1419 = vset.pattern.permute.xlu0 0
  %1420 = vperm.xlu0 %1419, %v1272
  %v1421 = vpop.permute.xlu0 %1420
  %1424 = vset.pattern.permute.xlu0 0
  %1425 = vperm.xlu0 %1424, %v1274
  %v1426 = vpop.permute.xlu0 %1425
  %1429 = vset.pattern.permute.xlu0 0
  %1430 = vperm.xlu0 %1429, %v1276
  %v1431 = vpop.permute.xlu0 %1430
  %1434 = vset.pattern.permute.xlu0 0
  %1435 = vperm.xlu0 %1434, %v1278
  %v1436 = vpop.permute.xlu0 %1435
  %1439 = vset.pattern.permute.xlu0 0
  %1440 = vperm.xlu0 %1439, %v1280
  %v1441 = vpop.permute.xlu0 %1440
  %v1444 = vlaneseq
  %v1445 = vshrl.u32 %v1444, 7
  %v1446 = vsub.s32 0, %v1445
  %v1447 = vrot.slane %v1282, %v1446
  %v1449 = vmul.f32 %v1286, %v1447
  %v1450 = vmul.f32 %v1291, %v1447
  %v1451 = vmul.f32 %v1296, %v1447
  %v1452 = vmul.f32 %v1301, %v1447
  %v1453 = vmul.f32 %v1306, %v1447
  %v1454 = vmul.f32 %v1311, %v1447
  %v1455 = vmul.f32 %v1316, %v1447
  %v1456 = vmul.f32 %v1321, %v1447
  %v1457 = vmul.f32 %v1326, %v1447
  %v1458 = vmul.f32 %v1331, %v1447
  %v1459 = vmul.f32 %v1336, %v1447
  %v1460 = vmul.f32 %v1341, %v1447
  %v1461 = vmul.f32 %v1346, %v1447
  %v1462 = vmul.f32 %v1351, %v1447
  %v1463 = vmul.f32 %v1356, %v1447
  %v1464 = vmul.f32 %v1361, %v1447
  %v1465 = vmul.f32 %v1366, %v1447
  %v1466 = vmul.f32 %v1371, %v1447
  %v1467 = vmul.f32 %v1376, %v1447
  %v1468 = vmul.f32 %v1381, %v1447
  %v1469 = vmul.f32 %v1386, %v1447
  %v1470 = vmul.f32 %v1391, %v1447
  %v1471 = vmul.f32 %v1396, %v1447
  %v1472 = vmul.f32 %v1401, %v1447
  %v1473 = vmul.f32 %v1406, %v1447
  %v1474 = vmul.f32 %v1411, %v1447
  %v1475 = vmul.f32 %v1416, %v1447
  %v1476 = vmul.f32 %v1421, %v1447
  %v1477 = vmul.f32 %v1426, %v1447
  %v1478 = vmul.f32 %v1431, %v1447
  %v1479 = vmul.f32 %v1436, %v1447
  %v1480 = vmul.f32 %v1441, %v1447
  %v1481 = vadd.f32 %v1185, %v1449
  %v1482 = vadd.f32 %v1186, %v1450
  %v1483 = vadd.f32 %v1187, %v1451
  %v1484 = vadd.f32 %v1188, %v1452
  %v1485 = vadd.f32 %v1189, %v1453
  %v1486 = vadd.f32 %v1190, %v1454
  %v1487 = vadd.f32 %v1191, %v1455
  %v1488 = vadd.f32 %v1192, %v1456
  %v1489 = vadd.f32 %v1193, %v1457
  %v1490 = vadd.f32 %v1194, %v1458
  %v1491 = vadd.f32 %v1195, %v1459
  %v1492 = vadd.f32 %v1196, %v1460
  %v1493 = vadd.f32 %v1197, %v1461
  %v1494 = vadd.f32 %v1198, %v1462
  %v1495 = vadd.f32 %v1199, %v1463
  %v1496 = vadd.f32 %v1200, %v1464
  %v1497 = vadd.f32 %v1201, %v1465
  %v1498 = vadd.f32 %v1202, %v1466
  %v1499 = vadd.f32 %v1203, %v1467
  %v1500 = vadd.f32 %v1204, %v1468
  %v1501 = vadd.f32 %v1205, %v1469
  %v1502 = vadd.f32 %v1206, %v1470
  %v1503 = vadd.f32 %v1207, %v1471
  %v1504 = vadd.f32 %v1208, %v1472
  %v1505 = vadd.f32 %v1209, %v1473
  %v1506 = vadd.f32 %v1210, %v1474
  %v1507 = vadd.f32 %v1211, %v1475
  %v1508 = vadd.f32 %v1212, %v1476
  %v1509 = vadd.f32 %v1213, %v1477
  %v1510 = vadd.f32 %v1214, %v1478
  %v1511 = vadd.f32 %v1215, %v1479
  %v1512 = vadd.f32 %v1216, %v1480
  %s1513 = scalar_lea.vmem %s921, 2
  %v1514 = vld [vmem:[%s1513] ss:$2 sm:$0xff]
  %s1515 = scalar_lea.vmem %s921, 50
  %v1516 = vld [vmem:[%s1515] ss:$2 sm:$0xff]
  %s1517 = scalar_lea.vmem %s921, 98
  %v1518 = vld [vmem:[%s1517] ss:$2 sm:$0xff]
  %s1519 = scalar_lea.vmem %s921, 146
  %v1520 = vld [vmem:[%s1519] ss:$2 sm:$0xff]
  %s1521 = scalar_lea.vmem %s921, 194
  %v1522 = vld [vmem:[%s1521] ss:$2 sm:$0xff]
  %s1523 = scalar_lea.vmem %s921, 242
  %v1524 = vld [vmem:[%s1523] ss:$2 sm:$0xff]
  %s1525 = scalar_lea.vmem %s921, 290
  %v1526 = vld [vmem:[%s1525] ss:$2 sm:$0xff]
  %s1527 = scalar_lea.vmem %s921, 338
  %v1528 = vld [vmem:[%s1527] ss:$2 sm:$0xff]
  %s1529 = scalar_lea.vmem %s921, 434
  %v1530 = vld [vmem:[%s1529] ss:$2 sm:$0xff]
  %s1531 = scalar_lea.vmem %s921, 482
  %v1532 = vld [vmem:[%s1531] ss:$2 sm:$0xff]
  %s1533 = scalar_lea.vmem %s921, 530
  %v1534 = vld [vmem:[%s1533] ss:$2 sm:$0xff]
  %s1535 = scalar_lea.vmem %s921, 578
  %v1536 = vld [vmem:[%s1535] ss:$2 sm:$0xff]
  %s1537 = scalar_lea.vmem %s921, 626
  %v1538 = vld [vmem:[%s1537] ss:$2 sm:$0xff]
  %s1539 = scalar_lea.vmem %s921, 674
  %v1540 = vld [vmem:[%s1539] ss:$2 sm:$0xff]
  %s1541 = scalar_lea.vmem %s921, 722
  %v1542 = vld [vmem:[%s1541] ss:$2 sm:$0xff]
  %s1543 = scalar_lea.vmem %s921, 770
  %v1544 = vld [vmem:[%s1543] ss:$2 sm:$0xff]
  %s1545 = scalar_lea.vmem %s921, 866
  %v1546 = vld [vmem:[%s1545] ss:$2 sm:$0xff]
  %s1547 = scalar_lea.vmem %s921, 914
  %v1548 = vld [vmem:[%s1547] ss:$2 sm:$0xff]
  %s1549 = scalar_lea.vmem %s921, 962
  %v1550 = vld [vmem:[%s1549] ss:$2 sm:$0xff]
  %s1551 = scalar_lea.vmem %s921, 1010
  %v1552 = vld [vmem:[%s1551] ss:$2 sm:$0xff]
  %s1553 = scalar_lea.vmem %s921, 1058
  %v1554 = vld [vmem:[%s1553] ss:$2 sm:$0xff]
  %s1555 = scalar_lea.vmem %s921, 1106
  %v1556 = vld [vmem:[%s1555] ss:$2 sm:$0xff]
  %s1557 = scalar_lea.vmem %s921, 1154
  %v1558 = vld [vmem:[%s1557] ss:$2 sm:$0xff]
  %s1559 = scalar_lea.vmem %s921, 1202
  %v1560 = vld [vmem:[%s1559] ss:$2 sm:$0xff]
  %s1561 = scalar_lea.vmem %s921, 1298
  %v1562 = vld [vmem:[%s1561] ss:$2 sm:$0xff]
  %s1563 = scalar_lea.vmem %s921, 1346
  %v1564 = vld [vmem:[%s1563] ss:$2 sm:$0xff]
  %s1565 = scalar_lea.vmem %s921, 1394
  %v1566 = vld [vmem:[%s1565] ss:$2 sm:$0xff]
  %s1567 = scalar_lea.vmem %s921, 1442
  %v1568 = vld [vmem:[%s1567] ss:$2 sm:$0xff]
  %s1569 = scalar_lea.vmem %s921, 1490
  %v1570 = vld [vmem:[%s1569] ss:$2 sm:$0xff]
  %s1571 = scalar_lea.vmem %s921, 1538
  %v1572 = vld [vmem:[%s1571] ss:$2 sm:$0xff]
  %s1573 = scalar_lea.vmem %s921, 1586
  %v1574 = vld [vmem:[%s1573] ss:$2 sm:$0xff]
  %s1575 = scalar_lea.vmem %s921, 1634
  %v1576 = vld [vmem:[%s1575] ss:$2 sm:$0xff]
  %s1577 = scalar_lea.vmem %s1, 5
  %v1578 = vld [vmem:[%s1577] sm:$0x1]
  %1580 = vset.pattern.permute.xlu0 0
  %1581 = vperm.xlu0 %1580, %v1514
  %v1582 = vpop.permute.xlu0 %1581
  %1585 = vset.pattern.permute.xlu0 0
  %1586 = vperm.xlu0 %1585, %v1516
  %v1587 = vpop.permute.xlu0 %1586
  %1590 = vset.pattern.permute.xlu0 0
  %1591 = vperm.xlu0 %1590, %v1518
  %v1592 = vpop.permute.xlu0 %1591
  %1595 = vset.pattern.permute.xlu0 0
  %1596 = vperm.xlu0 %1595, %v1520
  %v1597 = vpop.permute.xlu0 %1596
  %1600 = vset.pattern.permute.xlu0 0
  %1601 = vperm.xlu0 %1600, %v1522
  %v1602 = vpop.permute.xlu0 %1601
  %1605 = vset.pattern.permute.xlu0 0
  %1606 = vperm.xlu0 %1605, %v1524
  %v1607 = vpop.permute.xlu0 %1606
  %1610 = vset.pattern.permute.xlu0 0
  %1611 = vperm.xlu0 %1610, %v1526
  %v1612 = vpop.permute.xlu0 %1611
  %1615 = vset.pattern.permute.xlu0 0
  %1616 = vperm.xlu0 %1615, %v1528
  %v1617 = vpop.permute.xlu0 %1616
  %1620 = vset.pattern.permute.xlu0 0
  %1621 = vperm.xlu0 %1620, %v1530
  %v1622 = vpop.permute.xlu0 %1621
  %1625 = vset.pattern.permute.xlu0 0
  %1626 = vperm.xlu0 %1625, %v1532
  %v1627 = vpop.permute.xlu0 %1626
  %1630 = vset.pattern.permute.xlu0 0
  %1631 = vperm.xlu0 %1630, %v1534
  %v1632 = vpop.permute.xlu0 %1631
  %1635 = vset.pattern.permute.xlu0 0
  %1636 = vperm.xlu0 %1635, %v1536
  %v1637 = vpop.permute.xlu0 %1636
  %1640 = vset.pattern.permute.xlu0 0
  %1641 = vperm.xlu0 %1640, %v1538
  %v1642 = vpop.permute.xlu0 %1641
  %1645 = vset.pattern.permute.xlu0 0
  %1646 = vperm.xlu0 %1645, %v1540
  %v1647 = vpop.permute.xlu0 %1646
  %1650 = vset.pattern.permute.xlu0 0
  %1651 = vperm.xlu0 %1650, %v1542
  %v1652 = vpop.permute.xlu0 %1651
  %1655 = vset.pattern.permute.xlu0 0
  %1656 = vperm.xlu0 %1655, %v1544
  %v1657 = vpop.permute.xlu0 %1656
  %1660 = vset.pattern.permute.xlu0 0
  %1661 = vperm.xlu0 %1660, %v1546
  %v1662 = vpop.permute.xlu0 %1661
  %1665 = vset.pattern.permute.xlu0 0
  %1666 = vperm.xlu0 %1665, %v1548
  %v1667 = vpop.permute.xlu0 %1666
  %1670 = vset.pattern.permute.xlu0 0
  %1671 = vperm.xlu0 %1670, %v1550
  %v1672 = vpop.permute.xlu0 %1671
  %1675 = vset.pattern.permute.xlu0 0
  %1676 = vperm.xlu0 %1675, %v1552
  %v1677 = vpop.permute.xlu0 %1676
  %1680 = vset.pattern.permute.xlu0 0
  %1681 = vperm.xlu0 %1680, %v1554
  %v1682 = vpop.permute.xlu0 %1681
  %1685 = vset.pattern.permute.xlu0 0
  %1686 = vperm.xlu0 %1685, %v1556
  %v1687 = vpop.permute.xlu0 %1686
  %1690 = vset.pattern.permute.xlu0 0
  %1691 = vperm.xlu0 %1690, %v1558
  %v1692 = vpop.permute.xlu0 %1691
  %1695 = vset.pattern.permute.xlu0 0
  %1696 = vperm.xlu0 %1695, %v1560
  %v1697 = vpop.permute.xlu0 %1696
  %1700 = vset.pattern.permute.xlu0 0
  %1701 = vperm.xlu0 %1700, %v1562
  %v1702 = vpop.permute.xlu0 %1701
  %1705 = vset.pattern.permute.xlu0 0
  %1706 = vperm.xlu0 %1705, %v1564
  %v1707 = vpop.permute.xlu0 %1706
  %1710 = vset.pattern.permute.xlu0 0
  %1711 = vperm.xlu0 %1710, %v1566
  %v1712 = vpop.permute.xlu0 %1711
  %1715 = vset.pattern.permute.xlu0 0
  %1716 = vperm.xlu0 %1715, %v1568
  %v1717 = vpop.permute.xlu0 %1716
  %1720 = vset.pattern.permute.xlu0 0
  %1721 = vperm.xlu0 %1720, %v1570
  %v1722 = vpop.permute.xlu0 %1721
  %1725 = vset.pattern.permute.xlu0 0
  %1726 = vperm.xlu0 %1725, %v1572
  %v1727 = vpop.permute.xlu0 %1726
  %1730 = vset.pattern.permute.xlu0 0
  %1731 = vperm.xlu0 %1730, %v1574
  %v1732 = vpop.permute.xlu0 %1731
  %1735 = vset.pattern.permute.xlu0 0
  %1736 = vperm.xlu0 %1735, %v1576
  %v1737 = vpop.permute.xlu0 %1736
  %v1740 = vlaneseq
  %v1741 = vshrl.u32 %v1740, 7
  %v1742 = vsub.s32 0, %v1741
  %v1743 = vrot.slane %v1578, %v1742
  %v1745 = vmul.f32 %v1582, %v1743
  %v1746 = vmul.f32 %v1587, %v1743
  %v1747 = vmul.f32 %v1592, %v1743
  %v1748 = vmul.f32 %v1597, %v1743
  %v1749 = vmul.f32 %v1602, %v1743
  %v1750 = vmul.f32 %v1607, %v1743
  %v1751 = vmul.f32 %v1612, %v1743
  %v1752 = vmul.f32 %v1617, %v1743
  %v1753 = vmul.f32 %v1622, %v1743
  %v1754 = vmul.f32 %v1627, %v1743
  %v1755 = vmul.f32 %v1632, %v1743
  %v1756 = vmul.f32 %v1637, %v1743
  %v1757 = vmul.f32 %v1642, %v1743
  %v1758 = vmul.f32 %v1647, %v1743
  %v1759 = vmul.f32 %v1652, %v1743
  %v1760 = vmul.f32 %v1657, %v1743
  %v1761 = vmul.f32 %v1662, %v1743
  %v1762 = vmul.f32 %v1667, %v1743
  %v1763 = vmul.f32 %v1672, %v1743
  %v1764 = vmul.f32 %v1677, %v1743
  %v1765 = vmul.f32 %v1682, %v1743
  %v1766 = vmul.f32 %v1687, %v1743
  %v1767 = vmul.f32 %v1692, %v1743
  %v1768 = vmul.f32 %v1697, %v1743
  %v1769 = vmul.f32 %v1702, %v1743
  %v1770 = vmul.f32 %v1707, %v1743
  %v1771 = vmul.f32 %v1712, %v1743
  %v1772 = vmul.f32 %v1717, %v1743
  %v1773 = vmul.f32 %v1722, %v1743
  %v1774 = vmul.f32 %v1727, %v1743
  %v1775 = vmul.f32 %v1732, %v1743
  %v1776 = vmul.f32 %v1737, %v1743
  %v1777 = vadd.f32 %v1481, %v1745
  %v1778 = vadd.f32 %v1482, %v1746
  %v1779 = vadd.f32 %v1483, %v1747
  %v1780 = vadd.f32 %v1484, %v1748
  %v1781 = vadd.f32 %v1485, %v1749
  %v1782 = vadd.f32 %v1486, %v1750
  %v1783 = vadd.f32 %v1487, %v1751
  %v1784 = vadd.f32 %v1488, %v1752
  %v1785 = vadd.f32 %v1489, %v1753
  %v1786 = vadd.f32 %v1490, %v1754
  %v1787 = vadd.f32 %v1491, %v1755
  %v1788 = vadd.f32 %v1492, %v1756
  %v1789 = vadd.f32 %v1493, %v1757
  %v1790 = vadd.f32 %v1494, %v1758
  %v1791 = vadd.f32 %v1495, %v1759
  %v1792 = vadd.f32 %v1496, %v1760
  %v1793 = vadd.f32 %v1497, %v1761
  %v1794 = vadd.f32 %v1498, %v1762
  %v1795 = vadd.f32 %v1499, %v1763
  %v1796 = vadd.f32 %v1500, %v1764
  %v1797 = vadd.f32 %v1501, %v1765
  %v1798 = vadd.f32 %v1502, %v1766
  %v1799 = vadd.f32 %v1503, %v1767
  %v1800 = vadd.f32 %v1504, %v1768
  %v1801 = vadd.f32 %v1505, %v1769
  %v1802 = vadd.f32 %v1506, %v1770
  %v1803 = vadd.f32 %v1507, %v1771
  %v1804 = vadd.f32 %v1508, %v1772
  %v1805 = vadd.f32 %v1509, %v1773
  %v1806 = vadd.f32 %v1510, %v1774
  %v1807 = vadd.f32 %v1511, %v1775
  %v1808 = vadd.f32 %v1512, %v1776
  %s1809 = scalar_lea.vmem %s0, 48
  %v1810 = vld [vmem:[%s1809] ss:$2 sm:$0xff]
  %s1811 = scalar_lea.vmem %s1809, 48
  %v1812 = vld [vmem:[%s1811] ss:$2 sm:$0xff]
  %s1813 = scalar_lea.vmem %s1809, 96
  %v1814 = vld [vmem:[%s1813] ss:$2 sm:$0xff]
  %s1815 = scalar_lea.vmem %s1809, 144
  %v1816 = vld [vmem:[%s1815] ss:$2 sm:$0xff]
  %s1817 = scalar_lea.vmem %s1809, 192
  %v1818 = vld [vmem:[%s1817] ss:$2 sm:$0xff]
  %s1819 = scalar_lea.vmem %s1809, 240
  %v1820 = vld [vmem:[%s1819] ss:$2 sm:$0xff]
  %s1821 = scalar_lea.vmem %s1809, 288
  %v1822 = vld [vmem:[%s1821] ss:$2 sm:$0xff]
  %s1823 = scalar_lea.vmem %s1809, 336
  %v1824 = vld [vmem:[%s1823] ss:$2 sm:$0xff]
  %s1825 = scalar_lea.vmem %s1809, 432
  %v1826 = vld [vmem:[%s1825] ss:$2 sm:$0xff]
  %s1827 = scalar_lea.vmem %s1809, 480
  %v1828 = vld [vmem:[%s1827] ss:$2 sm:$0xff]
  %s1829 = scalar_lea.vmem %s1809, 528
  %v1830 = vld [vmem:[%s1829] ss:$2 sm:$0xff]
  %s1831 = scalar_lea.vmem %s1809, 576
  %v1832 = vld [vmem:[%s1831] ss:$2 sm:$0xff]
  %s1833 = scalar_lea.vmem %s1809, 624
  %v1834 = vld [vmem:[%s1833] ss:$2 sm:$0xff]
  %s1835 = scalar_lea.vmem %s1809, 672
  %v1836 = vld [vmem:[%s1835] ss:$2 sm:$0xff]
  %s1837 = scalar_lea.vmem %s1809, 720
  %v1838 = vld [vmem:[%s1837] ss:$2 sm:$0xff]
  %s1839 = scalar_lea.vmem %s1809, 768
  %v1840 = vld [vmem:[%s1839] ss:$2 sm:$0xff]
  %s1841 = scalar_lea.vmem %s1809, 864
  %v1842 = vld [vmem:[%s1841] ss:$2 sm:$0xff]
  %s1843 = scalar_lea.vmem %s1809, 912
  %v1844 = vld [vmem:[%s1843] ss:$2 sm:$0xff]
  %s1845 = scalar_lea.vmem %s1809, 960
  %v1846 = vld [vmem:[%s1845] ss:$2 sm:$0xff]
  %s1847 = scalar_lea.vmem %s1809, 1008
  %v1848 = vld [vmem:[%s1847] ss:$2 sm:$0xff]
  %s1849 = scalar_lea.vmem %s1809, 1056
  %v1850 = vld [vmem:[%s1849] ss:$2 sm:$0xff]
  %s1851 = scalar_lea.vmem %s1809, 1104
  %v1852 = vld [vmem:[%s1851] ss:$2 sm:$0xff]
  %s1853 = scalar_lea.vmem %s1809, 1152
  %v1854 = vld [vmem:[%s1853] ss:$2 sm:$0xff]
  %s1855 = scalar_lea.vmem %s1809, 1200
  %v1856 = vld [vmem:[%s1855] ss:$2 sm:$0xff]
  %s1857 = scalar_lea.vmem %s1809, 1296
  %v1858 = vld [vmem:[%s1857] ss:$2 sm:$0xff]
  %s1859 = scalar_lea.vmem %s1809, 1344
  %v1860 = vld [vmem:[%s1859] ss:$2 sm:$0xff]
  %s1861 = scalar_lea.vmem %s1809, 1392
  %v1862 = vld [vmem:[%s1861] ss:$2 sm:$0xff]
  %s1863 = scalar_lea.vmem %s1809, 1440
  %v1864 = vld [vmem:[%s1863] ss:$2 sm:$0xff]
  %s1865 = scalar_lea.vmem %s1809, 1488
  %v1866 = vld [vmem:[%s1865] ss:$2 sm:$0xff]
  %s1867 = scalar_lea.vmem %s1809, 1536
  %v1868 = vld [vmem:[%s1867] ss:$2 sm:$0xff]
  %s1869 = scalar_lea.vmem %s1809, 1584
  %v1870 = vld [vmem:[%s1869] ss:$2 sm:$0xff]
  %s1871 = scalar_lea.vmem %s1809, 1632
  %v1872 = vld [vmem:[%s1871] ss:$2 sm:$0xff]
  %s1873 = scalar_lea.vmem %s1, 6
  %v1874 = vld [vmem:[%s1873] sm:$0x1]
  %1876 = vset.pattern.permute.xlu0 0
  %1877 = vperm.xlu0 %1876, %v1810
  %v1878 = vpop.permute.xlu0 %1877
  %1881 = vset.pattern.permute.xlu0 0
  %1882 = vperm.xlu0 %1881, %v1812
  %v1883 = vpop.permute.xlu0 %1882
  %1886 = vset.pattern.permute.xlu0 0
  %1887 = vperm.xlu0 %1886, %v1814
  %v1888 = vpop.permute.xlu0 %1887
  %1891 = vset.pattern.permute.xlu0 0
  %1892 = vperm.xlu0 %1891, %v1816
  %v1893 = vpop.permute.xlu0 %1892
  %1896 = vset.pattern.permute.xlu0 0
  %1897 = vperm.xlu0 %1896, %v1818
  %v1898 = vpop.permute.xlu0 %1897
  %1901 = vset.pattern.permute.xlu0 0
  %1902 = vperm.xlu0 %1901, %v1820
  %v1903 = vpop.permute.xlu0 %1902
  %1906 = vset.pattern.permute.xlu0 0
  %1907 = vperm.xlu0 %1906, %v1822
  %v1908 = vpop.permute.xlu0 %1907
  %1911 = vset.pattern.permute.xlu0 0
  %1912 = vperm.xlu0 %1911, %v1824
  %v1913 = vpop.permute.xlu0 %1912
  %1916 = vset.pattern.permute.xlu0 0
  %1917 = vperm.xlu0 %1916, %v1826
  %v1918 = vpop.permute.xlu0 %1917
  %1921 = vset.pattern.permute.xlu0 0
  %1922 = vperm.xlu0 %1921, %v1828
  %v1923 = vpop.permute.xlu0 %1922
  %1926 = vset.pattern.permute.xlu0 0
  %1927 = vperm.xlu0 %1926, %v1830
  %v1928 = vpop.permute.xlu0 %1927
  %1931 = vset.pattern.permute.xlu0 0
  %1932 = vperm.xlu0 %1931, %v1832
  %v1933 = vpop.permute.xlu0 %1932
  %1936 = vset.pattern.permute.xlu0 0
  %1937 = vperm.xlu0 %1936, %v1834
  %v1938 = vpop.permute.xlu0 %1937
  %1941 = vset.pattern.permute.xlu0 0
  %1942 = vperm.xlu0 %1941, %v1836
  %v1943 = vpop.permute.xlu0 %1942
  %1946 = vset.pattern.permute.xlu0 0
  %1947 = vperm.xlu0 %1946, %v1838
  %v1948 = vpop.permute.xlu0 %1947
  %1951 = vset.pattern.permute.xlu0 0
  %1952 = vperm.xlu0 %1951, %v1840
  %v1953 = vpop.permute.xlu0 %1952
  %1956 = vset.pattern.permute.xlu0 0
  %1957 = vperm.xlu0 %1956, %v1842
  %v1958 = vpop.permute.xlu0 %1957
  %1961 = vset.pattern.permute.xlu0 0
  %1962 = vperm.xlu0 %1961, %v1844
  %v1963 = vpop.permute.xlu0 %1962
  %1966 = vset.pattern.permute.xlu0 0
  %1967 = vperm.xlu0 %1966, %v1846
  %v1968 = vpop.permute.xlu0 %1967
  %1971 = vset.pattern.permute.xlu0 0
  %1972 = vperm.xlu0 %1971, %v1848
  %v1973 = vpop.permute.xlu0 %1972
  %1976 = vset.pattern.permute.xlu0 0
  %1977 = vperm.xlu0 %1976, %v1850
  %v1978 = vpop.permute.xlu0 %1977
  %1981 = vset.pattern.permute.xlu0 0
  %1982 = vperm.xlu0 %1981, %v1852
  %v1983 = vpop.permute.xlu0 %1982
  %1986 = vset.pattern.permute.xlu0 0
  %1987 = vperm.xlu0 %1986, %v1854
  %v1988 = vpop.permute.xlu0 %1987
  %1991 = vset.pattern.permute.xlu0 0
  %1992 = vperm.xlu0 %1991, %v1856
  %v1993 = vpop.permute.xlu0 %1992
  %1996 = vset.pattern.permute.xlu0 0
  %1997 = vperm.xlu0 %1996, %v1858
  %v1998 = vpop.permute.xlu0 %1997
  %2001 = vset.pattern.permute.xlu0 0
  %2002 = vperm.xlu0 %2001, %v1860
  %v2003 = vpop.permute.xlu0 %2002
  %2006 = vset.pattern.permute.xlu0 0
  %2007 = vperm.xlu0 %2006, %v1862
  %v2008 = vpop.permute.xlu0 %2007
  %2011 = vset.pattern.permute.xlu0 0
  %2012 = vperm.xlu0 %2011, %v1864
  %v2013 = vpop.permute.xlu0 %2012
  %2016 = vset.pattern.permute.xlu0 0
  %2017 = vperm.xlu0 %2016, %v1866
  %v2018 = vpop.permute.xlu0 %2017
  %2021 = vset.pattern.permute.xlu0 0
  %2022 = vperm.xlu0 %2021, %v1868
  %v2023 = vpop.permute.xlu0 %2022
  %2026 = vset.pattern.permute.xlu0 0
  %2027 = vperm.xlu0 %2026, %v1870
  %v2028 = vpop.permute.xlu0 %2027
  %2031 = vset.pattern.permute.xlu0 0
  %2032 = vperm.xlu0 %2031, %v1872
  %v2033 = vpop.permute.xlu0 %2032
  %v2036 = vlaneseq
  %v2037 = vshrl.u32 %v2036, 7
  %v2038 = vsub.s32 0, %v2037
  %v2039 = vrot.slane %v1874, %v2038
  %v2041 = vmul.f32 %v1878, %v2039
  %v2042 = vmul.f32 %v1883, %v2039
  %v2043 = vmul.f32 %v1888, %v2039
  %v2044 = vmul.f32 %v1893, %v2039
  %v2045 = vmul.f32 %v1898, %v2039
  %v2046 = vmul.f32 %v1903, %v2039
  %v2047 = vmul.f32 %v1908, %v2039
  %v2048 = vmul.f32 %v1913, %v2039
  %v2049 = vmul.f32 %v1918, %v2039
  %v2050 = vmul.f32 %v1923, %v2039
  %v2051 = vmul.f32 %v1928, %v2039
  %v2052 = vmul.f32 %v1933, %v2039
  %v2053 = vmul.f32 %v1938, %v2039
  %v2054 = vmul.f32 %v1943, %v2039
  %v2055 = vmul.f32 %v1948, %v2039
  %v2056 = vmul.f32 %v1953, %v2039
  %v2057 = vmul.f32 %v1958, %v2039
  %v2058 = vmul.f32 %v1963, %v2039
  %v2059 = vmul.f32 %v1968, %v2039
  %v2060 = vmul.f32 %v1973, %v2039
  %v2061 = vmul.f32 %v1978, %v2039
  %v2062 = vmul.f32 %v1983, %v2039
  %v2063 = vmul.f32 %v1988, %v2039
  %v2064 = vmul.f32 %v1993, %v2039
  %v2065 = vmul.f32 %v1998, %v2039
  %v2066 = vmul.f32 %v2003, %v2039
  %v2067 = vmul.f32 %v2008, %v2039
  %v2068 = vmul.f32 %v2013, %v2039
  %v2069 = vmul.f32 %v2018, %v2039
  %v2070 = vmul.f32 %v2023, %v2039
  %v2071 = vmul.f32 %v2028, %v2039
  %v2072 = vmul.f32 %v2033, %v2039
  %v2073 = vadd.f32 %v1777, %v2041
  %v2074 = vadd.f32 %v1778, %v2042
  %v2075 = vadd.f32 %v1779, %v2043
  %v2076 = vadd.f32 %v1780, %v2044
  %v2077 = vadd.f32 %v1781, %v2045
  %v2078 = vadd.f32 %v1782, %v2046
  %v2079 = vadd.f32 %v1783, %v2047
  %v2080 = vadd.f32 %v1784, %v2048
  %v2081 = vadd.f32 %v1785, %v2049
  %v2082 = vadd.f32 %v1786, %v2050
  %v2083 = vadd.f32 %v1787, %v2051
  %v2084 = vadd.f32 %v1788, %v2052
  %v2085 = vadd.f32 %v1789, %v2053
  %v2086 = vadd.f32 %v1790, %v2054
  %v2087 = vadd.f32 %v1791, %v2055
  %v2088 = vadd.f32 %v1792, %v2056
  %v2089 = vadd.f32 %v1793, %v2057
  %v2090 = vadd.f32 %v1794, %v2058
  %v2091 = vadd.f32 %v1795, %v2059
  %v2092 = vadd.f32 %v1796, %v2060
  %v2093 = vadd.f32 %v1797, %v2061
  %v2094 = vadd.f32 %v1798, %v2062
  %v2095 = vadd.f32 %v1799, %v2063
  %v2096 = vadd.f32 %v1800, %v2064
  %v2097 = vadd.f32 %v1801, %v2065
  %v2098 = vadd.f32 %v1802, %v2066
  %v2099 = vadd.f32 %v1803, %v2067
  %v2100 = vadd.f32 %v1804, %v2068
  %v2101 = vadd.f32 %v1805, %v2069
  %v2102 = vadd.f32 %v1806, %v2070
  %v2103 = vadd.f32 %v1807, %v2071
  %v2104 = vadd.f32 %v1808, %v2072
  %s2105 = scalar_lea.vmem %s1809, 1
  %v2106 = vld [vmem:[%s2105] ss:$2 sm:$0xff]
  %s2107 = scalar_lea.vmem %s1809, 49
  %v2108 = vld [vmem:[%s2107] ss:$2 sm:$0xff]
  %s2109 = scalar_lea.vmem %s1809, 97
  %v2110 = vld [vmem:[%s2109] ss:$2 sm:$0xff]
  %s2111 = scalar_lea.vmem %s1809, 145
  %v2112 = vld [vmem:[%s2111] ss:$2 sm:$0xff]
  %s2113 = scalar_lea.vmem %s1809, 193
  %v2114 = vld [vmem:[%s2113] ss:$2 sm:$0xff]
  %s2115 = scalar_lea.vmem %s1809, 241
  %v2116 = vld [vmem:[%s2115] ss:$2 sm:$0xff]
  %s2117 = scalar_lea.vmem %s1809, 289
  %v2118 = vld [vmem:[%s2117] ss:$2 sm:$0xff]
  %s2119 = scalar_lea.vmem %s1809, 337
  %v2120 = vld [vmem:[%s2119] ss:$2 sm:$0xff]
  %s2121 = scalar_lea.vmem %s1809, 433
  %v2122 = vld [vmem:[%s2121] ss:$2 sm:$0xff]
  %s2123 = scalar_lea.vmem %s1809, 481
  %v2124 = vld [vmem:[%s2123] ss:$2 sm:$0xff]
  %s2125 = scalar_lea.vmem %s1809, 529
  %v2126 = vld [vmem:[%s2125] ss:$2 sm:$0xff]
  %s2127 = scalar_lea.vmem %s1809, 577
  %v2128 = vld [vmem:[%s2127] ss:$2 sm:$0xff]
  %s2129 = scalar_lea.vmem %s1809, 625
  %v2130 = vld [vmem:[%s2129] ss:$2 sm:$0xff]
  %s2131 = scalar_lea.vmem %s1809, 673
  %v2132 = vld [vmem:[%s2131] ss:$2 sm:$0xff]
  %s2133 = scalar_lea.vmem %s1809, 721
  %v2134 = vld [vmem:[%s2133] ss:$2 sm:$0xff]
  %s2135 = scalar_lea.vmem %s1809, 769
  %v2136 = vld [vmem:[%s2135] ss:$2 sm:$0xff]
  %s2137 = scalar_lea.vmem %s1809, 865
  %v2138 = vld [vmem:[%s2137] ss:$2 sm:$0xff]
  %s2139 = scalar_lea.vmem %s1809, 913
  %v2140 = vld [vmem:[%s2139] ss:$2 sm:$0xff]
  %s2141 = scalar_lea.vmem %s1809, 961
  %v2142 = vld [vmem:[%s2141] ss:$2 sm:$0xff]
  %s2143 = scalar_lea.vmem %s1809, 1009
  %v2144 = vld [vmem:[%s2143] ss:$2 sm:$0xff]
  %s2145 = scalar_lea.vmem %s1809, 1057
  %v2146 = vld [vmem:[%s2145] ss:$2 sm:$0xff]
  %s2147 = scalar_lea.vmem %s1809, 1105
  %v2148 = vld [vmem:[%s2147] ss:$2 sm:$0xff]
  %s2149 = scalar_lea.vmem %s1809, 1153
  %v2150 = vld [vmem:[%s2149] ss:$2 sm:$0xff]
  %s2151 = scalar_lea.vmem %s1809, 1201
  %v2152 = vld [vmem:[%s2151] ss:$2 sm:$0xff]
  %s2153 = scalar_lea.vmem %s1809, 1297
  %v2154 = vld [vmem:[%s2153] ss:$2 sm:$0xff]
  %s2155 = scalar_lea.vmem %s1809, 1345
  %v2156 = vld [vmem:[%s2155] ss:$2 sm:$0xff]
  %s2157 = scalar_lea.vmem %s1809, 1393
  %v2158 = vld [vmem:[%s2157] ss:$2 sm:$0xff]
  %s2159 = scalar_lea.vmem %s1809, 1441
  %v2160 = vld [vmem:[%s2159] ss:$2 sm:$0xff]
  %s2161 = scalar_lea.vmem %s1809, 1489
  %v2162 = vld [vmem:[%s2161] ss:$2 sm:$0xff]
  %s2163 = scalar_lea.vmem %s1809, 1537
  %v2164 = vld [vmem:[%s2163] ss:$2 sm:$0xff]
  %s2165 = scalar_lea.vmem %s1809, 1585
  %v2166 = vld [vmem:[%s2165] ss:$2 sm:$0xff]
  %s2167 = scalar_lea.vmem %s1809, 1633
  %v2168 = vld [vmem:[%s2167] ss:$2 sm:$0xff]
  %s2169 = scalar_lea.vmem %s1, 7
  %v2170 = vld [vmem:[%s2169] sm:$0x1]
  %2172 = vset.pattern.permute.xlu0 0
  %2173 = vperm.xlu0 %2172, %v2106
  %v2174 = vpop.permute.xlu0 %2173
  %2177 = vset.pattern.permute.xlu0 0
  %2178 = vperm.xlu0 %2177, %v2108
  %v2179 = vpop.permute.xlu0 %2178
  %2182 = vset.pattern.permute.xlu0 0
  %2183 = vperm.xlu0 %2182, %v2110
  %v2184 = vpop.permute.xlu0 %2183
  %2187 = vset.pattern.permute.xlu0 0
  %2188 = vperm.xlu0 %2187, %v2112
  %v2189 = vpop.permute.xlu0 %2188
  %2192 = vset.pattern.permute.xlu0 0
  %2193 = vperm.xlu0 %2192, %v2114
  %v2194 = vpop.permute.xlu0 %2193
  %2197 = vset.pattern.permute.xlu0 0
  %2198 = vperm.xlu0 %2197, %v2116
  %v2199 = vpop.permute.xlu0 %2198
  %2202 = vset.pattern.permute.xlu0 0
  %2203 = vperm.xlu0 %2202, %v2118
  %v2204 = vpop.permute.xlu0 %2203
  %2207 = vset.pattern.permute.xlu0 0
  %2208 = vperm.xlu0 %2207, %v2120
  %v2209 = vpop.permute.xlu0 %2208
  %2212 = vset.pattern.permute.xlu0 0
  %2213 = vperm.xlu0 %2212, %v2122
  %v2214 = vpop.permute.xlu0 %2213
  %2217 = vset.pattern.permute.xlu0 0
  %2218 = vperm.xlu0 %2217, %v2124
  %v2219 = vpop.permute.xlu0 %2218
  %2222 = vset.pattern.permute.xlu0 0
  %2223 = vperm.xlu0 %2222, %v2126
  %v2224 = vpop.permute.xlu0 %2223
  %2227 = vset.pattern.permute.xlu0 0
  %2228 = vperm.xlu0 %2227, %v2128
  %v2229 = vpop.permute.xlu0 %2228
  %2232 = vset.pattern.permute.xlu0 0
  %2233 = vperm.xlu0 %2232, %v2130
  %v2234 = vpop.permute.xlu0 %2233
  %2237 = vset.pattern.permute.xlu0 0
  %2238 = vperm.xlu0 %2237, %v2132
  %v2239 = vpop.permute.xlu0 %2238
  %2242 = vset.pattern.permute.xlu0 0
  %2243 = vperm.xlu0 %2242, %v2134
  %v2244 = vpop.permute.xlu0 %2243
  %2247 = vset.pattern.permute.xlu0 0
  %2248 = vperm.xlu0 %2247, %v2136
  %v2249 = vpop.permute.xlu0 %2248
  %2252 = vset.pattern.permute.xlu0 0
  %2253 = vperm.xlu0 %2252, %v2138
  %v2254 = vpop.permute.xlu0 %2253
  %2257 = vset.pattern.permute.xlu0 0
  %2258 = vperm.xlu0 %2257, %v2140
  %v2259 = vpop.permute.xlu0 %2258
  %2262 = vset.pattern.permute.xlu0 0
  %2263 = vperm.xlu0 %2262, %v2142
  %v2264 = vpop.permute.xlu0 %2263
  %2267 = vset.pattern.permute.xlu0 0
  %2268 = vperm.xlu0 %2267, %v2144
  %v2269 = vpop.permute.xlu0 %2268
  %2272 = vset.pattern.permute.xlu0 0
  %2273 = vperm.xlu0 %2272, %v2146
  %v2274 = vpop.permute.xlu0 %2273
  %2277 = vset.pattern.permute.xlu0 0
  %2278 = vperm.xlu0 %2277, %v2148
  %v2279 = vpop.permute.xlu0 %2278
  %2282 = vset.pattern.permute.xlu0 0
  %2283 = vperm.xlu0 %2282, %v2150
  %v2284 = vpop.permute.xlu0 %2283
  %2287 = vset.pattern.permute.xlu0 0
  %2288 = vperm.xlu0 %2287, %v2152
  %v2289 = vpop.permute.xlu0 %2288
  %2292 = vset.pattern.permute.xlu0 0
  %2293 = vperm.xlu0 %2292, %v2154
  %v2294 = vpop.permute.xlu0 %2293
  %2297 = vset.pattern.permute.xlu0 0
  %2298 = vperm.xlu0 %2297, %v2156
  %v2299 = vpop.permute.xlu0 %2298
  %2302 = vset.pattern.permute.xlu0 0
  %2303 = vperm.xlu0 %2302, %v2158
  %v2304 = vpop.permute.xlu0 %2303
  %2307 = vset.pattern.permute.xlu0 0
  %2308 = vperm.xlu0 %2307, %v2160
  %v2309 = vpop.permute.xlu0 %2308
  %2312 = vset.pattern.permute.xlu0 0
  %2313 = vperm.xlu0 %2312, %v2162
  %v2314 = vpop.permute.xlu0 %2313
  %2317 = vset.pattern.permute.xlu0 0
  %2318 = vperm.xlu0 %2317, %v2164
  %v2319 = vpop.permute.xlu0 %2318
  %2322 = vset.pattern.permute.xlu0 0
  %2323 = vperm.xlu0 %2322, %v2166
  %v2324 = vpop.permute.xlu0 %2323
  %2327 = vset.pattern.permute.xlu0 0
  %2328 = vperm.xlu0 %2327, %v2168
  %v2329 = vpop.permute.xlu0 %2328
  %v2332 = vlaneseq
  %v2333 = vshrl.u32 %v2332, 7
  %v2334 = vsub.s32 0, %v2333
  %v2335 = vrot.slane %v2170, %v2334
  %v2337 = vmul.f32 %v2174, %v2335
  %v2338 = vmul.f32 %v2179, %v2335
  %v2339 = vmul.f32 %v2184, %v2335
  %v2340 = vmul.f32 %v2189, %v2335
  %v2341 = vmul.f32 %v2194, %v2335
  %v2342 = vmul.f32 %v2199, %v2335
  %v2343 = vmul.f32 %v2204, %v2335
  %v2344 = vmul.f32 %v2209, %v2335
  %v2345 = vmul.f32 %v2214, %v2335
  %v2346 = vmul.f32 %v2219, %v2335
  %v2347 = vmul.f32 %v2224, %v2335
  %v2348 = vmul.f32 %v2229, %v2335
  %v2349 = vmul.f32 %v2234, %v2335
  %v2350 = vmul.f32 %v2239, %v2335
  %v2351 = vmul.f32 %v2244, %v2335
  %v2352 = vmul.f32 %v2249, %v2335
  %v2353 = vmul.f32 %v2254, %v2335
  %v2354 = vmul.f32 %v2259, %v2335
  %v2355 = vmul.f32 %v2264, %v2335
  %v2356 = vmul.f32 %v2269, %v2335
  %v2357 = vmul.f32 %v2274, %v2335
  %v2358 = vmul.f32 %v2279, %v2335
  %v2359 = vmul.f32 %v2284, %v2335
  %v2360 = vmul.f32 %v2289, %v2335
  %v2361 = vmul.f32 %v2294, %v2335
  %v2362 = vmul.f32 %v2299, %v2335
  %v2363 = vmul.f32 %v2304, %v2335
  %v2364 = vmul.f32 %v2309, %v2335
  %v2365 = vmul.f32 %v2314, %v2335
  %v2366 = vmul.f32 %v2319, %v2335
  %v2367 = vmul.f32 %v2324, %v2335
  %v2368 = vmul.f32 %v2329, %v2335
  %v2369 = vadd.f32 %v2073, %v2337
  %v2370 = vadd.f32 %v2074, %v2338
  %v2371 = vadd.f32 %v2075, %v2339
  %v2372 = vadd.f32 %v2076, %v2340
  %v2373 = vadd.f32 %v2077, %v2341
  %v2374 = vadd.f32 %v2078, %v2342
  %v2375 = vadd.f32 %v2079, %v2343
  %v2376 = vadd.f32 %v2080, %v2344
  %v2377 = vadd.f32 %v2081, %v2345
  %v2378 = vadd.f32 %v2082, %v2346
  %v2379 = vadd.f32 %v2083, %v2347
  %v2380 = vadd.f32 %v2084, %v2348
  %v2381 = vadd.f32 %v2085, %v2349
  %v2382 = vadd.f32 %v2086, %v2350
  %v2383 = vadd.f32 %v2087, %v2351
  %v2384 = vadd.f32 %v2088, %v2352
  %v2385 = vadd.f32 %v2089, %v2353
  %v2386 = vadd.f32 %v2090, %v2354
  %v2387 = vadd.f32 %v2091, %v2355
  %v2388 = vadd.f32 %v2092, %v2356
  %v2389 = vadd.f32 %v2093, %v2357
  %v2390 = vadd.f32 %v2094, %v2358
  %v2391 = vadd.f32 %v2095, %v2359
  %v2392 = vadd.f32 %v2096, %v2360
  %v2393 = vadd.f32 %v2097, %v2361
  %v2394 = vadd.f32 %v2098, %v2362
  %v2395 = vadd.f32 %v2099, %v2363
  %v2396 = vadd.f32 %v2100, %v2364
  %v2397 = vadd.f32 %v2101, %v2365
  %v2398 = vadd.f32 %v2102, %v2366
  %v2399 = vadd.f32 %v2103, %v2367
  %v2400 = vadd.f32 %v2104, %v2368
  %s2401 = scalar_lea.vmem %s1809, 2
  %v2402 = vld [vmem:[%s2401] ss:$2 sm:$0xff]
  %s2403 = scalar_lea.vmem %s1809, 50
  %v2404 = vld [vmem:[%s2403] ss:$2 sm:$0xff]
  %s2405 = scalar_lea.vmem %s1809, 98
  %v2406 = vld [vmem:[%s2405] ss:$2 sm:$0xff]
  %s2407 = scalar_lea.vmem %s1809, 146
  %v2408 = vld [vmem:[%s2407] ss:$2 sm:$0xff]
  %s2409 = scalar_lea.vmem %s1809, 194
  %v2410 = vld [vmem:[%s2409] ss:$2 sm:$0xff]
  %s2411 = scalar_lea.vmem %s1809, 242
  %v2412 = vld [vmem:[%s2411] ss:$2 sm:$0xff]
  %s2413 = scalar_lea.vmem %s1809, 290
  %v2414 = vld [vmem:[%s2413] ss:$2 sm:$0xff]
  %s2415 = scalar_lea.vmem %s1809, 338
  %v2416 = vld [vmem:[%s2415] ss:$2 sm:$0xff]
  %s2417 = scalar_lea.vmem %s1809, 434
  %v2418 = vld [vmem:[%s2417] ss:$2 sm:$0xff]
  %s2419 = scalar_lea.vmem %s1809, 482
  %v2420 = vld [vmem:[%s2419] ss:$2 sm:$0xff]
  %s2421 = scalar_lea.vmem %s1809, 530
  %v2422 = vld [vmem:[%s2421] ss:$2 sm:$0xff]
  %s2423 = scalar_lea.vmem %s1809, 578
  %v2424 = vld [vmem:[%s2423] ss:$2 sm:$0xff]
  %s2425 = scalar_lea.vmem %s1809, 626
  %v2426 = vld [vmem:[%s2425] ss:$2 sm:$0xff]
  %s2427 = scalar_lea.vmem %s1809, 674
  %v2428 = vld [vmem:[%s2427] ss:$2 sm:$0xff]
  %s2429 = scalar_lea.vmem %s1809, 722
  %v2430 = vld [vmem:[%s2429] ss:$2 sm:$0xff]
  %s2431 = scalar_lea.vmem %s1809, 770
  %v2432 = vld [vmem:[%s2431] ss:$2 sm:$0xff]
  %s2433 = scalar_lea.vmem %s1809, 866
  %v2434 = vld [vmem:[%s2433] ss:$2 sm:$0xff]
  %s2435 = scalar_lea.vmem %s1809, 914
  %v2436 = vld [vmem:[%s2435] ss:$2 sm:$0xff]
  %s2437 = scalar_lea.vmem %s1809, 962
  %v2438 = vld [vmem:[%s2437] ss:$2 sm:$0xff]
  %s2439 = scalar_lea.vmem %s1809, 1010
  %v2440 = vld [vmem:[%s2439] ss:$2 sm:$0xff]
  %s2441 = scalar_lea.vmem %s1809, 1058
  %v2442 = vld [vmem:[%s2441] ss:$2 sm:$0xff]
  %s2443 = scalar_lea.vmem %s1809, 1106
  %v2444 = vld [vmem:[%s2443] ss:$2 sm:$0xff]
  %s2445 = scalar_lea.vmem %s1809, 1154
  %v2446 = vld [vmem:[%s2445] ss:$2 sm:$0xff]
  %s2447 = scalar_lea.vmem %s1809, 1202
  %v2448 = vld [vmem:[%s2447] ss:$2 sm:$0xff]
  %s2449 = scalar_lea.vmem %s1809, 1298
  %v2450 = vld [vmem:[%s2449] ss:$2 sm:$0xff]
  %s2451 = scalar_lea.vmem %s1809, 1346
  %v2452 = vld [vmem:[%s2451] ss:$2 sm:$0xff]
  %s2453 = scalar_lea.vmem %s1809, 1394
  %v2454 = vld [vmem:[%s2453] ss:$2 sm:$0xff]
  %s2455 = scalar_lea.vmem %s1809, 1442
  %v2456 = vld [vmem:[%s2455] ss:$2 sm:$0xff]
  %s2457 = scalar_lea.vmem %s1809, 1490
  %v2458 = vld [vmem:[%s2457] ss:$2 sm:$0xff]
  %s2459 = scalar_lea.vmem %s1809, 1538
  %v2460 = vld [vmem:[%s2459] ss:$2 sm:$0xff]
  %s2461 = scalar_lea.vmem %s1809, 1586
  %v2462 = vld [vmem:[%s2461] ss:$2 sm:$0xff]
  %s2463 = scalar_lea.vmem %s1809, 1634
  %v2464 = vld [vmem:[%s2463] ss:$2 sm:$0xff]
  %s2465 = scalar_lea.vmem %s1, 8
  %v2466 = vld [vmem:[%s2465] sm:$0x1]
  %2468 = vset.pattern.permute.xlu0 0
  %2469 = vperm.xlu0 %2468, %v2402
  %v2470 = vpop.permute.xlu0 %2469
  %2473 = vset.pattern.permute.xlu0 0
  %2474 = vperm.xlu0 %2473, %v2404
  %v2475 = vpop.permute.xlu0 %2474
  %2478 = vset.pattern.permute.xlu0 0
  %2479 = vperm.xlu0 %2478, %v2406
  %v2480 = vpop.permute.xlu0 %2479
  %2483 = vset.pattern.permute.xlu0 0
  %2484 = vperm.xlu0 %2483, %v2408
  %v2485 = vpop.permute.xlu0 %2484
  %2488 = vset.pattern.permute.xlu0 0
  %2489 = vperm.xlu0 %2488, %v2410
  %v2490 = vpop.permute.xlu0 %2489
  %2493 = vset.pattern.permute.xlu0 0
  %2494 = vperm.xlu0 %2493, %v2412
  %v2495 = vpop.permute.xlu0 %2494
  %2498 = vset.pattern.permute.xlu0 0
  %2499 = vperm.xlu0 %2498, %v2414
  %v2500 = vpop.permute.xlu0 %2499
  %2503 = vset.pattern.permute.xlu0 0
  %2504 = vperm.xlu0 %2503, %v2416
  %v2505 = vpop.permute.xlu0 %2504
  %2508 = vset.pattern.permute.xlu0 0
  %2509 = vperm.xlu0 %2508, %v2418
  %v2510 = vpop.permute.xlu0 %2509
  %2513 = vset.pattern.permute.xlu0 0
  %2514 = vperm.xlu0 %2513, %v2420
  %v2515 = vpop.permute.xlu0 %2514
  %2518 = vset.pattern.permute.xlu0 0
  %2519 = vperm.xlu0 %2518, %v2422
  %v2520 = vpop.permute.xlu0 %2519
  %2523 = vset.pattern.permute.xlu0 0
  %2524 = vperm.xlu0 %2523, %v2424
  %v2525 = vpop.permute.xlu0 %2524
  %2528 = vset.pattern.permute.xlu0 0
  %2529 = vperm.xlu0 %2528, %v2426
  %v2530 = vpop.permute.xlu0 %2529
  %2533 = vset.pattern.permute.xlu0 0
  %2534 = vperm.xlu0 %2533, %v2428
  %v2535 = vpop.permute.xlu0 %2534
  %2538 = vset.pattern.permute.xlu0 0
  %2539 = vperm.xlu0 %2538, %v2430
  %v2540 = vpop.permute.xlu0 %2539
  %2543 = vset.pattern.permute.xlu0 0
  %2544 = vperm.xlu0 %2543, %v2432
  %v2545 = vpop.permute.xlu0 %2544
  %2548 = vset.pattern.permute.xlu0 0
  %2549 = vperm.xlu0 %2548, %v2434
  %v2550 = vpop.permute.xlu0 %2549
  %2553 = vset.pattern.permute.xlu0 0
  %2554 = vperm.xlu0 %2553, %v2436
  %v2555 = vpop.permute.xlu0 %2554
  %2558 = vset.pattern.permute.xlu0 0
  %2559 = vperm.xlu0 %2558, %v2438
  %v2560 = vpop.permute.xlu0 %2559
  %2563 = vset.pattern.permute.xlu0 0
  %2564 = vperm.xlu0 %2563, %v2440
  %v2565 = vpop.permute.xlu0 %2564
  %2568 = vset.pattern.permute.xlu0 0
  %2569 = vperm.xlu0 %2568, %v2442
  %v2570 = vpop.permute.xlu0 %2569
  %2573 = vset.pattern.permute.xlu0 0
  %2574 = vperm.xlu0 %2573, %v2444
  %v2575 = vpop.permute.xlu0 %2574
  %2578 = vset.pattern.permute.xlu0 0
  %2579 = vperm.xlu0 %2578, %v2446
  %v2580 = vpop.permute.xlu0 %2579
  %2583 = vset.pattern.permute.xlu0 0
  %2584 = vperm.xlu0 %2583, %v2448
  %v2585 = vpop.permute.xlu0 %2584
  %2588 = vset.pattern.permute.xlu0 0
  %2589 = vperm.xlu0 %2588, %v2450
  %v2590 = vpop.permute.xlu0 %2589
  %2593 = vset.pattern.permute.xlu0 0
  %2594 = vperm.xlu0 %2593, %v2452
  %v2595 = vpop.permute.xlu0 %2594
  %2598 = vset.pattern.permute.xlu0 0
  %2599 = vperm.xlu0 %2598, %v2454
  %v2600 = vpop.permute.xlu0 %2599
  %2603 = vset.pattern.permute.xlu0 0
  %2604 = vperm.xlu0 %2603, %v2456
  %v2605 = vpop.permute.xlu0 %2604
  %2608 = vset.pattern.permute.xlu0 0
  %2609 = vperm.xlu0 %2608, %v2458
  %v2610 = vpop.permute.xlu0 %2609
  %2613 = vset.pattern.permute.xlu0 0
  %2614 = vperm.xlu0 %2613, %v2460
  %v2615 = vpop.permute.xlu0 %2614
  %2618 = vset.pattern.permute.xlu0 0
  %2619 = vperm.xlu0 %2618, %v2462
  %v2620 = vpop.permute.xlu0 %2619
  %2623 = vset.pattern.permute.xlu0 0
  %2624 = vperm.xlu0 %2623, %v2464
  %v2625 = vpop.permute.xlu0 %2624
  %v2628 = vlaneseq
  %v2629 = vshrl.u32 %v2628, 7
  %v2630 = vsub.s32 0, %v2629
  %v2631 = vrot.slane %v2466, %v2630
  %v2633 = vmul.f32 %v2470, %v2631
  %v2634 = vmul.f32 %v2475, %v2631
  %v2635 = vmul.f32 %v2480, %v2631
  %v2636 = vmul.f32 %v2485, %v2631
  %v2637 = vmul.f32 %v2490, %v2631
  %v2638 = vmul.f32 %v2495, %v2631
  %v2639 = vmul.f32 %v2500, %v2631
  %v2640 = vmul.f32 %v2505, %v2631
  %v2641 = vmul.f32 %v2510, %v2631
  %v2642 = vmul.f32 %v2515, %v2631
  %v2643 = vmul.f32 %v2520, %v2631
  %v2644 = vmul.f32 %v2525, %v2631
  %v2645 = vmul.f32 %v2530, %v2631
  %v2646 = vmul.f32 %v2535, %v2631
  %v2647 = vmul.f32 %v2540, %v2631
  %v2648 = vmul.f32 %v2545, %v2631
  %v2649 = vmul.f32 %v2550, %v2631
  %v2650 = vmul.f32 %v2555, %v2631
  %v2651 = vmul.f32 %v2560, %v2631
  %v2652 = vmul.f32 %v2565, %v2631
  %v2653 = vmul.f32 %v2570, %v2631
  %v2654 = vmul.f32 %v2575, %v2631
  %v2655 = vmul.f32 %v2580, %v2631
  %v2656 = vmul.f32 %v2585, %v2631
  %v2657 = vmul.f32 %v2590, %v2631
  %v2658 = vmul.f32 %v2595, %v2631
  %v2659 = vmul.f32 %v2600, %v2631
  %v2660 = vmul.f32 %v2605, %v2631
  %v2661 = vmul.f32 %v2610, %v2631
  %v2662 = vmul.f32 %v2615, %v2631
  %v2663 = vmul.f32 %v2620, %v2631
  %v2664 = vmul.f32 %v2625, %v2631
  %v2665 = vadd.f32 %v2369, %v2633
  %v2666 = vadd.f32 %v2370, %v2634
  %v2667 = vadd.f32 %v2371, %v2635
  %v2668 = vadd.f32 %v2372, %v2636
  %v2669 = vadd.f32 %v2373, %v2637
  %v2670 = vadd.f32 %v2374, %v2638
  %v2671 = vadd.f32 %v2375, %v2639
  %v2672 = vadd.f32 %v2376, %v2640
  %v2673 = vadd.f32 %v2377, %v2641
  %v2674 = vadd.f32 %v2378, %v2642
  %v2675 = vadd.f32 %v2379, %v2643
  %v2676 = vadd.f32 %v2380, %v2644
  %v2677 = vadd.f32 %v2381, %v2645
  %v2678 = vadd.f32 %v2382, %v2646
  %v2679 = vadd.f32 %v2383, %v2647
  %v2680 = vadd.f32 %v2384, %v2648
  %v2681 = vadd.f32 %v2385, %v2649
  %v2682 = vadd.f32 %v2386, %v2650
  %v2683 = vadd.f32 %v2387, %v2651
  %v2684 = vadd.f32 %v2388, %v2652
  %v2685 = vadd.f32 %v2389, %v2653
  %v2686 = vadd.f32 %v2390, %v2654
  %v2687 = vadd.f32 %v2391, %v2655
  %v2688 = vadd.f32 %v2392, %v2656
  %v2689 = vadd.f32 %v2393, %v2657
  %v2690 = vadd.f32 %v2394, %v2658
  %v2691 = vadd.f32 %v2395, %v2659
  %v2692 = vadd.f32 %v2396, %v2660
  %v2693 = vadd.f32 %v2397, %v2661
  %v2694 = vadd.f32 %v2398, %v2662
  %v2695 = vadd.f32 %v2399, %v2663
  %v2696 = vadd.f32 %v2400, %v2664
  %v2697 = vld [vmem:[%s2] sm:$0x1]
  %v2699 = vlaneseq
  %v2700 = vshrl.u32 %v2699, 7
  %v2701 = vsub.s32 0, %v2700
  %v2702 = vrot.slane %v2697, %v2701
  %v2704 = vadd.f32 %v2665, %v2702
  %v2705 = vadd.f32 %v2666, %v2702
  %v2706 = vadd.f32 %v2667, %v2702
  %v2707 = vadd.f32 %v2668, %v2702
  %v2708 = vadd.f32 %v2669, %v2702
  %v2709 = vadd.f32 %v2670, %v2702
  %v2710 = vadd.f32 %v2671, %v2702
  %v2711 = vadd.f32 %v2672, %v2702
  %v2712 = vadd.f32 %v2673, %v2702
  %v2713 = vadd.f32 %v2674, %v2702
  %v2714 = vadd.f32 %v2675, %v2702
  %v2715 = vadd.f32 %v2676, %v2702
  %v2716 = vadd.f32 %v2677, %v2702
  %v2717 = vadd.f32 %v2678, %v2702
  %v2718 = vadd.f32 %v2679, %v2702
  %v2719 = vadd.f32 %v2680, %v2702
  %v2720 = vadd.f32 %v2681, %v2702
  %v2721 = vadd.f32 %v2682, %v2702
  %v2722 = vadd.f32 %v2683, %v2702
  %v2723 = vadd.f32 %v2684, %v2702
  %v2724 = vadd.f32 %v2685, %v2702
  %v2725 = vadd.f32 %v2686, %v2702
  %v2726 = vadd.f32 %v2687, %v2702
  %v2727 = vadd.f32 %v2688, %v2702
  %v2728 = vadd.f32 %v2689, %v2702
  %v2729 = vadd.f32 %v2690, %v2702
  %v2730 = vadd.f32 %v2691, %v2702
  %v2731 = vadd.f32 %v2692, %v2702
  %v2732 = vadd.f32 %v2693, %v2702
  %v2733 = vadd.f32 %v2694, %v2702
  %v2734 = vadd.f32 %v2695, %v2702
  %v2735 = vadd.f32 %v2696, %v2702
  %v2736 = vmax.f32 %v2704, 0.0
  %v2737 = vmax.f32 %v2705, 0.0
  %v2738 = vmax.f32 %v2706, 0.0
  %v2739 = vmax.f32 %v2707, 0.0
  %v2740 = vmax.f32 %v2708, 0.0
  %v2741 = vmax.f32 %v2709, 0.0
  %v2742 = vmax.f32 %v2710, 0.0
  %v2743 = vmax.f32 %v2711, 0.0
  %v2744 = vmax.f32 %v2712, 0.0
  %v2745 = vmax.f32 %v2713, 0.0
  %v2746 = vmax.f32 %v2714, 0.0
  %v2747 = vmax.f32 %v2715, 0.0
  %v2748 = vmax.f32 %v2716, 0.0
  %v2749 = vmax.f32 %v2717, 0.0
  %v2750 = vmax.f32 %v2718, 0.0
  %v2751 = vmax.f32 %v2719, 0.0
  %v2752 = vmax.f32 %v2720, 0.0
  %v2753 = vmax.f32 %v2721, 0.0
  %v2754 = vmax.f32 %v2722, 0.0
  %v2755 = vmax.f32 %v2723, 0.0
  %v2756 = vmax.f32 %v2724, 0.0
  %v2757 = vmax.f32 %v2725, 0.0
  %v2758 = vmax.f32 %v2726, 0.0
  %v2759 = vmax.f32 %v2727, 0.0
  %v2760 = vmax.f32 %v2728, 0.0
  %v2761 = vmax.f32 %v2729, 0.0
  %v2762 = vmax.f32 %v2730, 0.0
  %v2763 = vmax.f32 %v2731, 0.0
  %v2764 = vmax.f32 %v2732, 0.0
  %v2765 = vmax.f32 %v2733, 0.0
  %v2766 = vmax.f32 %v2734, 0.0
  %v2767 = vmax.f32 %v2735, 0.0
  %vm2768 = vcmask 261120
  %2769 = vst.msk [vmem:[#allocation2] sm:$0xff] %vm2768, 0.0
  %vm2770 = vcmask 254976
  %2771 = vst.msk [vmem:[#allocation2 + $0x8] sm:$0x3] %vm2770, 0.0
  %2772 = vst.msk [vmem:[#allocation2 + $0x10] sm:$0xff] %vm2768, 0.0
  %2773 = vst.msk [vmem:[#allocation2 + $0x18] sm:$0x3] %vm2770, 0.0
  %2774 = vst.msk [vmem:[#allocation2 + $0x20] sm:$0xff] %vm2768, 0.0
  %2775 = vst.msk [vmem:[#allocation2 + $0x28] sm:$0x3] %vm2770, 0.0
  %2776 = vst.msk [vmem:[#allocation2 + $0x30] sm:$0xff] %vm2768, 0.0
  %2777 = vst.msk [vmem:[#allocation2 + $0x38] sm:$0x3] %vm2770, 0.0
  %2778 = vst.msk [vmem:[#allocation2 + $0x40] sm:$0xff] %vm2768, 0.0
  %2779 = vst.msk [vmem:[#allocation2 + $0x48] sm:$0x3] %vm2770, 0.0
  %2780 = vst.msk [vmem:[#allocation2 + $0x50] sm:$0xff] %vm2768, 0.0
  %2781 = vst.msk [vmem:[#allocation2 + $0x58] sm:$0x3] %vm2770, 0.0
  %2782 = vst.msk [vmem:[#allocation2 + $0x60] sm:$0xff] %vm2768, 0.0
  %2783 = vst.msk [vmem:[#allocation2 + $0x68] sm:$0x3] %vm2770, 0.0
  %2784 = vst.msk [vmem:[#allocation2 + $0x70] sm:$0xff] %vm2768, 0.0
  %2785 = vst.msk [vmem:[#allocation2 + $0x78] sm:$0x3] %vm2770, 0.0
  %2786 = vst.msk [vmem:[#allocation2 + $0x80] sm:$0xff] %vm2768, 0.0
  %2787 = vst.msk [vmem:[#allocation2 + $0x88] sm:$0x3] %vm2770, 0.0
  %2788 = vst.msk [vmem:[#allocation2 + $0x90] sm:$0xff] %vm2768, 0.0
  %2789 = vst.msk [vmem:[#allocation2 + $0x98] sm:$0x3] %vm2770, 0.0
  %2790 = vst.msk [vmem:[#allocation2 + $0xa0] sm:$0xff] %vm2768, 0.0
  %2791 = vst.msk [vmem:[#allocation2 + $0xa8] sm:$0x3] %vm2770, 0.0
  %2792 = vst.msk [vmem:[#allocation2 + $0xb0] sm:$0xff] %vm2768, 0.0
  %2793 = vst.msk [vmem:[#allocation2 + $0xb8] sm:$0x3] %vm2770, 0.0
  %2794 = vst.msk [vmem:[#allocation2 + $0xc0] sm:$0xff] %vm2768, 0.0
  %2795 = vst.msk [vmem:[#allocation2 + $0xc8] sm:$0x3] %vm2770, 0.0
  %2796 = vst.msk [vmem:[#allocation2 + $0xd0] sm:$0xff] %vm2768, 0.0
  %2797 = vst.msk [vmem:[#allocation2 + $0xd8] sm:$0x3] %vm2770, 0.0
  %2798 = vst.msk [vmem:[#allocation2 + $0xe0] sm:$0xff] %vm2768, 0.0
  %2799 = vst.msk [vmem:[#allocation2 + $0xe8] sm:$0x3] %vm2770, 0.0
  %2800 = vst.msk [vmem:[#allocation2 + $0xf0] sm:$0xff] %vm2768, 0.0
  %2801 = vst.msk [vmem:[#allocation2 + $0xf8] sm:$0x3] %vm2770, 0.0
  %2802 = vst.msk [vmem:[#allocation2 + $0x100] sm:$0xff] %vm2768, 0.0
  %2803 = vst.msk [vmem:[#allocation2 + $0x108] sm:$0x3] %vm2770, 0.0
  %2804 = vst.msk [vmem:[#allocation2 + $0x110] sm:$0xff] %vm2768, 0.0
  %2805 = vst.msk [vmem:[#allocation2 + $0x118] sm:$0x3] %vm2770, 0.0
  %2806 = vst.msk [vmem:[#allocation2 + $0x120] sm:$0xff] %vm2768, 0.0
  %2807 = vst.msk [vmem:[#allocation2 + $0x128] sm:$0x3] %vm2770, 0.0
  %2808 = vst.msk [vmem:[#allocation2 + $0x130] sm:$0xff] %vm2768, 0.0
  %2809 = vst.msk [vmem:[#allocation2 + $0x138] sm:$0x3] %vm2770, 0.0
  %2810 = vst.msk [vmem:[#allocation2 + $0x140] sm:$0xff] %vm2768, 0.0
  %2811 = vst.msk [vmem:[#allocation2 + $0x148] sm:$0x3] %vm2770, 0.0
  %2812 = vst.msk [vmem:[#allocation2 + $0x150] sm:$0xff] %vm2768, 0.0
  %2813 = vst.msk [vmem:[#allocation2 + $0x158] sm:$0x3] %vm2770, 0.0
  %2814 = vst.msk [vmem:[#allocation2 + $0x160] sm:$0xff] %vm2768, 0.0
  %2815 = vst.msk [vmem:[#allocation2 + $0x168] sm:$0x3] %vm2770, 0.0
  %2816 = vst.msk [vmem:[#allocation2 + $0x170] sm:$0xff] %vm2768, 0.0
  %2817 = vst.msk [vmem:[#allocation2 + $0x178] sm:$0x3] %vm2770, 0.0
  %2818 = vst.msk [vmem:[#allocation2 + $0x180] sm:$0xff] %vm2768, 0.0
  %2819 = vst.msk [vmem:[#allocation2 + $0x188] sm:$0x3] %vm2770, 0.0
  %2820 = vst.msk [vmem:[#allocation2 + $0x190] sm:$0xff] %vm2768, 0.0
  %2821 = vst.msk [vmem:[#allocation2 + $0x198] sm:$0x3] %vm2770, 0.0
  %2822 = vst.msk [vmem:[#allocation2 + $0x1a0] sm:$0xff] %vm2768, 0.0
  %2823 = vst.msk [vmem:[#allocation2 + $0x1a8] sm:$0x3] %vm2770, 0.0
  %2824 = vst.msk [vmem:[#allocation2 + $0x1b0] sm:$0xff] %vm2768, 0.0
  %2825 = vst.msk [vmem:[#allocation2 + $0x1b8] sm:$0x3] %vm2770, 0.0
  %2826 = vst.msk [vmem:[#allocation2 + $0x1c0] sm:$0xff] %vm2768, 0.0
  %2827 = vst.msk [vmem:[#allocation2 + $0x1c8] sm:$0x3] %vm2770, 0.0
  %2828 = vst.msk [vmem:[#allocation2 + $0x1d0] sm:$0xff] %vm2768, 0.0
  %2829 = vst.msk [vmem:[#allocation2 + $0x1d8] sm:$0x3] %vm2770, 0.0
  %2830 = vst.msk [vmem:[#allocation2 + $0x1e0] sm:$0xff] %vm2768, 0.0
  %2831 = vst.msk [vmem:[#allocation2 + $0x1e8] sm:$0x3] %vm2770, 0.0
  %2832 = vst.msk [vmem:[#allocation2 + $0x1f0] sm:$0xff] %vm2768, 0.0
  %2833 = vst.msk [vmem:[#allocation2 + $0x1f8] sm:$0x3] %vm2770, 0.0
  %2834 = vst.msk [vmem:[#allocation2 + $0x200] sm:$0xff] %vm2768, 0.0
  %2835 = vst.msk [vmem:[#allocation2 + $0x208] sm:$0x3] %vm2770, 0.0
  %2836 = vst.msk [vmem:[#allocation2 + $0x210] sm:$0xff] %vm2768, 0.0
  %2837 = vst.msk [vmem:[#allocation2 + $0x218] sm:$0x3] %vm2770, 0.0
  %2838 = vst.msk [vmem:[#allocation2 + $0x220] sm:$0xff] %vm2768, 0.0
  %2839 = vst.msk [vmem:[#allocation2 + $0x228] sm:$0x3] %vm2770, 0.0
  %2840 = vst.msk [vmem:[#allocation2 + $0x230] sm:$0xff] %vm2768, 0.0
  %2841 = vst.msk [vmem:[#allocation2 + $0x238] sm:$0x3] %vm2770, 0.0
  %2842 = vst.msk [vmem:[#allocation2 + $0x240] sm:$0xff] %vm2768, 0.0
  %2843 = vst.msk [vmem:[#allocation2 + $0x248] sm:$0x3] %vm2770, 0.0
  %2844 = vst.msk [vmem:[#allocation2 + $0x250] sm:$0xff] %vm2768, 0.0
  %2845 = vst.msk [vmem:[#allocation2 + $0x258] sm:$0x3] %vm2770, 0.0
  %2846 = vst.msk [vmem:[#allocation2 + $0x260] sm:$0xff] %vm2768, 0.0
  %2847 = vst.msk [vmem:[#allocation2 + $0x268] sm:$0x3] %vm2770, 0.0
  %2848 = vst.msk [vmem:[#allocation2 + $0x270] sm:$0xff] %vm2768, 0.0
  %2849 = vst.msk [vmem:[#allocation2 + $0x278] sm:$0x3] %vm2770, 0.0
  %s2850 = scalar_lea.vmem [#allocation2], 16
  %2851 = vst.msk [vmem:[%s2850 + $0x1] sm:$0xff] %vm2768, %v2736
  %2852 = vst.msk [vmem:[%s2850 + $0x11] sm:$0xff] %vm2768, %v2737
  %2853 = vst.msk [vmem:[%s2850 + $0x21] sm:$0xff] %vm2768, %v2738
  %2854 = vst.msk [vmem:[%s2850 + $0x31] sm:$0xff] %vm2768, %v2739
  %2855 = vst.msk [vmem:[%s2850 + $0x41] sm:$0xff] %vm2768, %v2740
  %2856 = vst.msk [vmem:[%s2850 + $0x51] sm:$0xff] %vm2768, %v2741
  %2857 = vst.msk [vmem:[%s2850 + $0x61] sm:$0xff] %vm2768, %v2742
  %2858 = vst.msk [vmem:[%s2850 + $0x71] sm:$0xff] %vm2768, %v2743
  %2859 = vst.msk [vmem:[%s2850 + $0xa1] sm:$0xff] %vm2768, %v2744
  %2860 = vst.msk [vmem:[%s2850 + $0xb1] sm:$0xff] %vm2768, %v2745
  %2861 = vst.msk [vmem:[%s2850 + $0xc1] sm:$0xff] %vm2768, %v2746
  %2862 = vst.msk [vmem:[%s2850 + $0xd1] sm:$0xff] %vm2768, %v2747
  %2863 = vst.msk [vmem:[%s2850 + $0xe1] sm:$0xff] %vm2768, %v2748
  %2864 = vst.msk [vmem:[%s2850 + $0xf1] sm:$0xff] %vm2768, %v2749
  %2865 = vst.msk [vmem:[%s2850 + $0x101] sm:$0xff] %vm2768, %v2750
  %2866 = vst.msk [vmem:[%s2850 + $0x111] sm:$0xff] %vm2768, %v2751
  %2867 = vst.msk [vmem:[%s2850 + $0x141] sm:$0xff] %vm2768, %v2752
  %2868 = vst.msk [vmem:[%s2850 + $0x151] sm:$0xff] %vm2768, %v2753
  %2869 = vst.msk [vmem:[%s2850 + $0x161] sm:$0xff] %vm2768, %v2754
  %2870 = vst.msk [vmem:[%s2850 + $0x171] sm:$0xff] %vm2768, %v2755
  %2871 = vst.msk [vmem:[%s2850 + $0x181] sm:$0xff] %vm2768, %v2756
  %2872 = vst.msk [vmem:[%s2850 + $0x191] sm:$0xff] %vm2768, %v2757
  %2873 = vst.msk [vmem:[%s2850 + $0x1a1] sm:$0xff] %vm2768, %v2758
  %2874 = vst.msk [vmem:[%s2850 + $0x1b1] sm:$0xff] %vm2768, %v2759
  %2875 = vst.msk [vmem:[%s2850 + $0x1e1] sm:$0xff] %vm2768, %v2760
  %2876 = vst.msk [vmem:[%s2850 + $0x1f1] sm:$0xff] %vm2768, %v2761
  %2877 = vst.msk [vmem:[%s2850 + $0x201] sm:$0xff] %vm2768, %v2762
  %2878 = vst.msk [vmem:[%s2850 + $0x211] sm:$0xff] %vm2768, %v2763
  %2879 = vst.msk [vmem:[%s2850 + $0x221] sm:$0xff] %vm2768, %v2764
  %2880 = vst.msk [vmem:[%s2850 + $0x231] sm:$0xff] %vm2768, %v2765
  %2881 = vst.msk [vmem:[%s2850 + $0x241] sm:$0xff] %vm2768, %v2766
  %2882 = vst.msk [vmem:[%s2850 + $0x251] sm:$0xff] %vm2768, %v2767
  %v2883 = vld [vmem:[#allocation2] ss:$2 sm:$0xf]
  %s2884 = scalar_lea.vmem [#allocation2], 32
  %v2885 = vld [vmem:[%s2884] ss:$2 sm:$0xf]
  %s2886 = scalar_lea.vmem [#allocation2], 64
  %v2887 = vld [vmem:[%s2886] ss:$2 sm:$0xf]
  %s2888 = scalar_lea.vmem [#allocation2], 96
  %v2889 = vld [vmem:[%s2888] ss:$2 sm:$0xf]
  %s2890 = scalar_lea.vmem [#allocation2], 160
  %v2891 = vld [vmem:[%s2890] ss:$2 sm:$0xf]
  %s2892 = scalar_lea.vmem [#allocation2], 192
  %v2893 = vld [vmem:[%s2892] ss:$2 sm:$0xf]
  %s2894 = scalar_lea.vmem [#allocation2], 224
  %v2895 = vld [vmem:[%s2894] ss:$2 sm:$0xf]
  %s2896 = scalar_lea.vmem [#allocation2], 256
  %v2897 = vld [vmem:[%s2896] ss:$2 sm:$0xf]
  %s2898 = scalar_lea.vmem [#allocation2], 320
  %v2899 = vld [vmem:[%s2898] ss:$2 sm:$0xf]
  %s2900 = scalar_lea.vmem [#allocation2], 352
  %v2901 = vld [vmem:[%s2900] ss:$2 sm:$0xf]
  %s2902 = scalar_lea.vmem [#allocation2], 384
  %v2903 = vld [vmem:[%s2902] ss:$2 sm:$0xf]
  %s2904 = scalar_lea.vmem [#allocation2], 416
  %v2905 = vld [vmem:[%s2904] ss:$2 sm:$0xf]
  %s2906 = scalar_lea.vmem [#allocation2], 480
  %v2907 = vld [vmem:[%s2906] ss:$2 sm:$0xf]
  %s2908 = scalar_lea.vmem [#allocation2], 512
  %v2909 = vld [vmem:[%s2908] ss:$2 sm:$0xf]
  %s2910 = scalar_lea.vmem [#allocation2], 544
  %v2911 = vld [vmem:[%s2910] ss:$2 sm:$0xf]
  %s2912 = scalar_lea.vmem [#allocation2], 576
  %v2913 = vld [vmem:[%s2912] ss:$2 sm:$0xf]
  %s2914 = scalar_lea.vmem [#allocation2], 1
  %v2915 = vld [vmem:[%s2914] ss:$2 sm:$0xf]
  %s2916 = scalar_lea.vmem [#allocation2], 33
  %v2917 = vld [vmem:[%s2916] ss:$2 sm:$0xf]
  %s2918 = scalar_lea.vmem [#allocation2], 65
  %v2919 = vld [vmem:[%s2918] ss:$2 sm:$0xf]
  %s2920 = scalar_lea.vmem [#allocation2], 97
  %v2921 = vld [vmem:[%s2920] ss:$2 sm:$0xf]
  %s2922 = scalar_lea.vmem [#allocation2], 161
  %v2923 = vld [vmem:[%s2922] ss:$2 sm:$0xf]
  %s2924 = scalar_lea.vmem [#allocation2], 193
  %v2925 = vld [vmem:[%s2924] ss:$2 sm:$0xf]
  %s2926 = scalar_lea.vmem [#allocation2], 225
  %v2927 = vld [vmem:[%s2926] ss:$2 sm:$0xf]
  %s2928 = scalar_lea.vmem [#allocation2], 257
  %v2929 = vld [vmem:[%s2928] ss:$2 sm:$0xf]
  %s2930 = scalar_lea.vmem [#allocation2], 321
  %v2931 = vld [vmem:[%s2930] ss:$2 sm:$0xf]
  %s2932 = scalar_lea.vmem [#allocation2], 353
  %v2933 = vld [vmem:[%s2932] ss:$2 sm:$0xf]
  %s2934 = scalar_lea.vmem [#allocation2], 385
  %v2935 = vld [vmem:[%s2934] ss:$2 sm:$0xf]
  %s2936 = scalar_lea.vmem [#allocation2], 417
  %v2937 = vld [vmem:[%s2936] ss:$2 sm:$0xf]
  %s2938 = scalar_lea.vmem [#allocation2], 481
  %v2939 = vld [vmem:[%s2938] ss:$2 sm:$0xf]
  %s2940 = scalar_lea.vmem [#allocation2], 513
  %v2941 = vld [vmem:[%s2940] ss:$2 sm:$0xf]
  %s2942 = scalar_lea.vmem [#allocation2], 545
  %v2943 = vld [vmem:[%s2942] ss:$2 sm:$0xf]
  %s2944 = scalar_lea.vmem [#allocation2], 577
  %v2945 = vld [vmem:[%s2944] ss:$2 sm:$0xf]
  %s2946 = scalar_lea.vmem [#allocation2], 2
  %v2947 = vld [vmem:[%s2946] ss:$2 sm:$0xf]
  %s2948 = scalar_lea.vmem [#allocation2], 34
  %v2949 = vld [vmem:[%s2948] ss:$2 sm:$0xf]
  %s2950 = scalar_lea.vmem [#allocation2], 66
  %v2951 = vld [vmem:[%s2950] ss:$2 sm:$0xf]
  %s2952 = scalar_lea.vmem [#allocation2], 98
  %v2953 = vld [vmem:[%s2952] ss:$2 sm:$0xf]
  %s2954 = scalar_lea.vmem [#allocation2], 162
  %v2955 = vld [vmem:[%s2954] ss:$2 sm:$0xf]
  %s2956 = scalar_lea.vmem [#allocation2], 194
  %v2957 = vld [vmem:[%s2956] ss:$2 sm:$0xf]
  %s2958 = scalar_lea.vmem [#allocation2], 226
  %v2959 = vld [vmem:[%s2958] ss:$2 sm:$0xf]
  %s2960 = scalar_lea.vmem [#allocation2], 258
  %v2961 = vld [vmem:[%s2960] ss:$2 sm:$0xf]
  %s2962 = scalar_lea.vmem [#allocation2], 322
  %v2963 = vld [vmem:[%s2962] ss:$2 sm:$0xf]
  %s2964 = scalar_lea.vmem [#allocation2], 354
  %v2965 = vld [vmem:[%s2964] ss:$2 sm:$0xf]
  %s2966 = scalar_lea.vmem [#allocation2], 386
  %v2967 = vld [vmem:[%s2966] ss:$2 sm:$0xf]
  %s2968 = scalar_lea.vmem [#allocation2], 418
  %v2969 = vld [vmem:[%s2968] ss:$2 sm:$0xf]
  %s2970 = scalar_lea.vmem [#allocation2], 482
  %v2971 = vld [vmem:[%s2970] ss:$2 sm:$0xf]
  %s2972 = scalar_lea.vmem [#allocation2], 514
  %v2973 = vld [vmem:[%s2972] ss:$2 sm:$0xf]
  %s2974 = scalar_lea.vmem [#allocation2], 546
  %v2975 = vld [vmem:[%s2974] ss:$2 sm:$0xf]
  %s2976 = scalar_lea.vmem [#allocation2], 578
  %v2977 = vld [vmem:[%s2976] ss:$2 sm:$0xf]
  %v2978 = vld [vmem:[%s2850] ss:$2 sm:$0xf]
  %s2979 = scalar_lea.vmem %s2850, 32 [#allocation2]
  %v2980 = vld [vmem:[%s2979] ss:$2 sm:$0xf]
  %s2981 = scalar_lea.vmem %s2850, 64 [#allocation2]
  %v2982 = vld [vmem:[%s2981] ss:$2 sm:$0xf]
  %s2983 = scalar_lea.vmem %s2850, 96 [#allocation2]
  %v2984 = vld [vmem:[%s2983] ss:$2 sm:$0xf]
  %s2985 = scalar_lea.vmem %s2850, 160 [#allocation2]
  %v2986 = vld [vmem:[%s2985] ss:$2 sm:$0xf]
  %s2987 = scalar_lea.vmem %s2850, 192 [#allocation2]
  %v2988 = vld [vmem:[%s2987] ss:$2 sm:$0xf]
  %s2989 = scalar_lea.vmem %s2850, 224 [#allocation2]
  %v2990 = vld [vmem:[%s2989] ss:$2 sm:$0xf]
  %s2991 = scalar_lea.vmem %s2850, 256 [#allocation2]
  %v2992 = vld [vmem:[%s2991] ss:$2 sm:$0xf]
  %s2993 = scalar_lea.vmem %s2850, 320 [#allocation2]
  %v2994 = vld [vmem:[%s2993] ss:$2 sm:$0xf]
  %s2995 = scalar_lea.vmem %s2850, 352 [#allocation2]
  %v2996 = vld [vmem:[%s2995] ss:$2 sm:$0xf]
  %s2997 = scalar_lea.vmem %s2850, 384 [#allocation2]
  %v2998 = vld [vmem:[%s2997] ss:$2 sm:$0xf]
  %s2999 = scalar_lea.vmem %s2850, 416 [#allocation2]
  %v3000 = vld [vmem:[%s2999] ss:$2 sm:$0xf]
  %s3001 = scalar_lea.vmem %s2850, 480 [#allocation2]
  %v3002 = vld [vmem:[%s3001] ss:$2 sm:$0xf]
  %s3003 = scalar_lea.vmem %s2850, 512 [#allocation2]
  %v3004 = vld [vmem:[%s3003] ss:$2 sm:$0xf]
  %s3005 = scalar_lea.vmem %s2850, 544 [#allocation2]
  %v3006 = vld [vmem:[%s3005] ss:$2 sm:$0xf]
  %s3007 = scalar_lea.vmem %s2850, 576 [#allocation2]
  %v3008 = vld [vmem:[%s3007] ss:$2 sm:$0xf]
  %s3009 = scalar_lea.vmem %s2850, 1 [#allocation2]
  %v3010 = vld [vmem:[%s3009] ss:$2 sm:$0xf]
  %s3011 = scalar_lea.vmem %s2850, 33 [#allocation2]
  %v3012 = vld [vmem:[%s3011] ss:$2 sm:$0xf]
  %s3013 = scalar_lea.vmem %s2850, 65 [#allocation2]
  %v3014 = vld [vmem:[%s3013] ss:$2 sm:$0xf]
  %s3015 = scalar_lea.vmem %s2850, 97 [#allocation2]
  %v3016 = vld [vmem:[%s3015] ss:$2 sm:$0xf]
  %s3017 = scalar_lea.vmem %s2850, 161 [#allocation2]
  %v3018 = vld [vmem:[%s3017] ss:$2 sm:$0xf]
  %s3019 = scalar_lea.vmem %s2850, 193 [#allocation2]
  %v3020 = vld [vmem:[%s3019] ss:$2 sm:$0xf]
  %s3021 = scalar_lea.vmem %s2850, 225 [#allocation2]
  %v3022 = vld [vmem:[%s3021] ss:$2 sm:$0xf]
  %s3023 = scalar_lea.vmem %s2850, 257 [#allocation2]
  %v3024 = vld [vmem:[%s3023] ss:$2 sm:$0xf]
  %s3025 = scalar_lea.vmem %s2850, 321 [#allocation2]
  %v3026 = vld [vmem:[%s3025] ss:$2 sm:$0xf]
  %s3027 = scalar_lea.vmem %s2850, 353 [#allocation2]
  %v3028 = vld [vmem:[%s3027] ss:$2 sm:$0xf]
  %s3029 = scalar_lea.vmem %s2850, 385 [#allocation2]
  %v3030 = vld [vmem:[%s3029] ss:$2 sm:$0xf]
  %s3031 = scalar_lea.vmem %s2850, 417 [#allocation2]
  %v3032 = vld [vmem:[%s3031] ss:$2 sm:$0xf]
  %s3033 = scalar_lea.vmem %s2850, 481 [#allocation2]
  %v3034 = vld [vmem:[%s3033] ss:$2 sm:$0xf]
  %s3035 = scalar_lea.vmem %s2850, 513 [#allocation2]
  %v3036 = vld [vmem:[%s3035] ss:$2 sm:$0xf]
  %s3037 = scalar_lea.vmem %s2850, 545 [#allocation2]
  %v3038 = vld [vmem:[%s3037] ss:$2 sm:$0xf]
  %s3039 = scalar_lea.vmem %s2850, 577 [#allocation2]
  %v3040 = vld [vmem:[%s3039] ss:$2 sm:$0xf]
  %s3041 = scalar_lea.vmem %s2850, 2 [#allocation2]
  %v3042 = vld [vmem:[%s3041] ss:$2 sm:$0xf]
  %s3043 = scalar_lea.vmem %s2850, 34 [#allocation2]
  %v3044 = vld [vmem:[%s3043] ss:$2 sm:$0xf]
  %s3045 = scalar_lea.vmem %s2850, 66 [#allocation2]
  %v3046 = vld [vmem:[%s3045] ss:$2 sm:$0xf]
  %s3047 = scalar_lea.vmem %s2850, 98 [#allocation2]
  %v3048 = vld [vmem:[%s3047] ss:$2 sm:$0xf]
  %s3049 = scalar_lea.vmem %s2850, 162 [#allocation2]
  %v3050 = vld [vmem:[%s3049] ss:$2 sm:$0xf]
  %s3051 = scalar_lea.vmem %s2850, 194 [#allocation2]
  %v3052 = vld [vmem:[%s3051] ss:$2 sm:$0xf]
  %s3053 = scalar_lea.vmem %s2850, 226 [#allocation2]
  %v3054 = vld [vmem:[%s3053] ss:$2 sm:$0xf]
  %s3055 = scalar_lea.vmem %s2850, 258 [#allocation2]
  %v3056 = vld [vmem:[%s3055] ss:$2 sm:$0xf]
  %s3057 = scalar_lea.vmem %s2850, 322 [#allocation2]
  %v3058 = vld [vmem:[%s3057] ss:$2 sm:$0xf]
  %s3059 = scalar_lea.vmem %s2850, 354 [#allocation2]
  %v3060 = vld [vmem:[%s3059] ss:$2 sm:$0xf]
  %s3061 = scalar_lea.vmem %s2850, 386 [#allocation2]
  %v3062 = vld [vmem:[%s3061] ss:$2 sm:$0xf]
  %s3063 = scalar_lea.vmem %s2850, 418 [#allocation2]
  %v3064 = vld [vmem:[%s3063] ss:$2 sm:$0xf]
  %s3065 = scalar_lea.vmem %s2850, 482 [#allocation2]
  %v3066 = vld [vmem:[%s3065] ss:$2 sm:$0xf]
  %s3067 = scalar_lea.vmem %s2850, 514 [#allocation2]
  %v3068 = vld [vmem:[%s3067] ss:$2 sm:$0xf]
  %s3069 = scalar_lea.vmem %s2850, 546 [#allocation2]
  %v3070 = vld [vmem:[%s3069] ss:$2 sm:$0xf]
  %s3071 = scalar_lea.vmem %s2850, 578 [#allocation2]
  %v3072 = vld [vmem:[%s3071] ss:$2 sm:$0xf]
  %s3073 = scalar_lea.vmem [#allocation2], 32
  %v3074 = vld [vmem:[%s3073] ss:$2 sm:$0xf]
  %s3075 = scalar_lea.vmem %s3073, 32 [#allocation2]
  %v3076 = vld [vmem:[%s3075] ss:$2 sm:$0xf]
  %s3077 = scalar_lea.vmem %s3073, 64 [#allocation2]
  %v3078 = vld [vmem:[%s3077] ss:$2 sm:$0xf]
  %s3079 = scalar_lea.vmem %s3073, 96 [#allocation2]
  %v3080 = vld [vmem:[%s3079] ss:$2 sm:$0xf]
  %s3081 = scalar_lea.vmem %s3073, 160 [#allocation2]
  %v3082 = vld [vmem:[%s3081] ss:$2 sm:$0xf]
  %s3083 = scalar_lea.vmem %s3073, 192 [#allocation2]
  %v3084 = vld [vmem:[%s3083] ss:$2 sm:$0xf]
  %s3085 = scalar_lea.vmem %s3073, 224 [#allocation2]
  %v3086 = vld [vmem:[%s3085] ss:$2 sm:$0xf]
  %s3087 = scalar_lea.vmem %s3073, 256 [#allocation2]
  %v3088 = vld [vmem:[%s3087] ss:$2 sm:$0xf]
  %s3089 = scalar_lea.vmem %s3073, 320 [#allocation2]
  %v3090 = vld [vmem:[%s3089] ss:$2 sm:$0xf]
  %s3091 = scalar_lea.vmem %s3073, 352 [#allocation2]
  %v3092 = vld [vmem:[%s3091] ss:$2 sm:$0xf]
  %s3093 = scalar_lea.vmem %s3073, 384 [#allocation2]
  %v3094 = vld [vmem:[%s3093] ss:$2 sm:$0xf]
  %s3095 = scalar_lea.vmem %s3073, 416 [#allocation2]
  %v3096 = vld [vmem:[%s3095] ss:$2 sm:$0xf]
  %s3097 = scalar_lea.vmem %s3073, 480 [#allocation2]
  %v3098 = vld [vmem:[%s3097] ss:$2 sm:$0xf]
  %s3099 = scalar_lea.vmem %s3073, 512 [#allocation2]
  %v3100 = vld [vmem:[%s3099] ss:$2 sm:$0xf]
  %s3101 = scalar_lea.vmem %s3073, 544 [#allocation2]
  %v3102 = vld [vmem:[%s3101] ss:$2 sm:$0xf]
  %s3103 = scalar_lea.vmem %s3073, 576 [#allocation2]
  %v3104 = vld [vmem:[%s3103] ss:$2 sm:$0xf]
  %s3105 = scalar_lea.vmem %s3073, 1 [#allocation2]
  %v3106 = vld [vmem:[%s3105] ss:$2 sm:$0xf]
  %s3107 = scalar_lea.vmem %s3073, 33 [#allocation2]
  %v3108 = vld [vmem:[%s3107] ss:$2 sm:$0xf]
  %s3109 = scalar_lea.vmem %s3073, 65 [#allocation2]
  %v3110 = vld [vmem:[%s3109] ss:$2 sm:$0xf]
  %s3111 = scalar_lea.vmem %s3073, 97 [#allocation2]
  %v3112 = vld [vmem:[%s3111] ss:$2 sm:$0xf]
  %s3113 = scalar_lea.vmem %s3073, 161 [#allocation2]
  %v3114 = vld [vmem:[%s3113] ss:$2 sm:$0xf]
  %s3115 = scalar_lea.vmem %s3073, 193 [#allocation2]
  %v3116 = vld [vmem:[%s3115] ss:$2 sm:$0xf]
  %s3117 = scalar_lea.vmem %s3073, 225 [#allocation2]
  %v3118 = vld [vmem:[%s3117] ss:$2 sm:$0xf]
  %s3119 = scalar_lea.vmem %s3073, 257 [#allocation2]
  %v3120 = vld [vmem:[%s3119] ss:$2 sm:$0xf]
  %s3121 = scalar_lea.vmem %s3073, 321 [#allocation2]
  %v3122 = vld [vmem:[%s3121] ss:$2 sm:$0xf]
  %s3123 = scalar_lea.vmem %s3073, 353 [#allocation2]
  %v3124 = vld [vmem:[%s3123] ss:$2 sm:$0xf]
  %s3125 = scalar_lea.vmem %s3073, 385 [#allocation2]
  %v3126 = vld [vmem:[%s3125] ss:$2 sm:$0xf]
  %s3127 = scalar_lea.vmem %s3073, 417 [#allocation2]
  %v3128 = vld [vmem:[%s3127] ss:$2 sm:$0xf]
  %s3129 = scalar_lea.vmem %s3073, 481 [#allocation2]
  %v3130 = vld [vmem:[%s3129] ss:$2 sm:$0xf]
  %s3131 = scalar_lea.vmem %s3073, 513 [#allocation2]
  %v3132 = vld [vmem:[%s3131] ss:$2 sm:$0xf]
  %s3133 = scalar_lea.vmem %s3073, 545 [#allocation2]
  %v3134 = vld [vmem:[%s3133] ss:$2 sm:$0xf]
  %s3135 = scalar_lea.vmem %s3073, 577 [#allocation2]
  %v3136 = vld [vmem:[%s3135] ss:$2 sm:$0xf]
  %s3137 = scalar_lea.vmem %s3073, 2 [#allocation2]
  %v3138 = vld [vmem:[%s3137] ss:$2 sm:$0xf]
  %s3139 = scalar_lea.vmem %s3073, 34 [#allocation2]
  %v3140 = vld [vmem:[%s3139] ss:$2 sm:$0xf]
  %s3141 = scalar_lea.vmem %s3073, 66 [#allocation2]
  %v3142 = vld [vmem:[%s3141] ss:$2 sm:$0xf]
  %s3143 = scalar_lea.vmem %s3073, 98 [#allocation2]
  %v3144 = vld [vmem:[%s3143] ss:$2 sm:$0xf]
  %s3145 = scalar_lea.vmem %s3073, 162 [#allocation2]
  %v3146 = vld [vmem:[%s3145] ss:$2 sm:$0xf]
  %s3147 = scalar_lea.vmem %s3073, 194 [#allocation2]
  %v3148 = vld [vmem:[%s3147] ss:$2 sm:$0xf]
  %s3149 = scalar_lea.vmem %s3073, 226 [#allocation2]
  %v3150 = vld [vmem:[%s3149] ss:$2 sm:$0xf]
  %s3151 = scalar_lea.vmem %s3073, 258 [#allocation2]
  %v3152 = vld [vmem:[%s3151] ss:$2 sm:$0xf]
  %s3153 = scalar_lea.vmem %s3073, 322 [#allocation2]
  %v3154 = vld [vmem:[%s3153] ss:$2 sm:$0xf]
  %s3155 = scalar_lea.vmem %s3073, 354 [#allocation2]
  %v3156 = vld [vmem:[%s3155] ss:$2 sm:$0xf]
  %s3157 = scalar_lea.vmem %s3073, 386 [#allocation2]
  %v3158 = vld [vmem:[%s3157] ss:$2 sm:$0xf]
  %s3159 = scalar_lea.vmem %s3073, 418 [#allocation2]
  %v3160 = vld [vmem:[%s3159] ss:$2 sm:$0xf]
  %s3161 = scalar_lea.vmem %s3073, 482 [#allocation2]
  %v3162 = vld [vmem:[%s3161] ss:$2 sm:$0xf]
  %s3163 = scalar_lea.vmem %s3073, 514 [#allocation2]
  %v3164 = vld [vmem:[%s3163] ss:$2 sm:$0xf]
  %s3165 = scalar_lea.vmem %s3073, 546 [#allocation2]
  %v3166 = vld [vmem:[%s3165] ss:$2 sm:$0xf]
  %s3167 = scalar_lea.vmem %s3073, 578 [#allocation2]
  %v3168 = vld [vmem:[%s3167] ss:$2 sm:$0xf]
  %3185 = vrot.lane.b32.xlu0 %v2915, 32
  %v3186 = vpop.permute.xlu0 %3185
  %3187 = vrot.lane.b32.xlu0 %v2917, 32
  %v3188 = vpop.permute.xlu0 %3187
  %3189 = vrot.lane.b32.xlu0 %v2919, 32
  %v3190 = vpop.permute.xlu0 %3189
  %3191 = vrot.lane.b32.xlu0 %v2921, 32
  %v3192 = vpop.permute.xlu0 %3191
  %3193 = vrot.lane.b32.xlu0 %v2923, 32
  %v3194 = vpop.permute.xlu0 %3193
  %3195 = vrot.lane.b32.xlu0 %v2925, 32
  %v3196 = vpop.permute.xlu0 %3195
  %3197 = vrot.lane.b32.xlu0 %v2927, 32
  %v3198 = vpop.permute.xlu0 %3197
  %3199 = vrot.lane.b32.xlu0 %v2929, 32
  %v3200 = vpop.permute.xlu0 %3199
  %3201 = vrot.lane.b32.xlu0 %v2931, 32
  %v3202 = vpop.permute.xlu0 %3201
  %3203 = vrot.lane.b32.xlu0 %v2933, 32
  %v3204 = vpop.permute.xlu0 %3203
  %3205 = vrot.lane.b32.xlu0 %v2935, 32
  %v3206 = vpop.permute.xlu0 %3205
  %3207 = vrot.lane.b32.xlu0 %v2937, 32
  %v3208 = vpop.permute.xlu0 %3207
  %3209 = vrot.lane.b32.xlu0 %v2939, 32
  %v3210 = vpop.permute.xlu0 %3209
  %3211 = vrot.lane.b32.xlu0 %v2941, 32
  %v3212 = vpop.permute.xlu0 %3211
  %3213 = vrot.lane.b32.xlu0 %v2943, 32
  %v3214 = vpop.permute.xlu0 %3213
  %3215 = vrot.lane.b32.xlu0 %v2945, 32
  %v3216 = vpop.permute.xlu0 %3215
  %3249 = vrot.lane.b32.xlu0 %v2947, 64
  %v3250 = vpop.permute.xlu0 %3249
  %3251 = vrot.lane.b32.xlu0 %v2949, 64
  %v3252 = vpop.permute.xlu0 %3251
  %3253 = vrot.lane.b32.xlu0 %v2951, 64
  %v3254 = vpop.permute.xlu0 %3253
  %3255 = vrot.lane.b32.xlu0 %v2953, 64
  %v3256 = vpop.permute.xlu0 %3255
  %3257 = vrot.lane.b32.xlu0 %v2955, 64
  %v3258 = vpop.permute.xlu0 %3257
  %3259 = vrot.lane.b32.xlu0 %v2957, 64
  %v3260 = vpop.permute.xlu0 %3259
  %3261 = vrot.lane.b32.xlu0 %v2959, 64
  %v3262 = vpop.permute.xlu0 %3261
  %3263 = vrot.lane.b32.xlu0 %v2961, 64
  %v3264 = vpop.permute.xlu0 %3263
  %3265 = vrot.lane.b32.xlu0 %v2963, 64
  %v3266 = vpop.permute.xlu0 %3265
  %3267 = vrot.lane.b32.xlu0 %v2965, 64
  %v3268 = vpop.permute.xlu0 %3267
  %3269 = vrot.lane.b32.xlu0 %v2967, 64
  %v3270 = vpop.permute.xlu0 %3269
  %3271 = vrot.lane.b32.xlu0 %v2969, 64
  %v3272 = vpop.permute.xlu0 %3271
  %3273 = vrot.lane.b32.xlu0 %v2971, 64
  %v3274 = vpop.permute.xlu0 %3273
  %3275 = vrot.lane.b32.xlu0 %v2973, 64
  %v3276 = vpop.permute.xlu0 %3275
  %3277 = vrot.lane.b32.xlu0 %v2975, 64
  %v3278 = vpop.permute.xlu0 %3277
  %3279 = vrot.lane.b32.xlu0 %v2977, 64
  %v3280 = vpop.permute.xlu0 %3279
  %3313 = vrot.lane.b32.xlu0 %v2978, 96
  %v3314 = vpop.permute.xlu0 %3313
  %3315 = vrot.lane.b32.xlu0 %v2980, 96
  %v3316 = vpop.permute.xlu0 %3315
  %3317 = vrot.lane.b32.xlu0 %v2982, 96
  %v3318 = vpop.permute.xlu0 %3317
  %3319 = vrot.lane.b32.xlu0 %v2984, 96
  %v3320 = vpop.permute.xlu0 %3319
  %3321 = vrot.lane.b32.xlu0 %v2986, 96
  %v3322 = vpop.permute.xlu0 %3321
  %3323 = vrot.lane.b32.xlu0 %v2988, 96
  %v3324 = vpop.permute.xlu0 %3323
  %3325 = vrot.lane.b32.xlu0 %v2990, 96
  %v3326 = vpop.permute.xlu0 %3325
  %3327 = vrot.lane.b32.xlu0 %v2992, 96
  %v3328 = vpop.permute.xlu0 %3327
  %3329 = vrot.lane.b32.xlu0 %v2994, 96
  %v3330 = vpop.permute.xlu0 %3329
  %3331 = vrot.lane.b32.xlu0 %v2996, 96
  %v3332 = vpop.permute.xlu0 %3331
  %3333 = vrot.lane.b32.xlu0 %v2998, 96
  %v3334 = vpop.permute.xlu0 %3333
  %3335 = vrot.lane.b32.xlu0 %v3000, 96
  %v3336 = vpop.permute.xlu0 %3335
  %3337 = vrot.lane.b32.xlu0 %v3002, 96
  %v3338 = vpop.permute.xlu0 %3337
  %3339 = vrot.lane.b32.xlu0 %v3004, 96
  %v3340 = vpop.permute.xlu0 %3339
  %3341 = vrot.lane.b32.xlu0 %v3006, 96
  %v3342 = vpop.permute.xlu0 %3341
  %3343 = vrot.lane.b32.xlu0 %v3008, 96
  %v3344 = vpop.permute.xlu0 %3343
  %3377 = vrot.lane.b32.xlu0 %v3042, 32
  %v3378 = vpop.permute.xlu0 %3377
  %3379 = vrot.lane.b32.xlu0 %v3044, 32
  %v3380 = vpop.permute.xlu0 %3379
  %3381 = vrot.lane.b32.xlu0 %v3046, 32
  %v3382 = vpop.permute.xlu0 %3381
  %3383 = vrot.lane.b32.xlu0 %v3048, 32
  %v3384 = vpop.permute.xlu0 %3383
  %3385 = vrot.lane.b32.xlu0 %v3050, 32
  %v3386 = vpop.permute.xlu0 %3385
  %3387 = vrot.lane.b32.xlu0 %v3052, 32
  %v3388 = vpop.permute.xlu0 %3387
  %3389 = vrot.lane.b32.xlu0 %v3054, 32
  %v3390 = vpop.permute.xlu0 %3389
  %3391 = vrot.lane.b32.xlu0 %v3056, 32
  %v3392 = vpop.permute.xlu0 %3391
  %3393 = vrot.lane.b32.xlu0 %v3058, 32
  %v3394 = vpop.permute.xlu0 %3393
  %3395 = vrot.lane.b32.xlu0 %v3060, 32
  %v3396 = vpop.permute.xlu0 %3395
  %3397 = vrot.lane.b32.xlu0 %v3062, 32
  %v3398 = vpop.permute.xlu0 %3397
  %3399 = vrot.lane.b32.xlu0 %v3064, 32
  %v3400 = vpop.permute.xlu0 %3399
  %3401 = vrot.lane.b32.xlu0 %v3066, 32
  %v3402 = vpop.permute.xlu0 %3401
  %3403 = vrot.lane.b32.xlu0 %v3068, 32
  %v3404 = vpop.permute.xlu0 %3403
  %3405 = vrot.lane.b32.xlu0 %v3070, 32
  %v3406 = vpop.permute.xlu0 %3405
  %3407 = vrot.lane.b32.xlu0 %v3072, 32
  %v3408 = vpop.permute.xlu0 %3407
  %3441 = vrot.lane.b32.xlu0 %v3074, 64
  %v3442 = vpop.permute.xlu0 %3441
  %3443 = vrot.lane.b32.xlu0 %v3076, 64
  %v3444 = vpop.permute.xlu0 %3443
  %3445 = vrot.lane.b32.xlu0 %v3078, 64
  %v3446 = vpop.permute.xlu0 %3445
  %3447 = vrot.lane.b32.xlu0 %v3080, 64
  %v3448 = vpop.permute.xlu0 %3447
  %3449 = vrot.lane.b32.xlu0 %v3082, 64
  %v3450 = vpop.permute.xlu0 %3449
  %3451 = vrot.lane.b32.xlu0 %v3084, 64
  %v3452 = vpop.permute.xlu0 %3451
  %3453 = vrot.lane.b32.xlu0 %v3086, 64
  %v3454 = vpop.permute.xlu0 %3453
  %3455 = vrot.lane.b32.xlu0 %v3088, 64
  %v3456 = vpop.permute.xlu0 %3455
  %3457 = vrot.lane.b32.xlu0 %v3090, 64
  %v3458 = vpop.permute.xlu0 %3457
  %3459 = vrot.lane.b32.xlu0 %v3092, 64
  %v3460 = vpop.permute.xlu0 %3459
  %3461 = vrot.lane.b32.xlu0 %v3094, 64
  %v3462 = vpop.permute.xlu0 %3461
  %3463 = vrot.lane.b32.xlu0 %v3096, 64
  %v3464 = vpop.permute.xlu0 %3463
  %3465 = vrot.lane.b32.xlu0 %v3098, 64
  %v3466 = vpop.permute.xlu0 %3465
  %3467 = vrot.lane.b32.xlu0 %v3100, 64
  %v3468 = vpop.permute.xlu0 %3467
  %3469 = vrot.lane.b32.xlu0 %v3102, 64
  %v3470 = vpop.permute.xlu0 %3469
  %3471 = vrot.lane.b32.xlu0 %v3104, 64
  %v3472 = vpop.permute.xlu0 %3471
  %3505 = vrot.lane.b32.xlu0 %v3106, 96
  %v3506 = vpop.permute.xlu0 %3505
  %3507 = vrot.lane.b32.xlu0 %v3108, 96
  %v3508 = vpop.permute.xlu0 %3507
  %3509 = vrot.lane.b32.xlu0 %v3110, 96
  %v3510 = vpop.permute.xlu0 %3509
  %3511 = vrot.lane.b32.xlu0 %v3112, 96
  %v3512 = vpop.permute.xlu0 %3511
  %3513 = vrot.lane.b32.xlu0 %v3114, 96
  %v3514 = vpop.permute.xlu0 %3513
  %3515 = vrot.lane.b32.xlu0 %v3116, 96
  %v3516 = vpop.permute.xlu0 %3515
  %3517 = vrot.lane.b32.xlu0 %v3118, 96
  %v3518 = vpop.permute.xlu0 %3517
  %3519 = vrot.lane.b32.xlu0 %v3120, 96
  %v3520 = vpop.permute.xlu0 %3519
  %3521 = vrot.lane.b32.xlu0 %v3122, 96
  %v3522 = vpop.permute.xlu0 %3521
  %3523 = vrot.lane.b32.xlu0 %v3124, 96
  %v3524 = vpop.permute.xlu0 %3523
  %3525 = vrot.lane.b32.xlu0 %v3126, 96
  %v3526 = vpop.permute.xlu0 %3525
  %3527 = vrot.lane.b32.xlu0 %v3128, 96
  %v3528 = vpop.permute.xlu0 %3527
  %3529 = vrot.lane.b32.xlu0 %v3130, 96
  %v3530 = vpop.permute.xlu0 %3529
  %3531 = vrot.lane.b32.xlu0 %v3132, 96
  %v3532 = vpop.permute.xlu0 %3531
  %3533 = vrot.lane.b32.xlu0 %v3134, 96
  %v3534 = vpop.permute.xlu0 %3533
  %3535 = vrot.lane.b32.xlu0 %v3136, 96
  %v3536 = vpop.permute.xlu0 %3535
  %v3553 = vsel %vm2768, %v2883, %v3186
  %v3554 = vsel %vm2768, %v2885, %v3188
  %v3555 = vsel %vm2768, %v2887, %v3190
  %v3556 = vsel %vm2768, %v2889, %v3192
  %v3557 = vsel %vm2768, %v2891, %v3194
  %v3558 = vsel %vm2768, %v2893, %v3196
  %v3559 = vsel %vm2768, %v2895, %v3198
  %v3560 = vsel %vm2768, %v2897, %v3200
  %v3561 = vsel %vm2768, %v2899, %v3202
  %v3562 = vsel %vm2768, %v2901, %v3204
  %v3563 = vsel %vm2768, %v2903, %v3206
  %v3564 = vsel %vm2768, %v2905, %v3208
  %v3565 = vsel %vm2768, %v2907, %v3210
  %v3566 = vsel %vm2768, %v2909, %v3212
  %v3567 = vsel %vm2768, %v2911, %v3214
  %v3568 = vsel %vm2768, %v2913, %v3216
  %vm3569 = vcmask 523264
  %v3570 = vsel %vm3569, %v3553, %v3250
  %v3571 = vsel %vm3569, %v3554, %v3252
  %v3572 = vsel %vm3569, %v3555, %v3254
  %v3573 = vsel %vm3569, %v3556, %v3256
  %v3574 = vsel %vm3569, %v3557, %v3258
  %v3575 = vsel %vm3569, %v3558, %v3260
  %v3576 = vsel %vm3569, %v3559, %v3262
  %v3577 = vsel %vm3569, %v3560, %v3264
  %v3578 = vsel %vm3569, %v3561, %v3266
  %v3579 = vsel %vm3569, %v3562, %v3268
  %v3580 = vsel %vm3569, %v3563, %v3270
  %v3581 = vsel %vm3569, %v3564, %v3272
  %v3582 = vsel %vm3569, %v3565, %v3274
  %v3583 = vsel %vm3569, %v3566, %v3276
  %v3584 = vsel %vm3569, %v3567, %v3278
  %v3585 = vsel %vm3569, %v3568, %v3280
  %vm3586 = vcmask 785408
  %v3587 = vsel %vm3586, %v3570, %v3314
  %v3588 = vsel %vm3586, %v3571, %v3316
  %v3589 = vsel %vm3586, %v3572, %v3318
  %v3590 = vsel %vm3586, %v3573, %v3320
  %v3591 = vsel %vm3586, %v3574, %v3322
  %v3592 = vsel %vm3586, %v3575, %v3324
  %v3593 = vsel %vm3586, %v3576, %v3326
  %v3594 = vsel %vm3586, %v3577, %v3328
  %v3595 = vsel %vm3586, %v3578, %v3330
  %v3596 = vsel %vm3586, %v3579, %v3332
  %v3597 = vsel %vm3586, %v3580, %v3334
  %v3598 = vsel %vm3586, %v3581, %v3336
  %v3599 = vsel %vm3586, %v3582, %v3338
  %v3600 = vsel %vm3586, %v3583, %v3340
  %v3601 = vsel %vm3586, %v3584, %v3342
  %v3602 = vsel %vm3586, %v3585, %v3344
  %v3603 = vsel %vm2768, %v3010, %v3378
  %v3604 = vsel %vm2768, %v3012, %v3380
  %v3605 = vsel %vm2768, %v3014, %v3382
  %v3606 = vsel %vm2768, %v3016, %v3384
  %v3607 = vsel %vm2768, %v3018, %v3386
  %v3608 = vsel %vm2768, %v3020, %v3388
  %v3609 = vsel %vm2768, %v3022, %v3390
  %v3610 = vsel %vm2768, %v3024, %v3392
  %v3611 = vsel %vm2768, %v3026, %v3394
  %v3612 = vsel %vm2768, %v3028, %v3396
  %v3613 = vsel %vm2768, %v3030, %v3398
  %v3614 = vsel %vm2768, %v3032, %v3400
  %v3615 = vsel %vm2768, %v3034, %v3402
  %v3616 = vsel %vm2768, %v3036, %v3404
  %v3617 = vsel %vm2768, %v3038, %v3406
  %v3618 = vsel %vm2768, %v3040, %v3408
  %v3619 = vsel %vm3569, %v3603, %v3442
  %v3620 = vsel %vm3569, %v3604, %v3444
  %v3621 = vsel %vm3569, %v3605, %v3446
  %v3622 = vsel %vm3569, %v3606, %v3448
  %v3623 = vsel %vm3569, %v3607, %v3450
  %v3624 = vsel %vm3569, %v3608, %v3452
  %v3625 = vsel %vm3569, %v3609, %v3454
  %v3626 = vsel %vm3569, %v3610, %v3456
  %v3627 = vsel %vm3569, %v3611, %v3458
  %v3628 = vsel %vm3569, %v3612, %v3460
  %v3629 = vsel %vm3569, %v3613, %v3462
  %v3630 = vsel %vm3569, %v3614, %v3464
  %v3631 = vsel %vm3569, %v3615, %v3466
  %v3632 = vsel %vm3569, %v3616, %v3468
  %v3633 = vsel %vm3569, %v3617, %v3470
  %v3634 = vsel %vm3569, %v3618, %v3472
  %v3635 = vsel %vm3586, %v3619, %v3506
  %v3636 = vsel %vm3586, %v3620, %v3508
  %v3637 = vsel %vm3586, %v3621, %v3510
  %v3638 = vsel %vm3586, %v3622, %v3512
  %v3639 = vsel %vm3586, %v3623, %v3514
  %v3640 = vsel %vm3586, %v3624, %v3516
  %v3641 = vsel %vm3586, %v3625, %v3518
  %v3642 = vsel %vm3586, %v3626, %v3520
  %v3643 = vsel %vm3586, %v3627, %v3522
  %v3644 = vsel %vm3586, %v3628, %v3524
  %v3645 = vsel %vm3586, %v3629, %v3526
  %v3646 = vsel %vm3586, %v3630, %v3528
  %v3647 = vsel %vm3586, %v3631, %v3530
  %v3648 = vsel %vm3586, %v3632, %v3532
  %v3649 = vsel %vm3586, %v3633, %v3534
  %v3650 = vsel %vm3586, %v3634, %v3536
  %v3699 = vcombine.low %v3587, %v3635
  %v3700 = vcombine.low %v3588, %v3636
  %v3701 = vcombine.low %v3589, %v3637
  %v3702 = vcombine.low %v3590, %v3638
  %v3703 = vcombine.low %v3591, %v3639
  %v3704 = vcombine.low %v3592, %v3640
  %v3705 = vcombine.low %v3593, %v3641
  %v3706 = vcombine.low %v3594, %v3642
  %v3707 = vcombine.low %v3595, %v3643
  %v3708 = vcombine.low %v3596, %v3644
  %v3709 = vcombine.low %v3597, %v3645
  %v3710 = vcombine.low %v3598, %v3646
  %v3711 = vcombine.low %v3599, %v3647
  %v3712 = vcombine.low %v3600, %v3648
  %v3713 = vcombine.low %v3601, %v3649
  %v3714 = vcombine.low %v3602, %v3650
  %v3715 = vcombine.low %v3699, %v3700
  %v3716 = vcombine.high %v3699, %v3700
  %v3717 = vcombine.low %v3138, %v3140
  %v3718 = vcombine.low %v3701, %v3702
  %v3719 = vcombine.high %v3701, %v3702
  %v3720 = vcombine.low %v3142, %v3144
  %v3721 = vcombine.low %v3703, %v3704
  %v3722 = vcombine.high %v3703, %v3704
  %v3723 = vcombine.low %v3146, %v3148
  %v3724 = vcombine.low %v3705, %v3706
  %v3725 = vcombine.high %v3705, %v3706
  %v3726 = vcombine.low %v3150, %v3152
  %v3727 = vcombine.low %v3707, %v3708
  %v3728 = vcombine.high %v3707, %v3708
  %v3729 = vcombine.low %v3154, %v3156
  %v3730 = vcombine.low %v3709, %v3710
  %v3731 = vcombine.high %v3709, %v3710
  %v3732 = vcombine.low %v3158, %v3160
  %v3733 = vcombine.low %v3711, %v3712
  %v3734 = vcombine.high %v3711, %v3712
  %v3735 = vcombine.low %v3162, %v3164
  %v3736 = vcombine.low %v3713, %v3714
  %v3737 = vcombine.high %v3713, %v3714
  %v3738 = vcombine.low %v3166, %v3168
  %v3763 = vpack.c.bf16 %v3718, %v3715
  %v3764 = vpack.c.bf16 %v3719, %v3716
  %v3765 = vpack.c.bf16 %v3720, %v3717
  %v3766 = vpack.c.bf16 %v3724, %v3721
  %v3767 = vpack.c.bf16 %v3725, %v3722
  %v3768 = vpack.c.bf16 %v3726, %v3723
  %v3769 = vpack.c.bf16 %v3730, %v3727
  %v3770 = vpack.c.bf16 %v3731, %v3728
  %v3771 = vpack.c.bf16 %v3732, %v3729
  %v3772 = vpack.c.bf16 %v3736, %v3733
  %v3773 = vpack.c.bf16 %v3737, %v3734
  %v3774 = vpack.c.bf16 %v3738, %v3735
  %v3775 = vld [vmem:[%s3] sm:$0xf]
  %v3776 = vld [vmem:[%s3 + $0x4] sm:$0xf]
  %v3777 = vld [vmem:[%s3 + $0x8] sm:$0xf]
  %v3778 = vld [vmem:[%s3 + $0xc] sm:$0xf]
  %v3779 = vld [vmem:[%s3 + $0x10] sm:$0xf]
  %v3780 = vld [vmem:[%s3 + $0x14] sm:$0xf]
  %v3781 = vld [vmem:[%s3 + $0x18] sm:$0xf]
  %v3782 = vld [vmem:[%s3 + $0x1c] sm:$0xf]
  %v3783 = vld [vmem:[%s3 + $0x20] sm:$0xf]
  %v3784 = vld [vmem:[%s3 + $0x24] sm:$0xf]
  %v3785 = vld [vmem:[%s3 + $0x28] sm:$0xf]
  %v3786 = vld [vmem:[%s3 + $0x2c] sm:$0xf]
  %v3787 = vld [vmem:[%s3 + $0x30] sm:$0xf]
  %v3788 = vld [vmem:[%s3 + $0x34] sm:$0xf]
  %v3789 = vld [vmem:[%s3 + $0x38] sm:$0xf]
  %v3790 = vld [vmem:[%s3 + $0x3c] sm:$0xf]
  %v3791 = vld [vmem:[%s3 + $0x40] sm:$0xf]
  %v3792 = vld [vmem:[%s3 + $0x44] sm:$0xf]
  %v3793 = vld [vmem:[%s3 + $0x48] sm:$0xf]
  %v3794 = vld [vmem:[%s3 + $0x4c] sm:$0xf]
  %v3795 = vld [vmem:[%s3 + $0x50] sm:$0xf]
  %v3796 = vld [vmem:[%s3 + $0x54] sm:$0xf]
  %v3797 = vld [vmem:[%s3 + $0x58] sm:$0xf]
  %v3798 = vld [vmem:[%s3 + $0x5c] sm:$0xf]
  %v3799 = vld [vmem:[%s3 + $0x60] sm:$0xf]
  %v3800 = vld [vmem:[%s3 + $0x64] sm:$0xf]
  %v3801 = vld [vmem:[%s3 + $0x68] sm:$0xf]
  %v3802 = vld [vmem:[%s3 + $0x6c] sm:$0xf]
  %v3803 = vld [vmem:[%s3 + $0x70] sm:$0xf]
  %v3804 = vld [vmem:[%s3 + $0x74] sm:$0xf]
  %v3805 = vld [vmem:[%s3 + $0x78] sm:$0xf]
  %v3806 = vld [vmem:[%s3 + $0x7c] sm:$0xf]
  %v3807 = vld [vmem:[%s3 + $0x80] sm:$0xf]
  %v3808 = vld [vmem:[%s3 + $0x84] sm:$0xf]
  %v3809 = vld [vmem:[%s3 + $0x88] sm:$0xf]
  %v3810 = vld [vmem:[%s3 + $0x8c] sm:$0xf]
  %v3811 = vld [vmem:[%s4] sm:$0x1]
  %v3813 = vlaneseq
  %v3814 = vshrl.u32 %v3813, 7
  %v3815 = vsub.s32 0, %v3814
  %v3816 = vrot.slane %v3811, %v3815
  %v3854 = vunpack.c.l.b16 %v3775
  %v3855 = vunpack.c.l.b16 %v3776
  %v3856 = vunpack.c.l.b16 %v3777
  %v3857 = vunpack.c.l.b16 %v3778
  %v3858 = vunpack.c.l.b16 %v3779
  %v3859 = vunpack.c.l.b16 %v3780
  %v3860 = vunpack.c.l.b16 %v3781
  %v3861 = vunpack.c.l.b16 %v3782
  %v3862 = vunpack.c.l.b16 %v3783
  %v3863 = vunpack.c.l.b16 %v3784
  %v3864 = vunpack.c.l.b16 %v3785
  %v3865 = vunpack.c.l.b16 %v3786
  %v3866 = vunpack.c.l.b16 %v3787
  %v3867 = vunpack.c.l.b16 %v3788
  %v3868 = vunpack.c.l.b16 %v3789
  %v3869 = vunpack.c.l.b16 %v3790
  %v3870 = vunpack.c.l.b16 %v3791
  %v3871 = vunpack.c.l.b16 %v3792
  %v3872 = vunpack.c.l.b16 %v3793
  %v3873 = vunpack.c.l.b16 %v3794
  %v3874 = vunpack.c.l.b16 %v3795
  %v3875 = vunpack.c.l.b16 %v3796
  %v3876 = vunpack.c.l.b16 %v3797
  %v3877 = vunpack.c.l.b16 %v3798
  %v3878 = vunpack.c.l.b16 %v3799
  %v3879 = vunpack.c.l.b16 %v3800
  %v3880 = vunpack.c.l.b16 %v3801
  %v3881 = vunpack.c.l.b16 %v3802
  %v3882 = vunpack.c.l.b16 %v3803
  %v3883 = vunpack.c.l.b16 %v3804
  %v3884 = vunpack.c.l.b16 %v3805
  %v3885 = vunpack.c.l.b16 %v3806
  %v3886 = vunpack.c.l.b16 %v3807
  %v3887 = vunpack.c.l.b16 %v3808
  %v3888 = vunpack.c.l.b16 %v3809
  %v3889 = vunpack.c.l.b16 %v3810
  %v3890 = vpack.c.b16 %v3855, %v3854
  %v3891 = vpack.c.b16 %v3857, %v3856
  %v3892 = vpack.c.b16 %v3859, %v3858
  %v3893 = vpack.c.b16 %v3861, %v3860
  %v3894 = vpack.c.b16 %v3863, %v3862
  %v3895 = vpack.c.b16 %v3865, %v3864
  %v3896 = vpack.c.b16 %v3867, %v3866
  %v3897 = vpack.c.b16 %v3869, %v3868
  %v3898 = vpack.c.b16 %v3871, %v3870
  %v3899 = vpack.c.b16 %v3873, %v3872
  %v3900 = vpack.c.b16 %v3875, %v3874
  %v3901 = vpack.c.b16 %v3877, %v3876
  %v3902 = vpack.c.b16 %v3879, %v3878
  %v3903 = vpack.c.b16 %v3881, %v3880
  %v3904 = vpack.c.b16 %v3883, %v3882
  %v3905 = vpack.c.b16 %v3885, %v3884
  %v3906 = vpack.c.b16 %v3887, %v3886
  %v3907 = vpack.c.b16 %v3889, %v3888
  %v3927 = vsel %vm2768, %v3765, 0
  %v3930 = vsel %vm2768, %v3768, 0
  %v3933 = vsel %vm2768, %v3771, 0
  %v3936 = vsel %vm2768, %v3774, 0
  %3938 = vmatprep.subr.bf16.mxu0 0
  %3939 = vmatpush1.bf16.msra.mxu0 %v3897
  %3940 = vmatprep.subr.bf16.mxu0 0
  %3941 = vmatpush1.bf16.msra.mxu0 %v3896
  %3942 = vmatprep.subr.bf16.mxu0 0
  %3943 = vmatpush1.bf16.msra.mxu0 %v3895
  %3944 = vmatprep.subr.bf16.mxu0 0
  %3945 = vmatpush1.bf16.msra.mxu0 %v3894
  %3946 = vmatprep.subr.bf16.mxu0 0
  %3947 = vmatpush1.bf16.msra.mxu0 %v3893
  %3948 = vmatprep.subr.bf16.mxu0 0
  %3949 = vmatpush1.bf16.msra.mxu0 %v3892
  %3950 = vmatprep.subr.bf16.mxu0 0
  %3951 = vmatpush1.bf16.msra.mxu0 %v3891
  %3952 = vmatprep.subr.bf16.mxu0 0
  %3953 = vmatpush1.bf16.msra.mxu0 %v3890
  %3954 = vmatprep.subr.bf16.mxu0 0
  %3955 = vmatpush2.bf16.msra.mxu0 %v3905
  %3956 = vmatprep.subr.bf16.mxu0 0
  %3957 = vmatpush2.bf16.msra.mxu0 %v3904
  %3958 = vmatprep.subr.bf16.mxu0 0
  %3959 = vmatpush2.bf16.msra.mxu0 %v3903
  %3960 = vmatprep.subr.bf16.mxu0 0
  %3961 = vmatpush2.bf16.msra.mxu0 %v3902
  %3962 = vmatprep.subr.bf16.mxu0 0
  %3963 = vmatpush2.bf16.msra.mxu0 %v3901
  %3964 = vmatprep.subr.bf16.mxu0 0
  %3965 = vmatpush2.bf16.msra.mxu0 %v3900
  %3966 = vmatprep.subr.bf16.mxu0 0
  %3967 = vmatpush2.bf16.msra.mxu0 %v3899
  %3968 = vmatprep.subr.bf16.mxu0 0
  %3969 = vmatpush2.bf16.msra.mxu0 %v3898
  %3970 = vmatprep.mubr.bf16.mxu0 %v3764
  %3971 = vmatmul.mubr.bf16.gmra.mxu0 %v3763
  %v3972 = vpop.f32.mrf.mxu0
  %v3973 = vadd.f32 %v3816, %v3972
  %v3974 = vpop.f32.mrf.mxu0
  %v3975 = vpop.f32.mrf.mxu0
  %v3976 = vadd.f32 %v3816, %v3975
  %v3977 = vpop.f32.mrf.mxu0
  %3978 = vmatprep.mubr.bf16.mxu0 %v3767
  %3979 = vmatmul.mubr.bf16.gmra.mxu0 %v3766
  %v3980 = vpop.f32.mrf.mxu0
  %v3981 = vadd.f32 %v3816, %v3980
  %v3982 = vpop.f32.mrf.mxu0
  %v3983 = vpop.f32.mrf.mxu0
  %v3984 = vadd.f32 %v3816, %v3983
  %v3985 = vpop.f32.mrf.mxu0
  %3986 = vmatprep.mubr.bf16.mxu0 %v3770
  %3987 = vmatmul.mubr.bf16.gmra.mxu0 %v3769
  %v3988 = vpop.f32.mrf.mxu0
  %v3989 = vadd.f32 %v3816, %v3988
  %v3990 = vpop.f32.mrf.mxu0
  %v3991 = vpop.f32.mrf.mxu0
  %v3992 = vadd.f32 %v3816, %v3991
  %v3993 = vpop.f32.mrf.mxu0
  %3994 = vmatprep.mubr.bf16.mxu0 %v3773
  %3995 = vmatmul.mubr.bf16.gmra.mxu0 %v3772
  %v3996 = vpop.f32.mrf.mxu0
  %v3997 = vadd.f32 %v3816, %v3996
  %v3998 = vpop.f32.mrf.mxu0
  %v3999 = vpop.f32.mrf.mxu0
  %v4000 = vadd.f32 %v3816, %v3999
  %v4001 = vpop.f32.mrf.mxu0
  %4002 = vdwg.mxu0
  %4003 = vmatprep.subr.bf16.mxu0 0
  %4004 = vmatpush1.bf16.msra.mxu0 0
  %4005 = vmatprep.subr.bf16.mxu0 0
  %4006 = vmatpush1.bf16.msra.mxu0 0
  %4007 = vmatprep.subr.bf16.mxu0 0
  %4008 = vmatpush1.bf16.msra.mxu0 0
  %4009 = vmatprep.subr.bf16.mxu0 0
  %4010 = vmatpush1.bf16.msra.mxu0 0
  %4011 = vmatprep.subr.bf16.mxu0 0
  %4012 = vmatpush1.bf16.msra.mxu0 0
  %4013 = vmatprep.subr.bf16.mxu0 0
  %4014 = vmatpush1.bf16.msra.mxu0 0
  %4015 = vmatprep.subr.bf16.mxu0 0
  %4016 = vmatpush1.bf16.msra.mxu0 %v3907
  %4017 = vmatprep.subr.bf16.mxu0 0
  %4018 = vmatpush1.bf16.msra.mxu0 %v3906
  %4019 = vmatprep.subr.bf16.mxu0 0
  %4020 = vmatpush2.bf16.msra.mxu0 0
  %4021 = vmatprep.subr.bf16.mxu0 0
  %4022 = vmatpush2.bf16.msra.mxu0 0
  %4023 = vmatprep.subr.bf16.mxu0 0
  %4024 = vmatpush2.bf16.msra.mxu0 0
  %4025 = vmatprep.subr.bf16.mxu0 0
  %4026 = vmatpush2.bf16.msra.mxu0 0
  %4027 = vmatprep.subr.bf16.mxu0 0
  %4028 = vmatpush2.bf16.msra.mxu0 0
  %4029 = vmatprep.subr.bf16.mxu0 0
  %4030 = vmatpush2.bf16.msra.mxu0 0
  %4031 = vmatprep.subr.bf16.mxu0 0
  %4032 = vmatpush2.bf16.msra.mxu0 0
  %4033 = vmatprep.subr.bf16.mxu0 0
  %4034 = vmatpush2.bf16.msra.mxu0 0
  %4035 = vmatprep.mubr.bf16.mxu0 0
  %4036 = vmatmul.mubr.bf16.gmra.mxu0 %v3927
  %v4037 = vpop.f32.mrf.mxu0
  %v4038 = vadd.f32 %v3973, %v4037
  %v4039 = vpop.f32.mrf.mxu0
  %v4040 = vpop.f32.mrf.mxu0
  %v4041 = vadd.f32 %v3976, %v4040
  %v4042 = vpop.f32.mrf.mxu0
  %4043 = vmatprep.mubr.bf16.mxu0 0
  %4044 = vmatmul.mubr.bf16.gmra.mxu0 %v3930
  %v4045 = vpop.f32.mrf.mxu0
  %v4046 = vadd.f32 %v3981, %v4045
  %v4047 = vpop.f32.mrf.mxu0
  %v4048 = vpop.f32.mrf.mxu0
  %v4049 = vadd.f32 %v3984, %v4048
  %v4050 = vpop.f32.mrf.mxu0
  %4051 = vmatprep.mubr.bf16.mxu0 0
  %4052 = vmatmul.mubr.bf16.gmra.mxu0 %v3933
  %v4053 = vpop.f32.mrf.mxu0
  %v4054 = vadd.f32 %v3989, %v4053
  %v4055 = vpop.f32.mrf.mxu0
  %v4056 = vpop.f32.mrf.mxu0
  %v4057 = vadd.f32 %v3992, %v4056
  %v4058 = vpop.f32.mrf.mxu0
  %4059 = vmatprep.mubr.bf16.mxu0 0
  %4060 = vmatmul.mubr.bf16.gmra.mxu0 %v3936
  %v4061 = vpop.f32.mrf.mxu0
  %v4062 = vadd.f32 %v3997, %v4061
  %v4063 = vpop.f32.mrf.mxu0
  %v4064 = vpop.f32.mrf.mxu0
  %v4065 = vadd.f32 %v4000, %v4064
  %v4066 = vpop.f32.mrf.mxu0
  %4067 = vdwg.mxu0
  %v4068 = vmax.f32 %v4038, 0.0
  %v4069 = vmax.f32 %v4041, 0.0
  %v4070 = vmax.f32 %v4046, 0.0
  %v4071 = vmax.f32 %v4049, 0.0
  %v4072 = vmax.f32 %v4054, 0.0
  %v4073 = vmax.f32 %v4057, 0.0
  %v4074 = vmax.f32 %v4062, 0.0
  %v4075 = vmax.f32 %v4065, 0.0
  %v4080 = vrot.slane %v4070, 7
  %vm4081 = vcmask 1041409
  %v4082 = vsel %vm4081, %v4080, %v4068
  %v4083 = vrot.slane %v4072, 6
  %vm4084 = vcmask 1042434
  %v4085 = vsel %vm4084, %v4083, %v4082
  %v4086 = vrot.slane %v4074, 5
  %vm4087 = vcmask 1043459
  %v4088 = vsel %vm4087, %v4086, %v4085
  %v4090 = vrot.slane %v4068, 1
  %v4091 = vsel %vm4081, %v4070, %v4090
  %v4092 = vrot.slane %v4072, 7
  %v4093 = vsel %vm4084, %v4092, %v4091
  %v4094 = vrot.slane %v4074, 6
  %v4095 = vsel %vm4087, %v4094, %v4093
  %4096 = vrot.lane.b32.xlu0 %v4095, 64
  %v4097 = vpop.permute.xlu0 %4096
  %v4099 = vrot.slane %v4068, 2
  %v4100 = vrot.slane %v4070, 1
  %v4101 = vsel %vm4081, %v4100, %v4099
  %v4102 = vsel %vm4084, %v4072, %v4101
  %v4103 = vrot.slane %v4074, 7
  %v4104 = vsel %vm4087, %v4103, %v4102
  %v4106 = vrot.slane %v4068, 3
  %v4107 = vrot.slane %v4070, 2
  %v4108 = vsel %vm4081, %v4107, %v4106
  %v4109 = vrot.slane %v4072, 1
  %v4110 = vsel %vm4084, %v4109, %v4108
  %v4111 = vsel %vm4087, %v4074, %v4110
  %4112 = vrot.lane.b32.xlu0 %v4111, 64
  %v4113 = vpop.permute.xlu0 %4112
  %v4115 = vrot.slane %v4068, 4
  %v4116 = vrot.slane %v4070, 3
  %v4117 = vsel %vm4081, %v4116, %v4115
  %v4118 = vrot.slane %v4072, 2
  %v4119 = vsel %vm4084, %v4118, %v4117
  %v4120 = vrot.slane %v4074, 1
  %v4121 = vsel %vm4087, %v4120, %v4119
  %v4123 = vrot.slane %v4068, 5
  %v4124 = vrot.slane %v4070, 4
  %v4125 = vsel %vm4081, %v4124, %v4123
  %v4126 = vrot.slane %v4072, 3
  %v4127 = vsel %vm4084, %v4126, %v4125
  %v4128 = vrot.slane %v4074, 2
  %v4129 = vsel %vm4087, %v4128, %v4127
  %4130 = vrot.lane.b32.xlu0 %v4129, 64
  %v4131 = vpop.permute.xlu0 %4130
  %v4133 = vrot.slane %v4068, 6
  %v4134 = vrot.slane %v4070, 5
  %v4135 = vsel %vm4081, %v4134, %v4133
  %v4136 = vrot.slane %v4072, 4
  %v4137 = vsel %vm4084, %v4136, %v4135
  %v4138 = vrot.slane %v4074, 3
  %v4139 = vsel %vm4087, %v4138, %v4137
  %v4141 = vrot.slane %v4068, 7
  %v4142 = vrot.slane %v4070, 6
  %v4143 = vsel %vm4081, %v4142, %v4141
  %v4144 = vrot.slane %v4072, 5
  %v4145 = vsel %vm4084, %v4144, %v4143
  %v4146 = vrot.slane %v4074, 4
  %v4147 = vsel %vm4087, %v4146, %v4145
  %4148 = vrot.lane.b32.xlu0 %v4147, 64
  %v4149 = vpop.permute.xlu0 %4148
  %v4155 = vrot.slane %v4071, 7
  %v4156 = vsel %vm4081, %v4155, %v4069
  %v4157 = vrot.slane %v4073, 6
  %v4158 = vsel %vm4084, %v4157, %v4156
  %v4159 = vrot.slane %v4075, 5
  %v4160 = vsel %vm4087, %v4159, %v4158
  %v4162 = vrot.slane %v4069, 1
  %v4163 = vsel %vm4081, %v4071, %v4162
  %v4164 = vrot.slane %v4073, 7
  %v4165 = vsel %vm4084, %v4164, %v4163
  %v4166 = vrot.slane %v4075, 6
  %v4167 = vsel %vm4087, %v4166, %v4165
  %4168 = vrot.lane.b32.xlu0 %v4167, 64
  %v4169 = vpop.permute.xlu0 %4168
  %v4171 = vrot.slane %v4069, 2
  %v4172 = vrot.slane %v4071, 1
  %v4173 = vsel %vm4081, %v4172, %v4171
  %v4174 = vsel %vm4084, %v4073, %v4173
  %v4175 = vrot.slane %v4075, 7
  %v4176 = vsel %vm4087, %v4175, %v4174
  %v4178 = vrot.slane %v4069, 3
  %v4179 = vrot.slane %v4071, 2
  %v4180 = vsel %vm4081, %v4179, %v4178
  %v4181 = vrot.slane %v4073, 1
  %v4182 = vsel %vm4084, %v4181, %v4180
  %v4183 = vsel %vm4087, %v4075, %v4182
  %4184 = vrot.lane.b32.xlu0 %v4183, 64
  %v4185 = vpop.permute.xlu0 %4184
  %v4187 = vrot.slane %v4069, 4
  %v4188 = vrot.slane %v4071, 3
  %v4189 = vsel %vm4081, %v4188, %v4187
  %v4190 = vrot.slane %v4073, 2
  %v4191 = vsel %vm4084, %v4190, %v4189
  %v4192 = vrot.slane %v4075, 1
  %v4193 = vsel %vm4087, %v4192, %v4191
  %v4195 = vrot.slane %v4069, 5
  %v4196 = vrot.slane %v4071, 4
  %v4197 = vsel %vm4081, %v4196, %v4195
  %v4198 = vrot.slane %v4073, 3
  %v4199 = vsel %vm4084, %v4198, %v4197
  %v4200 = vrot.slane %v4075, 2
  %v4201 = vsel %vm4087, %v4200, %v4199
  %4202 = vrot.lane.b32.xlu0 %v4201, 64
  %v4203 = vpop.permute.xlu0 %4202
  %v4205 = vrot.slane %v4069, 6
  %v4206 = vrot.slane %v4071, 5
  %v4207 = vsel %vm4081, %v4206, %v4205
  %v4208 = vrot.slane %v4073, 4
  %v4209 = vsel %vm4084, %v4208, %v4207
  %v4210 = vrot.slane %v4075, 3
  %v4211 = vsel %vm4087, %v4210, %v4209
  %v4213 = vrot.slane %v4069, 7
  %v4214 = vrot.slane %v4071, 6
  %v4215 = vsel %vm4081, %v4214, %v4213
  %v4216 = vrot.slane %v4073, 5
  %v4217 = vsel %vm4084, %v4216, %v4215
  %v4218 = vrot.slane %v4075, 4
  %v4219 = vsel %vm4087, %v4218, %v4217
  %4220 = vrot.lane.b32.xlu0 %v4219, 64
  %v4221 = vpop.permute.xlu0 %4220
  %v4223 = vsel %vm3569, %v4088, %v4097
  %v4224 = vsel %vm3569, %v4104, %v4113
  %v4225 = vsel %vm3569, %v4121, %v4131
  %v4226 = vsel %vm3569, %v4139, %v4149
  %v4227 = vsel %vm3569, %v4160, %v4169
  %v4228 = vsel %vm3569, %v4176, %v4185
  %v4229 = vsel %vm3569, %v4193, %v4203
  %v4230 = vsel %vm3569, %v4211, %v4221
  %v4231 = vpack.c.bf16 %v4223, %v4223
  %v4232 = vpack.c.bf16 %v4224, %v4224
  %v4233 = vpack.c.bf16 %v4225, %v4225
  %v4234 = vpack.c.bf16 %v4226, %v4226
  %v4235 = vpack.c.bf16 %v4227, %v4227
  %v4236 = vpack.c.bf16 %v4228, %v4228
  %v4237 = vpack.c.bf16 %v4229, %v4229
  %v4238 = vpack.c.bf16 %v4230, %v4230
  %v4239 = vld [vmem:[%s5] sm:$0xf]
  %v4240 = vld [vmem:[%s5 + $0x4] sm:$0xf]
  %v4241 = vld [vmem:[%s5 + $0x8] sm:$0xf]
  %v4242 = vld [vmem:[%s5 + $0xc] sm:$0xf]
  %v4243 = vld [vmem:[%s5 + $0x10] sm:$0xf]
  %v4244 = vld [vmem:[%s5 + $0x14] sm:$0xf]
  %v4245 = vld [vmem:[%s5 + $0x18] sm:$0xf]
  %v4246 = vld [vmem:[%s5 + $0x1c] sm:$0xf]
  %v4247 = vld [vmem:[%s5 + $0x20] sm:$0xf]
  %v4248 = vld [vmem:[%s5 + $0x24] sm:$0xf]
  %v4249 = vld [vmem:[%s5 + $0x28] sm:$0xf]
  %v4250 = vld [vmem:[%s5 + $0x2c] sm:$0xf]
  %v4251 = vld [vmem:[%s5 + $0x30] sm:$0xf]
  %v4252 = vld [vmem:[%s5 + $0x34] sm:$0xf]
  %v4253 = vld [vmem:[%s5 + $0x38] sm:$0xf]
  %v4254 = vld [vmem:[%s5 + $0x3c] sm:$0xf]
  %v4255 = vld [vmem:[%s5 + $0x40] sm:$0xf]
  %v4256 = vld [vmem:[%s5 + $0x44] sm:$0xf]
  %v4257 = vld [vmem:[%s5 + $0x48] sm:$0xf]
  %v4258 = vld [vmem:[%s5 + $0x4c] sm:$0xf]
  %v4259 = vld [vmem:[%s5 + $0x50] sm:$0xf]
  %v4260 = vld [vmem:[%s5 + $0x54] sm:$0xf]
  %v4261 = vld [vmem:[%s5 + $0x58] sm:$0xf]
  %v4262 = vld [vmem:[%s5 + $0x5c] sm:$0xf]
  %v4263 = vld [vmem:[%s5 + $0x60] sm:$0xf]
  %v4264 = vld [vmem:[%s5 + $0x64] sm:$0xf]
  %v4265 = vld [vmem:[%s5 + $0x68] sm:$0xf]
  %v4266 = vld [vmem:[%s5 + $0x6c] sm:$0xf]
  %v4267 = vld [vmem:[%s5 + $0x70] sm:$0xf]
  %v4268 = vld [vmem:[%s5 + $0x74] sm:$0xf]
  %v4269 = vld [vmem:[%s5 + $0x78] sm:$0xf]
  %v4270 = vld [vmem:[%s5 + $0x7c] sm:$0xf]
  %v4271 = vld [vmem:[%s5 + $0x80] sm:$0xf]
  %v4272 = vld [vmem:[%s5 + $0x84] sm:$0xf]
  %v4273 = vld [vmem:[%s5 + $0x88] sm:$0xf]
  %v4274 = vld [vmem:[%s5 + $0x8c] sm:$0xf]
  %v4275 = vld [vmem:[%s5 + $0x90] sm:$0xf]
  %v4276 = vld [vmem:[%s5 + $0x94] sm:$0xf]
  %v4277 = vld [vmem:[%s5 + $0x98] sm:$0xf]
  %v4278 = vld [vmem:[%s5 + $0x9c] sm:$0xf]
  %v4279 = vld [vmem:[%s5 + $0xa0] sm:$0xf]
  %v4280 = vld [vmem:[%s5 + $0xa4] sm:$0xf]
  %v4281 = vld [vmem:[%s5 + $0xa8] sm:$0xf]
  %v4282 = vld [vmem:[%s5 + $0xac] sm:$0xf]
  %v4283 = vld [vmem:[%s5 + $0xb0] sm:$0xf]
  %v4284 = vld [vmem:[%s5 + $0xb4] sm:$0xf]
  %v4285 = vld [vmem:[%s5 + $0xb8] sm:$0xf]
  %v4286 = vld [vmem:[%s5 + $0xbc] sm:$0xf]
  %v4287 = vld [vmem:[%s5 + $0xc0] sm:$0xf]
  %v4288 = vld [vmem:[%s5 + $0xc4] sm:$0xf]
  %v4289 = vld [vmem:[%s5 + $0xc8] sm:$0xf]
  %v4290 = vld [vmem:[%s5 + $0xcc] sm:$0xf]
  %v4291 = vld [vmem:[%s5 + $0xd0] sm:$0xf]
  %v4292 = vld [vmem:[%s5 + $0xd4] sm:$0xf]
  %v4293 = vld [vmem:[%s5 + $0xd8] sm:$0xf]
  %v4294 = vld [vmem:[%s5 + $0xdc] sm:$0xf]
  %v4295 = vld [vmem:[%s5 + $0xe0] sm:$0xf]
  %v4296 = vld [vmem:[%s5 + $0xe4] sm:$0xf]
  %v4297 = vld [vmem:[%s5 + $0xe8] sm:$0xf]
  %v4298 = vld [vmem:[%s5 + $0xec] sm:$0xf]
  %v4299 = vld [vmem:[%s5 + $0xf0] sm:$0xf]
  %v4300 = vld [vmem:[%s5 + $0xf4] sm:$0xf]
  %v4301 = vld [vmem:[%s5 + $0xf8] sm:$0xf]
  %v4302 = vld [vmem:[%s5 + $0xfc] sm:$0xf]
  %v4303 = vld [vmem:[%s5 + $0x100] sm:$0xf]
  %v4304 = vld [vmem:[%s5 + $0x104] sm:$0xf]
  %v4305 = vld [vmem:[%s5 + $0x108] sm:$0xf]
  %v4306 = vld [vmem:[%s5 + $0x10c] sm:$0xf]
  %v4307 = vld [vmem:[%s5 + $0x110] sm:$0xf]
  %v4308 = vld [vmem:[%s5 + $0x114] sm:$0xf]
  %v4309 = vld [vmem:[%s5 + $0x118] sm:$0xf]
  %v4310 = vld [vmem:[%s5 + $0x11c] sm:$0xf]
  %v4311 = vld [vmem:[%s5 + $0x120] sm:$0xf]
  %v4312 = vld [vmem:[%s5 + $0x124] sm:$0xf]
  %v4313 = vld [vmem:[%s5 + $0x128] sm:$0xf]
  %v4314 = vld [vmem:[%s5 + $0x12c] sm:$0xf]
  %v4315 = vld [vmem:[%s5 + $0x130] sm:$0xf]
  %v4316 = vld [vmem:[%s5 + $0x134] sm:$0xf]
  %v4317 = vld [vmem:[%s5 + $0x138] sm:$0xf]
  %v4318 = vld [vmem:[%s5 + $0x13c] sm:$0xf]
  %v4319 = vld [vmem:[%s5 + $0x140] sm:$0xf]
  %v4320 = vld [vmem:[%s5 + $0x144] sm:$0xf]
  %v4321 = vld [vmem:[%s5 + $0x148] sm:$0xf]
  %v4322 = vld [vmem:[%s5 + $0x14c] sm:$0xf]
  %v4323 = vld [vmem:[%s5 + $0x150] sm:$0xf]
  %v4324 = vld [vmem:[%s5 + $0x154] sm:$0xf]
  %v4325 = vld [vmem:[%s5 + $0x158] sm:$0xf]
  %v4326 = vld [vmem:[%s5 + $0x15c] sm:$0xf]
  %v4327 = vld [vmem:[%s5 + $0x160] sm:$0xf]
  %v4328 = vld [vmem:[%s5 + $0x164] sm:$0xf]
  %v4329 = vld [vmem:[%s5 + $0x168] sm:$0xf]
  %v4330 = vld [vmem:[%s5 + $0x16c] sm:$0xf]
  %v4331 = vld [vmem:[%s5 + $0x170] sm:$0xf]
  %v4332 = vld [vmem:[%s5 + $0x174] sm:$0xf]
  %v4333 = vld [vmem:[%s5 + $0x178] sm:$0xf]
  %v4334 = vld [vmem:[%s5 + $0x17c] sm:$0xf]
  %v4335 = vld [vmem:[%s5 + $0x180] sm:$0xf]
  %v4336 = vld [vmem:[%s5 + $0x184] sm:$0xf]
  %v4337 = vld [vmem:[%s5 + $0x188] sm:$0xf]
  %v4338 = vld [vmem:[%s5 + $0x18c] sm:$0xf]
  %v4339 = vld [vmem:[%s5 + $0x190] sm:$0xf]
  %v4340 = vld [vmem:[%s5 + $0x194] sm:$0xf]
  %v4341 = vld [vmem:[%s5 + $0x198] sm:$0xf]
  %v4342 = vld [vmem:[%s5 + $0x19c] sm:$0xf]
  %v4343 = vld [vmem:[%s5 + $0x1a0] sm:$0xf]
  %v4344 = vld [vmem:[%s5 + $0x1a4] sm:$0xf]
  %v4345 = vld [vmem:[%s5 + $0x1a8] sm:$0xf]
  %v4346 = vld [vmem:[%s5 + $0x1ac] sm:$0xf]
  %v4347 = vld [vmem:[%s5 + $0x1b0] sm:$0xf]
  %v4348 = vld [vmem:[%s5 + $0x1b4] sm:$0xf]
  %v4349 = vld [vmem:[%s5 + $0x1b8] sm:$0xf]
  %v4350 = vld [vmem:[%s5 + $0x1bc] sm:$0xf]
  %v4351 = vld [vmem:[%s5 + $0x1c0] sm:$0xf]
  %v4352 = vld [vmem:[%s5 + $0x1c4] sm:$0xf]
  %v4353 = vld [vmem:[%s5 + $0x1c8] sm:$0xf]
  %v4354 = vld [vmem:[%s5 + $0x1cc] sm:$0xf]
  %v4355 = vld [vmem:[%s5 + $0x1d0] sm:$0xf]
  %v4356 = vld [vmem:[%s5 + $0x1d4] sm:$0xf]
  %v4357 = vld [vmem:[%s5 + $0x1d8] sm:$0xf]
  %v4358 = vld [vmem:[%s5 + $0x1dc] sm:$0xf]
  %v4359 = vld [vmem:[%s5 + $0x1e0] sm:$0xf]
  %v4360 = vld [vmem:[%s5 + $0x1e4] sm:$0xf]
  %v4361 = vld [vmem:[%s5 + $0x1e8] sm:$0xf]
  %v4362 = vld [vmem:[%s5 + $0x1ec] sm:$0xf]
  %v4363 = vld [vmem:[%s5 + $0x1f0] sm:$0xf]
  %v4364 = vld [vmem:[%s5 + $0x1f4] sm:$0xf]
  %v4365 = vld [vmem:[%s5 + $0x1f8] sm:$0xf]
  %v4366 = vld [vmem:[%s5 + $0x1fc] sm:$0xf]
  %v4367 = vld [vmem:[%s6] sm:$0x1]
  %v4369 = vlaneseq
  %v4370 = vshrl.u32 %v4369, 7
  %v4371 = vsub.s32 0, %v4370
  %v4372 = vrot.slane %v4367, %v4371
  %v4502 = vunpack.c.l.b16 %v4239
  %v4503 = vunpack.c.l.b16 %v4240
  %v4504 = vunpack.c.l.b16 %v4241
  %v4505 = vunpack.c.l.b16 %v4242
  %v4506 = vunpack.c.l.b16 %v4243
  %v4507 = vunpack.c.l.b16 %v4244
  %v4508 = vunpack.c.l.b16 %v4245
  %v4509 = vunpack.c.l.b16 %v4246
  %v4510 = vunpack.c.l.b16 %v4247
  %v4511 = vunpack.c.l.b16 %v4248
  %v4512 = vunpack.c.l.b16 %v4249
  %v4513 = vunpack.c.l.b16 %v4250
  %v4514 = vunpack.c.l.b16 %v4251
  %v4515 = vunpack.c.l.b16 %v4252
  %v4516 = vunpack.c.l.b16 %v4253
  %v4517 = vunpack.c.l.b16 %v4254
  %v4518 = vunpack.c.l.b16 %v4255
  %v4519 = vunpack.c.l.b16 %v4256
  %v4520 = vunpack.c.l.b16 %v4257
  %v4521 = vunpack.c.l.b16 %v4258
  %v4522 = vunpack.c.l.b16 %v4259
  %v4523 = vunpack.c.l.b16 %v4260
  %v4524 = vunpack.c.l.b16 %v4261
  %v4525 = vunpack.c.l.b16 %v4262
  %v4526 = vunpack.c.l.b16 %v4263
  %v4527 = vunpack.c.l.b16 %v4264
  %v4528 = vunpack.c.l.b16 %v4265
  %v4529 = vunpack.c.l.b16 %v4266
  %v4530 = vunpack.c.l.b16 %v4267
  %v4531 = vunpack.c.l.b16 %v4268
  %v4532 = vunpack.c.l.b16 %v4269
  %v4533 = vunpack.c.l.b16 %v4270
  %v4534 = vunpack.c.l.b16 %v4271
  %v4535 = vunpack.c.l.b16 %v4272
  %v4536 = vunpack.c.l.b16 %v4273
  %v4537 = vunpack.c.l.b16 %v4274
  %v4538 = vunpack.c.l.b16 %v4275
  %v4539 = vunpack.c.l.b16 %v4276
  %v4540 = vunpack.c.l.b16 %v4277
  %v4541 = vunpack.c.l.b16 %v4278
  %v4542 = vunpack.c.l.b16 %v4279
  %v4543 = vunpack.c.l.b16 %v4280
  %v4544 = vunpack.c.l.b16 %v4281
  %v4545 = vunpack.c.l.b16 %v4282
  %v4546 = vunpack.c.l.b16 %v4283
  %v4547 = vunpack.c.l.b16 %v4284
  %v4548 = vunpack.c.l.b16 %v4285
  %v4549 = vunpack.c.l.b16 %v4286
  %v4550 = vunpack.c.l.b16 %v4287
  %v4551 = vunpack.c.l.b16 %v4288
  %v4552 = vunpack.c.l.b16 %v4289
  %v4553 = vunpack.c.l.b16 %v4290
  %v4554 = vunpack.c.l.b16 %v4291
  %v4555 = vunpack.c.l.b16 %v4292
  %v4556 = vunpack.c.l.b16 %v4293
  %v4557 = vunpack.c.l.b16 %v4294
  %v4558 = vunpack.c.l.b16 %v4295
  %v4559 = vunpack.c.l.b16 %v4296
  %v4560 = vunpack.c.l.b16 %v4297
  %v4561 = vunpack.c.l.b16 %v4298
  %v4562 = vunpack.c.l.b16 %v4299
  %v4563 = vunpack.c.l.b16 %v4300
  %v4564 = vunpack.c.l.b16 %v4301
  %v4565 = vunpack.c.l.b16 %v4302
  %v4566 = vunpack.c.l.b16 %v4303
  %v4567 = vunpack.c.l.b16 %v4304
  %v4568 = vunpack.c.l.b16 %v4305
  %v4569 = vunpack.c.l.b16 %v4306
  %v4570 = vunpack.c.l.b16 %v4307
  %v4571 = vunpack.c.l.b16 %v4308
  %v4572 = vunpack.c.l.b16 %v4309
  %v4573 = vunpack.c.l.b16 %v4310
  %v4574 = vunpack.c.l.b16 %v4311
  %v4575 = vunpack.c.l.b16 %v4312
  %v4576 = vunpack.c.l.b16 %v4313
  %v4577 = vunpack.c.l.b16 %v4314
  %v4578 = vunpack.c.l.b16 %v4315
  %v4579 = vunpack.c.l.b16 %v4316
  %v4580 = vunpack.c.l.b16 %v4317
  %v4581 = vunpack.c.l.b16 %v4318
  %v4582 = vunpack.c.l.b16 %v4319
  %v4583 = vunpack.c.l.b16 %v4320
  %v4584 = vunpack.c.l.b16 %v4321
  %v4585 = vunpack.c.l.b16 %v4322
  %v4586 = vunpack.c.l.b16 %v4323
  %v4587 = vunpack.c.l.b16 %v4324
  %v4588 = vunpack.c.l.b16 %v4325
  %v4589 = vunpack.c.l.b16 %v4326
  %v4590 = vunpack.c.l.b16 %v4327
  %v4591 = vunpack.c.l.b16 %v4328
  %v4592 = vunpack.c.l.b16 %v4329
  %v4593 = vunpack.c.l.b16 %v4330
  %v4594 = vunpack.c.l.b16 %v4331
  %v4595 = vunpack.c.l.b16 %v4332
  %v4596 = vunpack.c.l.b16 %v4333
  %v4597 = vunpack.c.l.b16 %v4334
  %v4598 = vunpack.c.l.b16 %v4335
  %v4599 = vunpack.c.l.b16 %v4336
  %v4600 = vunpack.c.l.b16 %v4337
  %v4601 = vunpack.c.l.b16 %v4338
  %v4602 = vunpack.c.l.b16 %v4339
  %v4603 = vunpack.c.l.b16 %v4340
  %v4604 = vunpack.c.l.b16 %v4341
  %v4605 = vunpack.c.l.b16 %v4342
  %v4606 = vunpack.c.l.b16 %v4343
  %v4607 = vunpack.c.l.b16 %v4344
  %v4608 = vunpack.c.l.b16 %v4345
  %v4609 = vunpack.c.l.b16 %v4346
  %v4610 = vunpack.c.l.b16 %v4347
  %v4611 = vunpack.c.l.b16 %v4348
  %v4612 = vunpack.c.l.b16 %v4349
  %v4613 = vunpack.c.l.b16 %v4350
  %v4614 = vunpack.c.l.b16 %v4351
  %v4615 = vunpack.c.l.b16 %v4352
  %v4616 = vunpack.c.l.b16 %v4353
  %v4617 = vunpack.c.l.b16 %v4354
  %v4618 = vunpack.c.l.b16 %v4355
  %v4619 = vunpack.c.l.b16 %v4356
  %v4620 = vunpack.c.l.b16 %v4357
  %v4621 = vunpack.c.l.b16 %v4358
  %v4622 = vunpack.c.l.b16 %v4359
  %v4623 = vunpack.c.l.b16 %v4360
  %v4624 = vunpack.c.l.b16 %v4361
  %v4625 = vunpack.c.l.b16 %v4362
  %v4626 = vunpack.c.l.b16 %v4363
  %v4627 = vunpack.c.l.b16 %v4364
  %v4628 = vunpack.c.l.b16 %v4365
  %v4629 = vunpack.c.l.b16 %v4366
  %v4630 = vpack.c.b16 %v4503, %v4502
  %v4631 = vpack.c.b16 %v4505, %v4504
  %v4632 = vpack.c.b16 %v4507, %v4506
  %v4633 = vpack.c.b16 %v4509, %v4508
  %v4634 = vpack.c.b16 %v4511, %v4510
  %v4635 = vpack.c.b16 %v4513, %v4512
  %v4636 = vpack.c.b16 %v4515, %v4514
  %v4637 = vpack.c.b16 %v4517, %v4516
  %v4638 = vpack.c.b16 %v4519, %v4518
  %v4639 = vpack.c.b16 %v4521, %v4520
  %v4640 = vpack.c.b16 %v4523, %v4522
  %v4641 = vpack.c.b16 %v4525, %v4524
  %v4642 = vpack.c.b16 %v4527, %v4526
  %v4643 = vpack.c.b16 %v4529, %v4528
  %v4644 = vpack.c.b16 %v4531, %v4530
  %v4645 = vpack.c.b16 %v4533, %v4532
  %v4646 = vpack.c.b16 %v4535, %v4534
  %v4647 = vpack.c.b16 %v4537, %v4536
  %v4648 = vpack.c.b16 %v4539, %v4538
  %v4649 = vpack.c.b16 %v4541, %v4540
  %v4650 = vpack.c.b16 %v4543, %v4542
  %v4651 = vpack.c.b16 %v4545, %v4544
  %v4652 = vpack.c.b16 %v4547, %v4546
  %v4653 = vpack.c.b16 %v4549, %v4548
  %v4654 = vpack.c.b16 %v4551, %v4550
  %v4655 = vpack.c.b16 %v4553, %v4552
  %v4656 = vpack.c.b16 %v4555, %v4554
  %v4657 = vpack.c.b16 %v4557, %v4556
  %v4658 = vpack.c.b16 %v4559, %v4558
  %v4659 = vpack.c.b16 %v4561, %v4560
  %v4660 = vpack.c.b16 %v4563, %v4562
  %v4661 = vpack.c.b16 %v4565, %v4564
  %v4662 = vpack.c.b16 %v4567, %v4566
  %v4663 = vpack.c.b16 %v4569, %v4568
  %v4664 = vpack.c.b16 %v4571, %v4570
  %v4665 = vpack.c.b16 %v4573, %v4572
  %v4666 = vpack.c.b16 %v4575, %v4574
  %v4667 = vpack.c.b16 %v4577, %v4576
  %v4668 = vpack.c.b16 %v4579, %v4578
  %v4669 = vpack.c.b16 %v4581, %v4580
  %v4670 = vpack.c.b16 %v4583, %v4582
  %v4671 = vpack.c.b16 %v4585, %v4584
  %v4672 = vpack.c.b16 %v4587, %v4586
  %v4673 = vpack.c.b16 %v4589, %v4588
  %v4674 = vpack.c.b16 %v4591, %v4590
  %v4675 = vpack.c.b16 %v4593, %v4592
  %v4676 = vpack.c.b16 %v4595, %v4594
  %v4677 = vpack.c.b16 %v4597, %v4596
  %v4678 = vpack.c.b16 %v4599, %v4598
  %v4679 = vpack.c.b16 %v4601, %v4600
  %v4680 = vpack.c.b16 %v4603, %v4602
  %v4681 = vpack.c.b16 %v4605, %v4604
  %v4682 = vpack.c.b16 %v4607, %v4606
  %v4683 = vpack.c.b16 %v4609, %v4608
  %v4684 = vpack.c.b16 %v4611, %v4610
  %v4685 = vpack.c.b16 %v4613, %v4612
  %v4686 = vpack.c.b16 %v4615, %v4614
  %v4687 = vpack.c.b16 %v4617, %v4616
  %v4688 = vpack.c.b16 %v4619, %v4618
  %v4689 = vpack.c.b16 %v4621, %v4620
  %v4690 = vpack.c.b16 %v4623, %v4622
  %v4691 = vpack.c.b16 %v4625, %v4624
  %v4692 = vpack.c.b16 %v4627, %v4626
  %v4693 = vpack.c.b16 %v4629, %v4628
  %4758 = vmatprep.subr.bf16.mxu0 0
  %4759 = vmatpush1.bf16.msra.mxu0 %v4637
  %4760 = vmatprep.subr.bf16.mxu0 0
  %4761 = vmatpush1.bf16.msra.mxu0 %v4636
  %4762 = vmatprep.subr.bf16.mxu0 0
  %4763 = vmatpush1.bf16.msra.mxu0 %v4635
  %4764 = vmatprep.subr.bf16.mxu0 0
  %4765 = vmatpush1.bf16.msra.mxu0 %v4634
  %4766 = vmatprep.subr.bf16.mxu0 0
  %4767 = vmatpush1.bf16.msra.mxu0 %v4633
  %4768 = vmatprep.subr.bf16.mxu0 0
  %4769 = vmatpush1.bf16.msra.mxu0 %v4632
  %4770 = vmatprep.subr.bf16.mxu0 0
  %4771 = vmatpush1.bf16.msra.mxu0 %v4631
  %4772 = vmatprep.subr.bf16.mxu0 0
  %4773 = vmatpush1.bf16.msra.mxu0 %v4630
  %4774 = vmatprep.subr.bf16.mxu0 0
  %4775 = vmatpush2.bf16.msra.mxu0 %v4645
  %4776 = vmatprep.subr.bf16.mxu0 0
  %4777 = vmatpush2.bf16.msra.mxu0 %v4644
  %4778 = vmatprep.subr.bf16.mxu0 0
  %4779 = vmatpush2.bf16.msra.mxu0 %v4643
  %4780 = vmatprep.subr.bf16.mxu0 0
  %4781 = vmatpush2.bf16.msra.mxu0 %v4642
  %4782 = vmatprep.subr.bf16.mxu0 0
  %4783 = vmatpush2.bf16.msra.mxu0 %v4641
  %4784 = vmatprep.subr.bf16.mxu0 0
  %4785 = vmatpush2.bf16.msra.mxu0 %v4640
  %4786 = vmatprep.subr.bf16.mxu0 0
  %4787 = vmatpush2.bf16.msra.mxu0 %v4639
  %4788 = vmatprep.subr.bf16.mxu0 0
  %4789 = vmatpush2.bf16.msra.mxu0 %v4638
  %4790 = vmatprep.mubr.bf16.mxu0 %v4232
  %4791 = vmatmul.mubr.bf16.gmra.mxu0 %v4231
  %v4792 = vpop.f32.mrf.mxu0
  %v4793 = vadd.f32 %v4372, %v4792
  %v4794 = vpop.f32.mrf.mxu0
  %v4795 = vpop.f32.mrf.mxu0
  %v4796 = vpop.f32.mrf.mxu0
  %4797 = vdwg.mxu0
  %4798 = vmatprep.subr.bf16.mxu0 0
  %4799 = vmatpush1.bf16.msra.mxu0 %v4653
  %4800 = vmatprep.subr.bf16.mxu0 0
  %4801 = vmatpush1.bf16.msra.mxu0 %v4652
  %4802 = vmatprep.subr.bf16.mxu0 0
  %4803 = vmatpush1.bf16.msra.mxu0 %v4651
  %4804 = vmatprep.subr.bf16.mxu0 0
  %4805 = vmatpush1.bf16.msra.mxu0 %v4650
  %4806 = vmatprep.subr.bf16.mxu0 0
  %4807 = vmatpush1.bf16.msra.mxu0 %v4649
  %4808 = vmatprep.subr.bf16.mxu0 0
  %4809 = vmatpush1.bf16.msra.mxu0 %v4648
  %4810 = vmatprep.subr.bf16.mxu0 0
  %4811 = vmatpush1.bf16.msra.mxu0 %v4647
  %4812 = vmatprep.subr.bf16.mxu0 0
  %4813 = vmatpush1.bf16.msra.mxu0 %v4646
  %4814 = vmatprep.subr.bf16.mxu0 0
  %4815 = vmatpush2.bf16.msra.mxu0 %v4661
  %4816 = vmatprep.subr.bf16.mxu0 0
  %4817 = vmatpush2.bf16.msra.mxu0 %v4660
  %4818 = vmatprep.subr.bf16.mxu0 0
  %4819 = vmatpush2.bf16.msra.mxu0 %v4659
  %4820 = vmatprep.subr.bf16.mxu0 0
  %4821 = vmatpush2.bf16.msra.mxu0 %v4658
  %4822 = vmatprep.subr.bf16.mxu0 0
  %4823 = vmatpush2.bf16.msra.mxu0 %v4657
  %4824 = vmatprep.subr.bf16.mxu0 0
  %4825 = vmatpush2.bf16.msra.mxu0 %v4656
  %4826 = vmatprep.subr.bf16.mxu0 0
  %4827 = vmatpush2.bf16.msra.mxu0 %v4655
  %4828 = vmatprep.subr.bf16.mxu0 0
  %4829 = vmatpush2.bf16.msra.mxu0 %v4654
  %4830 = vmatprep.mubr.bf16.mxu0 %v4234
  %4831 = vmatmul.mubr.bf16.gmra.mxu0 %v4233
  %v4832 = vpop.f32.mrf.mxu0
  %v4833 = vadd.f32 %v4793, %v4832
  %v4834 = vpop.f32.mrf.mxu0
  %v4835 = vpop.f32.mrf.mxu0
  %v4836 = vpop.f32.mrf.mxu0
  %4837 = vdwg.mxu0
  %4838 = vmatprep.subr.bf16.mxu0 0
  %4839 = vmatpush1.bf16.msra.mxu0 %v4669
  %4840 = vmatprep.subr.bf16.mxu0 0
  %4841 = vmatpush1.bf16.msra.mxu0 %v4668
  %4842 = vmatprep.subr.bf16.mxu0 0
  %4843 = vmatpush1.bf16.msra.mxu0 %v4667
  %4844 = vmatprep.subr.bf16.mxu0 0
  %4845 = vmatpush1.bf16.msra.mxu0 %v4666
  %4846 = vmatprep.subr.bf16.mxu0 0
  %4847 = vmatpush1.bf16.msra.mxu0 %v4665
  %4848 = vmatprep.subr.bf16.mxu0 0
  %4849 = vmatpush1.bf16.msra.mxu0 %v4664
  %4850 = vmatprep.subr.bf16.mxu0 0
  %4851 = vmatpush1.bf16.msra.mxu0 %v4663
  %4852 = vmatprep.subr.bf16.mxu0 0
  %4853 = vmatpush1.bf16.msra.mxu0 %v4662
  %4854 = vmatprep.subr.bf16.mxu0 0
  %4855 = vmatpush2.bf16.msra.mxu0 %v4677
  %4856 = vmatprep.subr.bf16.mxu0 0
  %4857 = vmatpush2.bf16.msra.mxu0 %v4676
  %4858 = vmatprep.subr.bf16.mxu0 0
  %4859 = vmatpush2.bf16.msra.mxu0 %v4675
  %4860 = vmatprep.subr.bf16.mxu0 0
  %4861 = vmatpush2.bf16.msra.mxu0 %v4674
  %4862 = vmatprep.subr.bf16.mxu0 0
  %4863 = vmatpush2.bf16.msra.mxu0 %v4673
  %4864 = vmatprep.subr.bf16.mxu0 0
  %4865 = vmatpush2.bf16.msra.mxu0 %v4672
  %4866 = vmatprep.subr.bf16.mxu0 0
  %4867 = vmatpush2.bf16.msra.mxu0 %v4671
  %4868 = vmatprep.subr.bf16.mxu0 0
  %4869 = vmatpush2.bf16.msra.mxu0 %v4670
  %4870 = vmatprep.mubr.bf16.mxu0 %v4236
  %4871 = vmatmul.mubr.bf16.gmra.mxu0 %v4235
  %v4872 = vpop.f32.mrf.mxu0
  %v4873 = vadd.f32 %v4833, %v4872
  %v4874 = vpop.f32.mrf.mxu0
  %v4875 = vpop.f32.mrf.mxu0
  %v4876 = vpop.f32.mrf.mxu0
  %4877 = vdwg.mxu0
  %4878 = vmatprep.subr.bf16.mxu0 0
  %4879 = vmatpush1.bf16.msra.mxu0 %v4685
  %4880 = vmatprep.subr.bf16.mxu0 0
  %4881 = vmatpush1.bf16.msra.mxu0 %v4684
  %4882 = vmatprep.subr.bf16.mxu0 0
  %4883 = vmatpush1.bf16.msra.mxu0 %v4683
  %4884 = vmatprep.subr.bf16.mxu0 0
  %4885 = vmatpush1.bf16.msra.mxu0 %v4682
  %4886 = vmatprep.subr.bf16.mxu0 0
  %4887 = vmatpush1.bf16.msra.mxu0 %v4681
  %4888 = vmatprep.subr.bf16.mxu0 0
  %4889 = vmatpush1.bf16.msra.mxu0 %v4680
  %4890 = vmatprep.subr.bf16.mxu0 0
  %4891 = vmatpush1.bf16.msra.mxu0 %v4679
  %4892 = vmatprep.subr.bf16.mxu0 0
  %4893 = vmatpush1.bf16.msra.mxu0 %v4678
  %4894 = vmatprep.subr.bf16.mxu0 0
  %4895 = vmatpush2.bf16.msra.mxu0 %v4693
  %4896 = vmatprep.subr.bf16.mxu0 0
  %4897 = vmatpush2.bf16.msra.mxu0 %v4692
  %4898 = vmatprep.subr.bf16.mxu0 0
  %4899 = vmatpush2.bf16.msra.mxu0 %v4691
  %4900 = vmatprep.subr.bf16.mxu0 0
  %4901 = vmatpush2.bf16.msra.mxu0 %v4690
  %4902 = vmatprep.subr.bf16.mxu0 0
  %4903 = vmatpush2.bf16.msra.mxu0 %v4689
  %4904 = vmatprep.subr.bf16.mxu0 0
  %4905 = vmatpush2.bf16.msra.mxu0 %v4688
  %4906 = vmatprep.subr.bf16.mxu0 0
  %4907 = vmatpush2.bf16.msra.mxu0 %v4687
  %4908 = vmatprep.subr.bf16.mxu0 0
  %4909 = vmatpush2.bf16.msra.mxu0 %v4686
  %4910 = vmatprep.mubr.bf16.mxu0 %v4238
  %4911 = vmatmul.mubr.bf16.gmra.mxu0 %v4237
  %v4912 = vpop.f32.mrf.mxu0
  %v4913 = vadd.f32 %v4873, %v4912
  %v4914 = vpop.f32.mrf.mxu0
  %v4915 = vpop.f32.mrf.mxu0
  %v4916 = vpop.f32.mrf.mxu0
  %4917 = vdwg.mxu0
  %v4918 = vmax.f32 %v4913, 0.0
  %v4919 = vld [vmem:[%s7] sm:$0x1]
  %v4921 = vlaneseq
  %v4922 = vshrl.u32 %v4921, 7
  %v4923 = vsub.s32 0, %v4922
  %v4924 = vrot.slane %v4919, %v4923
  %v4926 = vmul.f32 %v4918, %v4924
  %vm4927 = vcmask 519168
  %v4928 = vsel %vm4927, %v4926, 0.0
  %4929 = vadd.xlane.f32.xlu0 %v4928
  %v4930 = vpop.xlane.xlu0 %4929
  %v4931 = vld [vmem:[#allocation3] sm:$0x1]
  %v4933 = vlaneseq
  %v4934 = vshrl.u32 %v4933, 7
  %v4935 = vsub.s32 0, %v4934
  %v4936 = vrot.slane %v4931, %v4935
  %v4938 = vadd.f32 %v4930, %v4936
  %vm4939 = vcmask 3072
  %4940 = vst.msk [vmem:[%s9] sm:$0xf] %vm4939, %v4938
  // Predicated region
  $region38: #{mnist_net_forward.1} parent=0 // pred_check
    _
  $region39: #{mnist_net_forward.1} parent=0 // pred_check_branch
    %4942 = sbr.rel (0) target = $region41
  $region40: #{mnist_net_forward.1} parent=0 // pred_region
    _
  $region41: #{mnist_net_forward.1} parent=0 // pred_fallthru
    _
  // Predicated region
  $region42: #{mnist_net_forward.1} parent=0 // pred_check
    _
  $region43: #{mnist_net_forward.1} parent=0 // pred_check_branch
    %4944 = sbr.rel (0) target = $region45
  $region44: #{mnist_net_forward.1} parent=0 // pred_region
    _
  $region45: #{mnist_net_forward.1} parent=0 // pred_fallthru
    _

</llo_original>
